<compile_context>
chip_gen: v7x
topology: tpu7x:2x2x1
jax: 0.10.0
libtpu: 0.0.40
codegen_flags: <defaults>
</compile_context>

<pallas_src>
import jax
import jax.numpy as jnp
from jax import lax
from jax.experimental import pallas as pl
from jax.experimental.pallas import tpu as pltpu

BN_EPS = 1e-5
CPAD = 128  # lane-dense padded output-channel width


def _conv_elu(xv, w_ref):
    """xv: (R, Wp, Cin) f32 tile.  w_ref: (K, Cin, CPAD) VMEM ref.

    Returns ELU(conv1d_same(xv)) with shape (R*W, CPAD), f32.
    """
    r, wp, cin = xv.shape
    k_taps = w_ref.shape[0]
    w_out = wp - k_taps + 1
    acc = jnp.zeros((r * w_out, w_ref.shape[2]), jnp.float32)
    for k in range(k_taps):  # K shifted taps; no im2col materialization
        tap = xv[:, k:k + w_out, :].reshape(r * w_out, cin)
        acc = acc + jnp.dot(tap, w_ref[k], preferred_element_type=jnp.float32)
    # ELU(alpha=1).  exp(min(a,0))-1 keeps the unselected branch finite and
    # avoids relying on an expm1 lowering (precision loss << 1e-4 tolerance).
    return jnp.where(acc > 0.0, acc, jnp.exp(jnp.minimum(acc, 0.0)) - 1.0)


def stats_kernel(xp_ref, w_ref, sum_ref, sq_ref):
    """Pass 1: conv + ELU, accumulate per-channel sum / sum-of-squares."""
    @pl.when(pl.program_id(0) == 0)
    def _():
        sum_ref[...] = jnp.zeros_like(sum_ref)
        sq_ref[...] = jnp.zeros_like(sq_ref)

    a = _conv_elu(xp_ref[...], w_ref)
    sum_ref[...] += jnp.sum(a, axis=0, keepdims=True)
    sq_ref[...] += jnp.sum(a * a, axis=0, keepdims=True)


def apply_kernel(xp_ref, w_ref, s_ref, b_ref, o_ref):
    """Pass 2: conv + ELU, then folded BN affine a*s + b (lane-dense store)."""
    a = _conv_elu(xp_ref[...], w_ref)
    o_ref[...] = a * s_ref[...] + b_ref[...]


def _pick_row_tile(nh, w, max_positions=2048):
    """Largest divisor of nh with tile*w <= max_positions and 8-aligned rows."""
    cap = max(1, max_positions // w)
    best = nh
    for d in range(1, nh + 1):
        if nh % d == 0 and d <= cap and (d * w) % 8 == 0:
            best = d
    return best


def basic_block_forward(x, conv_w, bn_gamma, bn_beta, *, max_norm=1.0,
                        row_tile=None):
    """x: (N, C_in, H, W) f32 NCHW.  conv_w: (C_out, C_in, 1, K) f32."""
    N, Cin, H, W = x.shape
    Cout, _, _, K = conv_w.shape
    NH = N * H

    # --- Conv2dWithConstraint: torch.renorm(w, p=2, dim=0, maxnorm=max_norm)
    norms = jnp.sqrt(jnp.sum(conv_w ** 2, axis=(1, 2, 3), keepdims=True))
    scale = jnp.where(norms > max_norm, max_norm / (norms + 1e-7), 1.0)
    w = (conv_w * scale).astype(jnp.float32)

    # --- 'same' padding along W (PyTorch: left = total//2, right = rest)
    total = K - 1
    left = total // 2
    right = total - left
    Wp = W + total

    # NCHW -> (N*H, W, Cin) channels-last, pad along W (glue, plain JAX).
    xw = jnp.transpose(x, (0, 2, 3, 1)).reshape(NH, W, Cin).astype(jnp.float32)
    xp = jnp.pad(xw, ((0, 0), (left, right), (0, 0)))

    # Per-tap weights: wstack[k, ci, co] = w[co, ci, 0, k]; Cout zero-padded to
    # 128 lanes so all kernel stores are lane-dense.
    wk = jnp.transpose(w[:, :, 0, :], (2, 1, 0))  # (K, Cin, Cout)
    wstack = jnp.zeros((K, Cin, CPAD), jnp.float32).at[:, :, :Cout].set(wk)

    if row_tile is None:
        row_tile = _pick_row_tile(NH, W)
    assert NH % row_tile == 0 and (row_tile * W) % 8 == 0, (NH, row_tile, W)
    grid = (NH // row_tile,)

    def _params(sem):
        return pltpu.CompilerParams(dimension_semantics=sem,
                                    vmem_limit_bytes=32 * 1024 * 1024)

    xp_spec = pl.BlockSpec((row_tile, Wp, Cin), lambda i: (i, 0, 0))
    full_vmem = pl.BlockSpec(memory_space=pltpu.MemorySpace.VMEM)

    # ---- Pass 1: global per-channel batch statistics (reduction over grid).
    csum, csq = pl.pallas_call(
        stats_kernel,
        grid=grid,
        in_specs=[xp_spec, full_vmem],
        out_specs=(pl.BlockSpec((1, CPAD), lambda i: (0, 0)),
                   pl.BlockSpec((1, CPAD), lambda i: (0, 0))),
        out_shape=(jax.ShapeDtypeStruct((1, CPAD), jnp.float32),
                   jax.ShapeDtypeStruct((1, CPAD), jnp.float32)),
        compiler_params=_params(("arbitrary",)),
    )(xp, wstack)

    # ---- Fold BN (training-mode batch stats, biased var) into y = a*s + b.
    cnt = jnp.float32(NH * W)
    mean = csum / cnt
    var = jnp.maximum(csq / cnt - mean * mean, 0.0)
    inv = lax.rsqrt(var + BN_EPS)
    gamma_p = jnp.zeros((1, CPAD), jnp.float32).at[0, :Cout].set(
        bn_gamma.astype(jnp.float32))
    beta_p = jnp.zeros((1, CPAD), jnp.float32).at[0, :Cout].set(
        bn_beta.astype(jnp.float32))
    s = inv * gamma_p
    b = beta_p - mean * s

    # ---- Pass 2: normalize; rows independent -> 'parallel' (megacore-shardable).
    out_flat = pl.pallas_call(
        apply_kernel,
        grid=grid,
        in_specs=[xp_spec, full_vmem, full_vmem, full_vmem],
        out_specs=pl.BlockSpec((row_tile * W, CPAD), lambda i: (i, 0)),
        out_shape=jax.ShapeDtypeStruct((NH * W, CPAD), jnp.float32),
        compiler_params=_params(("parallel",)),
    )(xp, wstack, s, b)

    # TODO(synk): Dropout(p=0.5) train-mode mask omitted (identity / eval mode).

    out = out_flat[:, :Cout].reshape(N, H, W, Cout).transpose(0, 3, 1, 2)
    return jnp.concatenate([x, out], axis=1)  # torch.cat([x, out], dim=1)


def reference_forward(x, conv_w, bn_gamma, bn_beta, *, max_norm=1.0):
    """Pure-JAX reference mirroring the PyTorch forward (train BN, no dropout)."""
    norms = jnp.sqrt(jnp.sum(conv_w ** 2, axis=(1, 2, 3), keepdims=True))
    scale = jnp.where(norms > max_norm, max_norm / (norms + 1e-7), 1.0)
    w = conv_w * scale
    K = w.shape[-1]
    total = K - 1
    left = total // 2
    right = total - left
    out = lax.conv_general_dilated(
        x, w, window_strides=(1, 1), padding=((0, 0), (left, right)),
        dimension_numbers=("NCHW", "OIHW", "NCHW"))
    out = jnp.where(out > 0, out, jnp.expm1(out))
    mean = out.mean(axis=(0, 2, 3), keepdims=True)
    var = ((out - mean) ** 2).mean(axis=(0, 2, 3), keepdims=True)
    out = (out - mean) * lax.rsqrt(var + BN_EPS)
    out = out * bn_gamma.reshape(1, -1, 1, 1) + bn_beta.reshape(1, -1, 1, 1)
    return jnp.concatenate([x, out], axis=1)


if __name__ == "__main__":
    # Shapes consistent with BasicBlock(in_planes=4, out_planes=8, kernel_size=5)
    N, Cin, H, W = 2, 4, 16, 16
    Cout, K = 8, 5

    key = jax.random.PRNGKey(0)
    kx, kw = jax.random.split(key)
    x = jax.random.normal(kx, (N, Cin, H, W), dtype=jnp.float32)
    conv_w = 0.5 * jax.random.normal(kw, (Cout, Cin, 1, K), dtype=jnp.float32)
    bn_gamma = jnp.ones((Cout,), dtype=jnp.float32)   # BatchNorm2d default init
    bn_beta = jnp.zeros((Cout,), dtype=jnp.float32)

    fwd = jax.jit(basic_block_forward, static_argnames=("max_norm", "row_tile"))
    # row_tile=8 -> grid of 4 steps: exercises cross-tile stat accumulation.
    out = jax.block_until_ready(
        fwd(x, conv_w, bn_gamma, bn_beta, max_norm=1.0, row_tile=8))
    ref = jax.block_until_ready(
        reference_forward(x, conv_w, bn_gamma, bn_beta))

    assert out.shape == (N, Cin + Cout, H, W), out.shape
    assert bool(jnp.all(jnp.isfinite(out)))
    assert jnp.allclose(out, ref, rtol=1e-3, atol=1e-3), (
        float(jnp.max(jnp.abs(out - ref))))

    print("KERNEL_OK")
</pallas_src>

<mosaic_0001>
module attributes {stable_mosaic.version = 11 : i64} {
  func.func @apply_kernel(%arg0: i32, %arg1: memref<8x20x4xf32, #tpu.memory_space<vmem>>, %arg2: memref<5x4x128xf32, #tpu.memory_space<vmem>>, %arg3: memref<1x128xf32, #tpu.memory_space<vmem>>, %arg4: memref<1x128xf32, #tpu.memory_space<vmem>>, %arg5: memref<128x128xf32, #tpu.memory_space<vmem>>) attributes {dimension_semantics = [#tpu.dimension_semantics<parallel>], iteration_bounds = array<i64: 4>, scalar_prefetch = 0 : i64, scratch_operands = 0 : i64, tpu.core_type = #tpu.core_type<tc>, window_params = [{transform_indices = @transform_0, window_bounds = array<i64: 8, 20, 4>}, {pipeline_mode = #tpu.pipeline_mode<synchronous>, transform_indices = @transform_1, window_bounds = array<i64: 5, 4, 128>}, {pipeline_mode = #tpu.pipeline_mode<synchronous>, transform_indices = @transform_2, window_bounds = array<i64: 1, 128>}, {pipeline_mode = #tpu.pipeline_mode<synchronous>, transform_indices = @transform_3, window_bounds = array<i64: 1, 128>}, {transform_indices = @transform_4, window_bounds = array<i64: 128, 128>}]} {
    %c0 = arith.constant 0 : index
    %c0_0 = arith.constant 0 : index
    %c0_1 = arith.constant 0 : index
    %0 = vector.load %arg1[%c0, %c0_0, %c0_1] : memref<8x20x4xf32, #tpu.memory_space<vmem>>, vector<8x20x4xf32>
    %cst = arith.constant 0.000000e+00 : f32
    %1 = vector.broadcast %cst : f32 to vector<128x128xf32>
    %2 = vector.extract_strided_slice %0 {offsets = [0, 0, 0], sizes = [8, 16, 4], strides = [1, 1, 1]} : vector<8x20x4xf32> to vector<8x16x4xf32>
    %3 = vector.shape_cast %2 : vector<8x16x4xf32> to vector<128x4xf32>
    %c0_2 = arith.constant 0 : index
    %c0_3 = arith.constant 0 : index
    %c0_4 = arith.constant 0 : index
    %4 = vector.load %arg2[%c0_2, %c0_3, %c0_4] : memref<5x4x128xf32, #tpu.memory_space<vmem>>, vector<1x4x128xf32>
    %5 = vector.shape_cast %4 : vector<1x4x128xf32> to vector<4x128xf32>
    %cst_5 = arith.constant dense<0.000000e+00> : vector<128x128xf32>
    %6 = tpu.matmul %3, %5, %cst_5 {dimension_numbers = #tpu.dot_dimension_numbers<[1], [0], [0], [1], [0, 0, 1, 1], [], []>} : vector<128x4xf32>, vector<4x128xf32>, vector<128x128xf32> -> vector<128x128xf32>
    %7 = arith.addf %1, %6 : vector<128x128xf32>
    %8 = vector.extract_strided_slice %0 {offsets = [0, 1, 0], sizes = [8, 16, 4], strides = [1, 1, 1]} : vector<8x20x4xf32> to vector<8x16x4xf32>
    %9 = vector.shape_cast %8 : vector<8x16x4xf32> to vector<128x4xf32>
    %c1 = arith.constant 1 : index
    %c0_6 = arith.constant 0 : index
    %c0_7 = arith.constant 0 : index
    %10 = vector.load %arg2[%c1, %c0_6, %c0_7] : memref<5x4x128xf32, #tpu.memory_space<vmem>>, vector<1x4x128xf32>
    %11 = vector.shape_cast %10 : vector<1x4x128xf32> to vector<4x128xf32>
    %cst_8 = arith.constant dense<0.000000e+00> : vector<128x128xf32>
    %12 = tpu.matmul %9, %11, %cst_8 {dimension_numbers = #tpu.dot_dimension_numbers<[1], [0], [0], [1], [0, 0, 1, 1], [], []>} : vector<128x4xf32>, vector<4x128xf32>, vector<128x128xf32> -> vector<128x128xf32>
    %13 = arith.addf %7, %12 : vector<128x128xf32>
    %14 = vector.extract_strided_slice %0 {offsets = [0, 2, 0], sizes = [8, 16, 4], strides = [1, 1, 1]} : vector<8x20x4xf32> to vector<8x16x4xf32>
    %15 = vector.shape_cast %14 : vector<8x16x4xf32> to vector<128x4xf32>
    %c2 = arith.constant 2 : index
    %c0_9 = arith.constant 0 : index
    %c0_10 = arith.constant 0 : index
    %16 = vector.load %arg2[%c2, %c0_9, %c0_10] : memref<5x4x128xf32, #tpu.memory_space<vmem>>, vector<1x4x128xf32>
    %17 = vector.shape_cast %16 : vector<1x4x128xf32> to vector<4x128xf32>
    %cst_11 = arith.constant dense<0.000000e+00> : vector<128x128xf32>
    %18 = tpu.matmul %15, %17, %cst_11 {dimension_numbers = #tpu.dot_dimension_numbers<[1], [0], [0], [1], [0, 0, 1, 1], [], []>} : vector<128x4xf32>, vector<4x128xf32>, vector<128x128xf32> -> vector<128x128xf32>
    %19 = arith.addf %13, %18 : vector<128x128xf32>
    %20 = vector.extract_strided_slice %0 {offsets = [0, 3, 0], sizes = [8, 16, 4], strides = [1, 1, 1]} : vector<8x20x4xf32> to vector<8x16x4xf32>
    %21 = vector.shape_cast %20 : vector<8x16x4xf32> to vector<128x4xf32>
    %c3 = arith.constant 3 : index
    %c0_12 = arith.constant 0 : index
    %c0_13 = arith.constant 0 : index
    %22 = vector.load %arg2[%c3, %c0_12, %c0_13] : memref<5x4x128xf32, #tpu.memory_space<vmem>>, vector<1x4x128xf32>
    %23 = vector.shape_cast %22 : vector<1x4x128xf32> to vector<4x128xf32>
    %cst_14 = arith.constant dense<0.000000e+00> : vector<128x128xf32>
    %24 = tpu.matmul %21, %23, %cst_14 {dimension_numbers = #tpu.dot_dimension_numbers<[1], [0], [0], [1], [0, 0, 1, 1], [], []>} : vector<128x4xf32>, vector<4x128xf32>, vector<128x128xf32> -> vector<128x128xf32>
    %25 = arith.addf %19, %24 : vector<128x128xf32>
    %26 = vector.extract_strided_slice %0 {offsets = [0, 4, 0], sizes = [8, 16, 4], strides = [1, 1, 1]} : vector<8x20x4xf32> to vector<8x16x4xf32>
    %27 = vector.shape_cast %26 : vector<8x16x4xf32> to vector<128x4xf32>
    %c4 = arith.constant 4 : index
    %c0_15 = arith.constant 0 : index
    %c0_16 = arith.constant 0 : index
    %28 = vector.load %arg2[%c4, %c0_15, %c0_16] : memref<5x4x128xf32, #tpu.memory_space<vmem>>, vector<1x4x128xf32>
    %29 = vector.shape_cast %28 : vector<1x4x128xf32> to vector<4x128xf32>
    %cst_17 = arith.constant dense<0.000000e+00> : vector<128x128xf32>
    %30 = tpu.matmul %27, %29, %cst_17 {dimension_numbers = #tpu.dot_dimension_numbers<[1], [0], [0], [1], [0, 0, 1, 1], [], []>} : vector<128x4xf32>, vector<4x128xf32>, vector<128x128xf32> -> vector<128x128xf32>
    %31 = arith.addf %25, %30 : vector<128x128xf32>
    %cst_18 = arith.constant 0.000000e+00 : f32
    %32 = vector.broadcast %cst_18 : f32 to vector<128x128xf32>
    %33 = arith.cmpf ogt, %31, %32 : vector<128x128xf32>
    %cst_19 = arith.constant 0.000000e+00 : f32
    %34 = vector.broadcast %cst_19 : f32 to vector<128x128xf32>
    %35 = arith.minimumf %31, %34 : vector<128x128xf32>
    %36 = math.exp %35 : vector<128x128xf32>
    %cst_20 = arith.constant 1.000000e+00 : f32
    %37 = vector.broadcast %cst_20 : f32 to vector<128x128xf32>
    %38 = arith.subf %36, %37 : vector<128x128xf32>
    %39 = arith.select %33, %31, %38 : vector<128x128xi1>, vector<128x128xf32>
    %c0_21 = arith.constant 0 : index
    %c0_22 = arith.constant 0 : index
    %40 = vector.load %arg3[%c0_21, %c0_22] : memref<1x128xf32, #tpu.memory_space<vmem>>, vector<1x128xf32>
    %41 = vector.broadcast %40 : vector<1x128xf32> to vector<128x128xf32>
    %42 = arith.mulf %39, %41 : vector<128x128xf32>
    %c0_23 = arith.constant 0 : index
    %c0_24 = arith.constant 0 : index
    %43 = vector.load %arg4[%c0_23, %c0_24] : memref<1x128xf32, #tpu.memory_space<vmem>>, vector<1x128xf32>
    %44 = vector.broadcast %43 : vector<1x128xf32> to vector<128x128xf32>
    %45 = arith.addf %42, %44 : vector<128x128xf32>
    %c0_25 = arith.constant 0 : index
    %c0_26 = arith.constant 0 : index
    %46 = vector.load %arg5[%c0_25, %c0_26] : memref<128x128xf32, #tpu.memory_space<vmem>>, vector<128x128xf32>
    tpu.vector_store %arg5[%c0_25, %c0_26], %45 {strides = array<i32>} : memref<128x128xf32, #tpu.memory_space<vmem>>, vector<128x128xf32>,
    return
  }
  func.func @transform_0(%arg0: i32) -> (i32, i32, i32) {
    %c0_i32 = arith.constant 0 : i32
    %c0_i32_0 = arith.constant 0 : i32
    %c0_i32_1 = arith.constant 0 : i32
    return %arg0, %c0_i32, %c0_i32_0 : i32, i32, i32
  }
  func.func @transform_1(%arg0: i32) -> (i32, i32, i32) {
    %c0_i32 = arith.constant 0 : i32
    %c0_i32_0 = arith.constant 0 : i32
    %c0_i32_1 = arith.constant 0 : i32
    %c0_i32_2 = arith.constant 0 : i32
    return %c0_i32, %c0_i32_0, %c0_i32_1 : i32, i32, i32
  }
  func.func @transform_2(%arg0: i32) -> (i32, i32) {
    %c0_i32 = arith.constant 0 : i32
    %c0_i32_0 = arith.constant 0 : i32
    %c0_i32_1 = arith.constant 0 : i32
    return %c0_i32, %c0_i32_0 : i32, i32
  }
  func.func @transform_3(%arg0: i32) -> (i32, i32) {
    %c0_i32 = arith.constant 0 : i32
    %c0_i32_0 = arith.constant 0 : i32
    %c0_i32_1 = arith.constant 0 : i32
    return %c0_i32, %c0_i32_0 : i32, i32
  }
  func.func @transform_4(%arg0: i32) -> (i32, i32) {
    %c0_i32 = arith.constant 0 : i32
    %c0_i32_0 = arith.constant 0 : i32
    return %arg0, %c0_i32 : i32, i32
  }
}

module attributes {stable_mosaic.version = 11 : i64} {
  func.func @stats_kernel(%arg0: i32, %arg1: memref<8x20x4xf32, #tpu.memory_space<vmem>>, %arg2: memref<5x4x128xf32, #tpu.memory_space<vmem>>, %arg3: memref<1x128xf32, #tpu.memory_space<vmem>>, %arg4: memref<1x128xf32, #tpu.memory_space<vmem>>) attributes {dimension_semantics = [#tpu.dimension_semantics<arbitrary>], iteration_bounds = array<i64: 4>, scalar_prefetch = 0 : i64, scratch_operands = 0 : i64, tpu.core_type = #tpu.core_type<tc>, window_params = [{transform_indices = @transform_0, window_bounds = array<i64: 8, 20, 4>}, {pipeline_mode = #tpu.pipeline_mode<synchronous>, transform_indices = @transform_1, window_bounds = array<i64: 5, 4, 128>}, {pipeline_mode = #tpu.pipeline_mode<synchronous>, transform_indices = @transform_2, window_bounds = array<i64: 1, 128>}, {pipeline_mode = #tpu.pipeline_mode<synchronous>, transform_indices = @transform_3, window_bounds = array<i64: 1, 128>}]} {
    %c0_i32 = arith.constant 0 : i32
    %0 = arith.cmpi eq, %arg0, %c0_i32 : i32
    %1 = arith.extui %0 : i1 to i32
    %c0_i32_0 = arith.constant 0 : i32
    %2 = arith.cmpi ne, %1, %c0_i32_0 : i32
    scf.if %2 {
      %cst_32 = arith.constant 0.000000e+00 : f32
      %54 = vector.broadcast %cst_32 : f32 to vector<1x128xf32>
      %c0_33 = arith.constant 0 : index
      %c0_34 = arith.constant 0 : index
      %55 = vector.load %arg3[%c0_33, %c0_34] : memref<1x128xf32, #tpu.memory_space<vmem>>, vector<1x128xf32>
      tpu.vector_store %arg3[%c0_33, %c0_34], %54 {strides = array<i32>} : memref<1x128xf32, #tpu.memory_space<vmem>>, vector<1x128xf32>,
      %cst_35 = arith.constant 0.000000e+00 : f32
      %56 = vector.broadcast %cst_35 : f32 to vector<1x128xf32>
      %c0_36 = arith.constant 0 : index
      %c0_37 = arith.constant 0 : index
      %57 = vector.load %arg4[%c0_36, %c0_37] : memref<1x128xf32, #tpu.memory_space<vmem>>, vector<1x128xf32>
      tpu.vector_store %arg4[%c0_36, %c0_37], %56 {strides = array<i32>} : memref<1x128xf32, #tpu.memory_space<vmem>>, vector<1x128xf32>,
    } else {
    }
    %c0 = arith.constant 0 : index
    %c0_1 = arith.constant 0 : index
    %c0_2 = arith.constant 0 : index
    %3 = vector.load %arg1[%c0, %c0_1, %c0_2] : memref<8x20x4xf32, #tpu.memory_space<vmem>>, vector<8x20x4xf32>
    %cst = arith.constant 0.000000e+00 : f32
    %4 = vector.broadcast %cst : f32 to vector<128x128xf32>
    %5 = vector.extract_strided_slice %3 {offsets = [0, 0, 0], sizes = [8, 16, 4], strides = [1, 1, 1]} : vector<8x20x4xf32> to vector<8x16x4xf32>
    %6 = vector.shape_cast %5 : vector<8x16x4xf32> to vector<128x4xf32>
    %c0_3 = arith.constant 0 : index
    %c0_4 = arith.constant 0 : index
    %c0_5 = arith.constant 0 : index
    %7 = vector.load %arg2[%c0_3, %c0_4, %c0_5] : memref<5x4x128xf32, #tpu.memory_space<vmem>>, vector<1x4x128xf32>
    %8 = vector.shape_cast %7 : vector<1x4x128xf32> to vector<4x128xf32>
    %cst_6 = arith.constant dense<0.000000e+00> : vector<128x128xf32>
    %9 = tpu.matmul %6, %8, %cst_6 {dimension_numbers = #tpu.dot_dimension_numbers<[1], [0], [0], [1], [0, 0, 1, 1], [], []>} : vector<128x4xf32>, vector<4x128xf32>, vector<128x128xf32> -> vector<128x128xf32>
    %10 = arith.addf %4, %9 : vector<128x128xf32>
    %11 = vector.extract_strided_slice %3 {offsets = [0, 1, 0], sizes = [8, 16, 4], strides = [1, 1, 1]} : vector<8x20x4xf32> to vector<8x16x4xf32>
    %12 = vector.shape_cast %11 : vector<8x16x4xf32> to vector<128x4xf32>
    %c1 = arith.constant 1 : index
    %c0_7 = arith.constant 0 : index
    %c0_8 = arith.constant 0 : index
    %13 = vector.load %arg2[%c1, %c0_7, %c0_8] : memref<5x4x128xf32, #tpu.memory_space<vmem>>, vector<1x4x128xf32>
    %14 = vector.shape_cast %13 : vector<1x4x128xf32> to vector<4x128xf32>
    %cst_9 = arith.constant dense<0.000000e+00> : vector<128x128xf32>
    %15 = tpu.matmul %12, %14, %cst_9 {dimension_numbers = #tpu.dot_dimension_numbers<[1], [0], [0], [1], [0, 0, 1, 1], [], []>} : vector<128x4xf32>, vector<4x128xf32>, vector<128x128xf32> -> vector<128x128xf32>
    %16 = arith.addf %10, %15 : vector<128x128xf32>
    %17 = vector.extract_strided_slice %3 {offsets = [0, 2, 0], sizes = [8, 16, 4], strides = [1, 1, 1]} : vector<8x20x4xf32> to vector<8x16x4xf32>
    %18 = vector.shape_cast %17 : vector<8x16x4xf32> to vector<128x4xf32>
    %c2 = arith.constant 2 : index
    %c0_10 = arith.constant 0 : index
    %c0_11 = arith.constant 0 : index
    %19 = vector.load %arg2[%c2, %c0_10, %c0_11] : memref<5x4x128xf32, #tpu.memory_space<vmem>>, vector<1x4x128xf32>
    %20 = vector.shape_cast %19 : vector<1x4x128xf32> to vector<4x128xf32>
    %cst_12 = arith.constant dense<0.000000e+00> : vector<128x128xf32>
    %21 = tpu.matmul %18, %20, %cst_12 {dimension_numbers = #tpu.dot_dimension_numbers<[1], [0], [0], [1], [0, 0, 1, 1], [], []>} : vector<128x4xf32>, vector<4x128xf32>, vector<128x128xf32> -> vector<128x128xf32>
    %22 = arith.addf %16, %21 : vector<128x128xf32>
    %23 = vector.extract_strided_slice %3 {offsets = [0, 3, 0], sizes = [8, 16, 4], strides = [1, 1, 1]} : vector<8x20x4xf32> to vector<8x16x4xf32>
    %24 = vector.shape_cast %23 : vector<8x16x4xf32> to vector<128x4xf32>
    %c3 = arith.constant 3 : index
    %c0_13 = arith.constant 0 : index
    %c0_14 = arith.constant 0 : index
    %25 = vector.load %arg2[%c3, %c0_13, %c0_14] : memref<5x4x128xf32, #tpu.memory_space<vmem>>, vector<1x4x128xf32>
    %26 = vector.shape_cast %25 : vector<1x4x128xf32> to vector<4x128xf32>
    %cst_15 = arith.constant dense<0.000000e+00> : vector<128x128xf32>
    %27 = tpu.matmul %24, %26, %cst_15 {dimension_numbers = #tpu.dot_dimension_numbers<[1], [0], [0], [1], [0, 0, 1, 1], [], []>} : vector<128x4xf32>, vector<4x128xf32>, vector<128x128xf32> -> vector<128x128xf32>
    %28 = arith.addf %22, %27 : vector<128x128xf32>
    %29 = vector.extract_strided_slice %3 {offsets = [0, 4, 0], sizes = [8, 16, 4], strides = [1, 1, 1]} : vector<8x20x4xf32> to vector<8x16x4xf32>
    %30 = vector.shape_cast %29 : vector<8x16x4xf32> to vector<128x4xf32>
    %c4 = arith.constant 4 : index
    %c0_16 = arith.constant 0 : index
    %c0_17 = arith.constant 0 : index
    %31 = vector.load %arg2[%c4, %c0_16, %c0_17] : memref<5x4x128xf32, #tpu.memory_space<vmem>>, vector<1x4x128xf32>
    %32 = vector.shape_cast %31 : vector<1x4x128xf32> to vector<4x128xf32>
    %cst_18 = arith.constant dense<0.000000e+00> : vector<128x128xf32>
    %33 = tpu.matmul %30, %32, %cst_18 {dimension_numbers = #tpu.dot_dimension_numbers<[1], [0], [0], [1], [0, 0, 1, 1], [], []>} : vector<128x4xf32>, vector<4x128xf32>, vector<128x128xf32> -> vector<128x128xf32>
    %34 = arith.addf %28, %33 : vector<128x128xf32>
    %cst_19 = arith.constant 0.000000e+00 : f32
    %35 = vector.broadcast %cst_19 : f32 to vector<128x128xf32>
    %36 = arith.cmpf ogt, %34, %35 : vector<128x128xf32>
    %cst_20 = arith.constant 0.000000e+00 : f32
    %37 = vector.broadcast %cst_20 : f32 to vector<128x128xf32>
    %38 = arith.minimumf %34, %37 : vector<128x128xf32>
    %39 = math.exp %38 : vector<128x128xf32>
    %cst_21 = arith.constant 1.000000e+00 : f32
    %40 = vector.broadcast %cst_21 : f32 to vector<128x128xf32>
    %41 = arith.subf %39, %40 : vector<128x128xf32>
    %42 = arith.select %36, %34, %41 : vector<128x128xi1>, vector<128x128xf32>
    %c0_22 = arith.constant 0 : index
    %c0_23 = arith.constant 0 : index
    %43 = vector.load %arg3[%c0_22, %c0_23] : memref<1x128xf32, #tpu.memory_space<vmem>>, vector<1x128xf32>
    %cst_24 = arith.constant dense<0.000000e+00> : vector<128xf32>
    %44 = vector.multi_reduction <add>, %42, %cst_24 [0] : vector<128x128xf32> to vector<128xf32>
    %45 = vector.shape_cast %44 : vector<128xf32> to vector<1x128xf32>
    %46 = arith.addf %43, %45 : vector<1x128xf32>
    %c0_25 = arith.constant 0 : index
    %c0_26 = arith.constant 0 : index
    %47 = vector.load %arg3[%c0_25, %c0_26] : memref<1x128xf32, #tpu.memory_space<vmem>>, vector<1x128xf32>
    tpu.vector_store %arg3[%c0_25, %c0_26], %46 {strides = array<i32>} : memref<1x128xf32, #tpu.memory_space<vmem>>, vector<1x128xf32>,
    %c0_27 = arith.constant 0 : index
    %c0_28 = arith.constant 0 : index
    %48 = vector.load %arg4[%c0_27, %c0_28] : memref<1x128xf32, #tpu.memory_space<vmem>>, vector<1x128xf32>
    %49 = arith.mulf %42, %42 : vector<128x128xf32>
    %cst_29 = arith.constant dense<0.000000e+00> : vector<128xf32>
    %50 = vector.multi_reduction <add>, %49, %cst_29 [0] : vector<128x128xf32> to vector<128xf32>
    %51 = vector.shape_cast %50 : vector<128xf32> to vector<1x128xf32>
    %52 = arith.addf %48, %51 : vector<1x128xf32>
    %c0_30 = arith.constant 0 : index
    %c0_31 = arith.constant 0 : index
    %53 = vector.load %arg4[%c0_30, %c0_31] : memref<1x128xf32, #tpu.memory_space<vmem>>, vector<1x128xf32>
    tpu.vector_store %arg4[%c0_30, %c0_31], %52 {strides = array<i32>} : memref<1x128xf32, #tpu.memory_space<vmem>>, vector<1x128xf32>,
    return
  }
  func.func @transform_0(%arg0: i32) -> (i32, i32, i32) {
    %c0_i32 = arith.constant 0 : i32
    %c0_i32_0 = arith.constant 0 : i32
    %c0_i32_1 = arith.constant 0 : i32
    return %arg0, %c0_i32, %c0_i32_0 : i32, i32, i32
  }
  func.func @transform_1(%arg0: i32) -> (i32, i32, i32) {
    %c0_i32 = arith.constant 0 : i32
    %c0_i32_0 = arith.constant 0 : i32
    %c0_i32_1 = arith.constant 0 : i32
    %c0_i32_2 = arith.constant 0 : i32
    return %c0_i32, %c0_i32_0, %c0_i32_1 : i32, i32, i32
  }
  func.func @transform_2(%arg0: i32) -> (i32, i32) {
    %c0_i32 = arith.constant 0 : i32
    %c0_i32_0 = arith.constant 0 : i32
    %c0_i32_1 = arith.constant 0 : i32
    return %c0_i32, %c0_i32_0 : i32, i32
  }
  func.func @transform_3(%arg0: i32) -> (i32, i32) {
    %c0_i32 = arith.constant 0 : i32
    %c0_i32_0 = arith.constant 0 : i32
    %c0_i32_1 = arith.constant 0 : i32
    return %c0_i32, %c0_i32_0 : i32, i32
  }
}

</mosaic_0001>

<llo_original>
// kernel: basic_block_forward.3
$region0: #{basic_block_forward.3}
  #allocation0 [shape = 'u32[]', space=smem, size = 0x4, offset = 0x4, fixed_abs, tag = 'smem constant byte address 0x4 - core index']
  #allocation1 [shape = 'u32[144,128]{1,0:T(1,128)}', space=vmem, size = 0x12000, scoped, tag = 'internal scratch']
  %s0 = inlined_call_operand.vmem [shape: f32[32,20,4], index: 0, kind: input, shape index: {}]
  %s1 = inlined_call_operand.vmem [shape: f32[5,4,128], index: 1, kind: input, shape index: {}]
  %s2 = inlined_call_operand.vmem [shape: f32[1,128], index: 2, kind: input, shape index: {}]
  %s3 = inlined_call_operand.vmem [shape: f32[1,128], index: 3, kind: input, shape index: {}]
  %s4 = inlined_call_operand.vmem [shape: f32[512,128], index: 4, kind: output, shape index: {}]
  %s5 = sld [smem:[#allocation0]]
  $region49: #{basic_block_forward.3} parent=0
    _
  %s7 = ssub.s32 1, %s5
  %s8 = scalar_select 0, %s7, %s5
  loop: start=0, step=1, limit=6
  $region2: #{basic_block_forward.3} parent=0 // loop_pre_header
    _
  $region3: #{basic_block_forward.3} parent=0 // loop_header
    %s10 = sphi 0, %s14
    %p11 = scmp.ge.s32.totalorder %s10, 6
    %s20 = sphi 0, %s22
    %s23 = sphi 0, %s20
    %s24 = sphi 0, %s23
    %s40 = sphi 0, %s24
    %s44 = sphi 0, %s44
    %s46 = sphi 0, %s44
    %s47 = sphi 0, %s46
    %s61 = sphi 0, %s47
    %s65 = sphi 0, %s65
    %s67 = sphi 0, %s65
    %s68 = sphi 0, %s67
    %s82 = sphi 0, %s68
    %s86 = sphi 0, %s86
    %s88 = sphi 0, %s86
    %s89 = sphi 0, %s88
    %s103 = sphi 0, %s89
    %s109 = sphi 0, %s111
    %s112 = sphi 0, %s109
    %s113 = sphi 0, %s112
    %s129 = sphi 0, %s113
  $region4: #{basic_block_forward.3} parent=0 // loop_header_branch
    %13 = sbr.rel (%p11) target = $region8
  $region5: #{basic_block_forward.3} parent=0 // loop_body
    %s15 = ssub.s32 %s10, 1
    %s16 = ssub.s32 %s10, 2
    %s17 = sadd.s32 %s10, 1
    %s18 = ssub.s32 %s10, %s17
    %p19 = scmp.eq.s32.totalorder %s18, 0
    %s21 = sadd.s32 %s20, 1
    %s22 = scalar_select %p19, %s20, %s21
    %p25 = pneg %p19
    %p26 = scmp.eq.s32.totalorder %s10, 3
    %p27 = por %p25, %p26
    %p28 = scmp.ne.s32.totalorder %s20, %s23
    %p29 = scmp.eq.s32.totalorder %s10, 0
    %p30 = por %p28, %p29
    %p31 = scmp.ne.s32.totalorder %s20, %s23
    %p32 = scmp.eq.s32.totalorder %s15, 3
    %p33 = por %p31, %p32
    %p34 = scmp.ne.s32.totalorder %s23, %s24
    %p35 = scmp.eq.s32.totalorder %s15, 0
    %p36 = por %p34, %p35
    %p37 = scmp.ne.s32.totalorder %s23, %s24
    %p38 = scmp.eq.s32.totalorder %s16, 3
    %p39 = por %p37, %p38
    %p41 = scmp.ne.s32.totalorder %s24, %s40
    %p42 = scmp.eq.s32.totalorder %s16, 0
    %p43 = por %p41, %p42
    %s45 = sadd.s32 %s44, 1
    %p48 = scmp.eq.s32.totalorder %s10, 3
    %p49 = scmp.ne.s32.totalorder %s44, %s46
    %p50 = scmp.eq.s32.totalorder %s10, 0
    %p51 = por %p49, %p50
    %p52 = scmp.ne.s32.totalorder %s44, %s46
    %p53 = scmp.eq.s32.totalorder %s15, 3
    %p54 = por %p52, %p53
    %p55 = scmp.ne.s32.totalorder %s46, %s47
    %p56 = scmp.eq.s32.totalorder %s15, 0
    %p57 = por %p55, %p56
    %p58 = scmp.ne.s32.totalorder %s46, %s47
    %p59 = scmp.eq.s32.totalorder %s16, 3
    %p60 = por %p58, %p59
    %p62 = scmp.ne.s32.totalorder %s47, %s61
    %p63 = scmp.eq.s32.totalorder %s16, 0
    %p64 = por %p62, %p63
    %s66 = sadd.s32 %s65, 1
    %p69 = scmp.eq.s32.totalorder %s10, 3
    %p70 = scmp.ne.s32.totalorder %s65, %s67
    %p71 = scmp.eq.s32.totalorder %s10, 0
    %p72 = por %p70, %p71
    %p73 = scmp.ne.s32.totalorder %s65, %s67
    %p74 = scmp.eq.s32.totalorder %s15, 3
    %p75 = por %p73, %p74
    %p76 = scmp.ne.s32.totalorder %s67, %s68
    %p77 = scmp.eq.s32.totalorder %s15, 0
    %p78 = por %p76, %p77
    %p79 = scmp.ne.s32.totalorder %s67, %s68
    %p80 = scmp.eq.s32.totalorder %s16, 3
    %p81 = por %p79, %p80
    %p83 = scmp.ne.s32.totalorder %s68, %s82
    %p84 = scmp.eq.s32.totalorder %s16, 0
    %p85 = por %p83, %p84
    %s87 = sadd.s32 %s86, 1
    %p90 = scmp.eq.s32.totalorder %s10, 3
    %p91 = scmp.ne.s32.totalorder %s86, %s88
    %p92 = scmp.eq.s32.totalorder %s10, 0
    %p93 = por %p91, %p92
    %p94 = scmp.ne.s32.totalorder %s86, %s88
    %p95 = scmp.eq.s32.totalorder %s15, 3
    %p96 = por %p94, %p95
    %p97 = scmp.ne.s32.totalorder %s88, %s89
    %p98 = scmp.eq.s32.totalorder %s15, 0
    %p99 = por %p97, %p98
    %p100 = scmp.ne.s32.totalorder %s88, %s89
    %p101 = scmp.eq.s32.totalorder %s16, 3
    %p102 = por %p100, %p101
    %p104 = scmp.ne.s32.totalorder %s89, %s103
    %p105 = scmp.eq.s32.totalorder %s16, 0
    %p106 = por %p104, %p105
    %s107 = ssub.s32 %s10, %s17
    %p108 = scmp.eq.s32.totalorder %s107, 0
    %s110 = sadd.s32 %s109, 1
    %s111 = scalar_select %p108, %s109, %s110
    %p114 = pneg %p108
    %p115 = scmp.eq.s32.totalorder %s10, 3
    %p116 = por %p114, %p115
    %p117 = scmp.ne.s32.totalorder %s109, %s112
    %p118 = scmp.eq.s32.totalorder %s10, 0
    %p119 = por %p117, %p118
    %p120 = scmp.ne.s32.totalorder %s109, %s112
    %p121 = scmp.eq.s32.totalorder %s15, 3
    %p122 = por %p120, %p121
    %p123 = scmp.ne.s32.totalorder %s112, %s113
    %p124 = scmp.eq.s32.totalorder %s15, 0
    %p125 = por %p123, %p124
    %p126 = scmp.ne.s32.totalorder %s112, %s113
    %p127 = scmp.eq.s32.totalorder %s16, 3
    %p128 = por %p126, %p127
    %p130 = scmp.ne.s32.totalorder %s113, %s129
    %p131 = scmp.eq.s32.totalorder %s16, 0
    %p132 = por %p130, %p131
    %p133 = scmp.le.s32.totalorder 1, %s10
    %p134 = scmp.lt.s32.totalorder %s10, 5
    %p135 = pnand %p133, %p134
    %p136 = pneg %p135
    // Predicated region
    $region9: #{basic_block_forward.3} parent=5 // pred_check
      _
    $region10: #{basic_block_forward.3} parent=5 // pred_check_branch
      %138 = sbr.rel (%p135) target = $region12
    $region11: #{basic_block_forward.3} parent=5 // pred_region
      %s139 = ssub.s32 %s10, 1
      // Predicated region
      $region13: #{basic_block_forward.3} parent=11 // pred_check
        %p140 = pneg %p57
      $region14: #{basic_block_forward.3} parent=11 // pred_check_branch
        %142 = sbr.rel (%p140) target = $region16
      $region15: #{basic_block_forward.3} parent=11 // pred_region
        _
      $region16: #{basic_block_forward.3} parent=11 // pred_fallthru
        _
      // Predicated region
      $region17: #{basic_block_forward.3} parent=11 // pred_check
        %p143 = pneg %p78
      $region18: #{basic_block_forward.3} parent=11 // pred_check_branch
        %145 = sbr.rel (%p143) target = $region20
      $region19: #{basic_block_forward.3} parent=11 // pred_region
        _
      $region20: #{basic_block_forward.3} parent=11 // pred_fallthru
        _
      // Predicated region
      $region21: #{basic_block_forward.3} parent=11 // pred_check
        %p146 = pneg %p99
      $region22: #{basic_block_forward.3} parent=11 // pred_check_branch
        %148 = sbr.rel (%p146) target = $region24
      $region23: #{basic_block_forward.3} parent=11 // pred_region
        _
      $region24: #{basic_block_forward.3} parent=11 // pred_fallthru
        _
    $region12: #{basic_block_forward.3} parent=5 // pred_fallthru
      _
    %p149 = scmp.lt.s32.totalorder %s10, 4
    // Predicated region
    $region25: #{basic_block_forward.3} parent=5 // pred_check
      %p150 = pneg %p149
    $region26: #{basic_block_forward.3} parent=5 // pred_check_branch
      %152 = sbr.rel (%p150) target = $region28
    $region27: #{basic_block_forward.3} parent=5 // pred_region
      // Predicated region
      $region29: #{basic_block_forward.3} parent=27 // pred_check
        %p153 = pneg %p30
      $region30: #{basic_block_forward.3} parent=27 // pred_check_branch
        %155 = sbr.rel (%p153) target = $region32
      $region31: #{basic_block_forward.3} parent=27 // pred_region
        %s156 = smul.u32 8, %s10
        %p157 = scmp.lt.s32.totalorder %s156, 31
        %s158 = scalar_select %p157, %s156, 31
        %s159 = smul.addr %s158, 3
        %s160 = smul.addr %s159, 8
        %s161 = scalar_lea.vmem %s0, %s160
        %s162 = smul.u32 8, %s10
      $region32: #{basic_block_forward.3} parent=27 // pred_fallthru
        _
    $region28: #{basic_block_forward.3} parent=5 // pred_fallthru
      _
    %p163 = scmp.le.s32.totalorder 1, %s10
    %p164 = scmp.lt.s32.totalorder %s10, 5
    %p165 = pnand %p163, %p164
    %p166 = pneg %p165
    // Predicated region
    $region33: #{basic_block_forward.3} parent=5 // pred_check
      _
    $region34: #{basic_block_forward.3} parent=5 // pred_check_branch
      %168 = sbr.rel (%p165) target = $region36
    $region35: #{basic_block_forward.3} parent=5 // pred_region
      %s169 = ssub.s32 %s10, 1
      %s170 = smul.u32 8, %s15
      %p171 = scmp.lt.s32.totalorder %s170, 31
      %s172 = scalar_select %p171, %s170, 31
      %s173 = smul.addr %s172, 3
      %s174 = smul.addr %s173, 8
      %s175 = scalar_lea.vmem %s0, %s174
      %p176 = pneg %p36
      %p177 = pneg %p33
      %p178 = pneg %p57
      %p179 = pneg %p54
      %p180 = pneg %p78
      %p181 = pneg %p75
      %p182 = pneg %p99
      %p183 = pneg %p96
      %p184 = pneg %p125
      %p185 = pneg %p122
      %s186 = smul.u32 16, %s15
      %p187 = scmp.lt.s32.totalorder %s186, 63
      %s188 = scalar_select %p187, %s186, 63
      %s189 = smul.addr %s188, 8
      %s190 = scalar_lea.vmem %s4, %s189
      %s191 = smul.u32 8, %s15
      %p192 = scmp.lt.s32.totalorder %s191, 31
      %s193 = scalar_select %p192, %s191, 31
      %s194 = smul.addr %s193, 3
      %s195 = smul.addr %s194, 8
      %s196 = scalar_lea.vmem %s0, %s195
      %s197 = smul.u32 8, %s15
      %s198 = smul.u32 16, %s15
      %p199 = scmp.lt.s32.totalorder %s198, 63
      %s200 = scalar_select %p199, %s198, 63
      %s201 = smul.addr %s200, 8
      %s202 = scalar_lea.vmem %s4, %s201
      %s203 = smul.u32 16, %s15
      %v204 = vld [vmem:[%s196] sm:$0xff]
      %v205 = vld [vmem:[%s196 + $0x8] sm:$0xff]
      %v206 = vld [vmem:[%s196 + $0x10] sm:$0xf]
      %v207 = vld [vmem:[%s196 + $0x18] sm:$0xff]
      %v208 = vld [vmem:[%s196 + $0x20] sm:$0xff]
      %v209 = vld [vmem:[%s196 + $0x28] sm:$0xf]
      %v210 = vld [vmem:[%s196 + $0x30] sm:$0xff]
      %v211 = vld [vmem:[%s196 + $0x38] sm:$0xff]
      %v212 = vld [vmem:[%s196 + $0x40] sm:$0xf]
      %v213 = vld [vmem:[%s196 + $0x48] sm:$0xff]
      %v214 = vld [vmem:[%s196 + $0x50] sm:$0xff]
      %v215 = vld [vmem:[%s196 + $0x58] sm:$0xf]
      %v216 = vld [vmem:[%s196 + $0x60] sm:$0xff]
      %v217 = vld [vmem:[%s196 + $0x68] sm:$0xff]
      %v218 = vld [vmem:[%s196 + $0x70] sm:$0xf]
      %v219 = vld [vmem:[%s196 + $0x78] sm:$0xff]
      %v220 = vld [vmem:[%s196 + $0x80] sm:$0xff]
      %v221 = vld [vmem:[%s196 + $0x88] sm:$0xf]
      %v222 = vld [vmem:[%s196 + $0x90] sm:$0xff]
      %v223 = vld [vmem:[%s196 + $0x98] sm:$0xff]
      %v224 = vld [vmem:[%s196 + $0xa0] sm:$0xf]
      %v225 = vld [vmem:[%s196 + $0xa8] sm:$0xff]
      %v226 = vld [vmem:[%s196 + $0xb0] sm:$0xff]
      %v227 = vld [vmem:[%s196 + $0xb8] sm:$0xf]
      %v228 = vld [vmem:[%s1] sm:$0xf]
      %vm253 = vcmask 1046528
      %v254 = vrot.slane %v204, 1
      %v255 = vrot.slane %v205, 1
      %v256 = vsel %vm253, %v254, %v255
      %v257 = vrot.slane %v206, 1
      %v258 = vsel %vm253, %v255, %v257
      %v259 = vrot.slane %v207, 1
      %v260 = vrot.slane %v208, 1
      %v261 = vsel %vm253, %v259, %v260
      %v262 = vrot.slane %v209, 1
      %v263 = vsel %vm253, %v260, %v262
      %v264 = vrot.slane %v210, 1
      %v265 = vrot.slane %v211, 1
      %v266 = vsel %vm253, %v264, %v265
      %v267 = vrot.slane %v212, 1
      %v268 = vsel %vm253, %v265, %v267
      %v269 = vrot.slane %v213, 1
      %v270 = vrot.slane %v214, 1
      %v271 = vsel %vm253, %v269, %v270
      %v272 = vrot.slane %v215, 1
      %v273 = vsel %vm253, %v270, %v272
      %v274 = vrot.slane %v216, 1
      %v275 = vrot.slane %v217, 1
      %v276 = vsel %vm253, %v274, %v275
      %v277 = vrot.slane %v218, 1
      %v278 = vsel %vm253, %v275, %v277
      %v279 = vrot.slane %v219, 1
      %v280 = vrot.slane %v220, 1
      %v281 = vsel %vm253, %v279, %v280
      %v282 = vrot.slane %v221, 1
      %v283 = vsel %vm253, %v280, %v282
      %v284 = vrot.slane %v222, 1
      %v285 = vrot.slane %v223, 1
      %v286 = vsel %vm253, %v284, %v285
      %v287 = vrot.slane %v224, 1
      %v288 = vsel %vm253, %v285, %v287
      %v289 = vrot.slane %v225, 1
      %v290 = vrot.slane %v226, 1
      %v291 = vsel %vm253, %v289, %v290
      %v292 = vrot.slane %v227, 1
      %v293 = vsel %vm253, %v290, %v292
      %s294 = scalar_lea.vmem %s1, 4
      %v295 = vld [vmem:[%s294] sm:$0xf]
      %vm296 = vcmask 31744
      %v297 = vsel %vm296, %v256, 0
      %v299 = vsel %vm296, %v258, 0
      %v301 = vsel %vm296, %v261, 0
      %v303 = vsel %vm296, %v263, 0
      %v305 = vsel %vm296, %v266, 0
      %v307 = vsel %vm296, %v268, 0
      %v309 = vsel %vm296, %v271, 0
      %v311 = vsel %vm296, %v273, 0
      %v313 = vsel %vm296, %v276, 0
      %v315 = vsel %vm296, %v278, 0
      %v317 = vsel %vm296, %v281, 0
      %v319 = vsel %vm296, %v283, 0
      %v321 = vsel %vm296, %v286, 0
      %v323 = vsel %vm296, %v288, 0
      %v325 = vsel %vm296, %v291, 0
      %v327 = vsel %vm296, %v293, 0
      %vm329 = vcmask 1043456
      %v331 = vsel %vm329, %v295, 0
      %333 = vmatprep.subr.mxu0 0.0
      %334 = vmatpush1.msra.mxu0 %v331
      %335 = vmatprep.subr.mxu0 0.0
      %336 = vmatpush1.msra.mxu0 0.0
      %337 = vmatprep.subr.mxu0 0.0
      %338 = vmatpush1.msra.mxu0 0.0
      %339 = vmatprep.subr.mxu0 0.0
      %340 = vmatpush1.msra.mxu0 0.0
      %341 = vmatprep.subr.mxu0 0.0
      %342 = vmatpush1.msra.mxu0 0.0
      %343 = vmatprep.subr.mxu0 0.0
      %344 = vmatpush1.msra.mxu0 0.0
      %345 = vmatprep.subr.mxu0 0.0
      %346 = vmatpush1.msra.mxu0 0.0
      %347 = vmatprep.subr.mxu0 0.0
      %348 = vmatpush1.msra.mxu0 0.0
      %349 = vmatprep.subr.mxu0 0.0
      %350 = vmatpush1.msra.mxu0 0.0
      %351 = vmatprep.subr.mxu0 0.0
      %352 = vmatpush1.msra.mxu0 0.0
      %353 = vmatprep.subr.mxu0 0.0
      %354 = vmatpush1.msra.mxu0 0.0
      %355 = vmatprep.subr.mxu0 0.0
      %356 = vmatpush1.msra.mxu0 0.0
      %357 = vmatprep.subr.mxu0 0.0
      %358 = vmatpush1.msra.mxu0 0.0
      %359 = vmatprep.subr.mxu0 0.0
      %360 = vmatpush1.msra.mxu0 0.0
      %361 = vmatprep.subr.mxu0 0.0
      %362 = vmatpush1.msra.mxu0 0.0
      %363 = vmatprep.subr.mxu0 0.0
      %364 = vmatpush1.msra.mxu0 0.0
      %365 = vmatprep.subr.mxu0 0.0
      %366 = vmatpush1.msra.mxu0 0.0
      %367 = vmatprep.subr.mxu0 0.0
      %368 = vmatpush1.msra.mxu0 0.0
      %369 = vmatprep.subr.mxu0 0.0
      %370 = vmatpush1.msra.mxu0 0.0
      %371 = vmatprep.subr.mxu0 0.0
      %372 = vmatpush1.msra.mxu0 0.0
      %373 = vmatprep.subr.mxu0 0.0
      %374 = vmatpush1.msra.mxu0 0.0
      %375 = vmatprep.subr.mxu0 0.0
      %376 = vmatpush1.msra.mxu0 0.0
      %377 = vmatprep.subr.mxu0 0.0
      %378 = vmatpush1.msra.mxu0 0.0
      %379 = vmatprep.subr.mxu0 0.0
      %380 = vmatpush1.msra.mxu0 0.0
      %381 = vmatprep.subr.mxu0 0.0
      %382 = vmatpush1.msra.mxu0 0.0
      %383 = vmatprep.subr.mxu0 0.0
      %384 = vmatpush1.msra.mxu0 0.0
      %385 = vmatprep.subr.mxu0 0.0
      %386 = vmatpush1.msra.mxu0 0.0
      %387 = vmatprep.subr.mxu0 0.0
      %388 = vmatpush1.msra.mxu0 0.0
      %389 = vmatprep.subr.mxu0 0.0
      %390 = vmatpush1.msra.mxu0 0.0
      %391 = vmatprep.subr.mxu0 0.0
      %392 = vmatpush1.msra.mxu0 0.0
      %393 = vmatprep.subr.mxu0 0.0
      %394 = vmatpush1.msra.mxu0 0.0
      %395 = vmatprep.subr.mxu0 0.0
      %396 = vmatpush1.msra.mxu0 0.0
      %397 = vmatprep.mubr.f32.mxu0 0.0
      %398 = vmatmul.mubr.f32.gmra.mrb[0].mxu0 %v297
      %v399 = vpop.f32.mrb[0].mxu0
      %v400 = vadd.f32 0.0, %v399
      %v401 = vpop.f32.mrb[0].mxu0
      %402 = vmatprep.mubr.f32.mxu0 0.0
      %403 = vmatmul.mubr.f32.gmra.mrb[0].mxu0 %v299
      %v404 = vpop.f32.mrb[0].mxu0
      %v405 = vadd.f32 0.0, %v404
      %v406 = vpop.f32.mrb[0].mxu0
      %407 = vmatprep.mubr.f32.mxu0 0.0
      %408 = vmatmul.mubr.f32.gmra.mrb[0].mxu0 %v301
      %v409 = vpop.f32.mrb[0].mxu0
      %v410 = vadd.f32 0.0, %v409
      %v411 = vpop.f32.mrb[0].mxu0
      %412 = vmatprep.mubr.f32.mxu0 0.0
      %413 = vmatmul.mubr.f32.gmra.mrb[0].mxu0 %v303
      %v414 = vpop.f32.mrb[0].mxu0
      %v415 = vadd.f32 0.0, %v414
      %v416 = vpop.f32.mrb[0].mxu0
      %417 = vmatprep.mubr.f32.mxu0 0.0
      %418 = vmatmul.mubr.f32.gmra.mrb[0].mxu0 %v305
      %v419 = vpop.f32.mrb[0].mxu0
      %v420 = vadd.f32 0.0, %v419
      %v421 = vpop.f32.mrb[0].mxu0
      %422 = vmatprep.mubr.f32.mxu0 0.0
      %423 = vmatmul.mubr.f32.gmra.mrb[0].mxu0 %v307
      %v424 = vpop.f32.mrb[0].mxu0
      %v425 = vadd.f32 0.0, %v424
      %v426 = vpop.f32.mrb[0].mxu0
      %427 = vmatprep.mubr.f32.mxu0 0.0
      %428 = vmatmul.mubr.f32.gmra.mrb[0].mxu0 %v309
      %v429 = vpop.f32.mrb[0].mxu0
      %v430 = vadd.f32 0.0, %v429
      %v431 = vpop.f32.mrb[0].mxu0
      %432 = vmatprep.mubr.f32.mxu0 0.0
      %433 = vmatmul.mubr.f32.gmra.mrb[0].mxu0 %v311
      %v434 = vpop.f32.mrb[0].mxu0
      %v435 = vadd.f32 0.0, %v434
      %v436 = vpop.f32.mrb[0].mxu0
      %437 = vmatprep.mubr.f32.mxu0 0.0
      %438 = vmatmul.mubr.f32.gmra.mrb[0].mxu0 %v313
      %v439 = vpop.f32.mrb[0].mxu0
      %v440 = vadd.f32 0.0, %v439
      %v441 = vpop.f32.mrb[0].mxu0
      %442 = vmatprep.mubr.f32.mxu0 0.0
      %443 = vmatmul.mubr.f32.gmra.mrb[0].mxu0 %v315
      %v444 = vpop.f32.mrb[0].mxu0
      %v445 = vadd.f32 0.0, %v444
      %v446 = vpop.f32.mrb[0].mxu0
      %447 = vmatprep.mubr.f32.mxu0 0.0
      %448 = vmatmul.mubr.f32.gmra.mrb[0].mxu0 %v317
      %v449 = vpop.f32.mrb[0].mxu0
      %v450 = vadd.f32 0.0, %v449
      %v451 = vpop.f32.mrb[0].mxu0
      %452 = vmatprep.mubr.f32.mxu0 0.0
      %453 = vmatmul.mubr.f32.gmra.mrb[0].mxu0 %v319
      %v454 = vpop.f32.mrb[0].mxu0
      %v455 = vadd.f32 0.0, %v454
      %v456 = vpop.f32.mrb[0].mxu0
      %457 = vmatprep.mubr.f32.mxu0 0.0
      %458 = vmatmul.mubr.f32.gmra.mrb[0].mxu0 %v321
      %v459 = vpop.f32.mrb[0].mxu0
      %v460 = vadd.f32 0.0, %v459
      %v461 = vpop.f32.mrb[0].mxu0
      %462 = vmatprep.mubr.f32.mxu0 0.0
      %463 = vmatmul.mubr.f32.gmra.mrb[0].mxu0 %v323
      %v464 = vpop.f32.mrb[0].mxu0
      %v465 = vadd.f32 0.0, %v464
      %v466 = vpop.f32.mrb[0].mxu0
      %467 = vmatprep.mubr.f32.mxu0 0.0
      %468 = vmatmul.mubr.f32.gmra.mrb[0].mxu0 %v325
      %v469 = vpop.f32.mrb[0].mxu0
      %v470 = vadd.f32 0.0, %v469
      %v471 = vpop.f32.mrb[0].mxu0
      %472 = vmatprep.mubr.f32.mxu0 0.0
      %473 = vmatmul.mubr.f32.gmra.mrb[0].mxu0 %v327
      %v474 = vpop.f32.mrb[0].mxu0
      %v475 = vadd.f32 0.0, %v474
      %v476 = vpop.f32.mrb[0].mxu0
      %477 = vdwg.mxu0
      %v478 = vsel %vm296, %v204, 0
      %v480 = vsel %vm296, %v205, 0
      %v482 = vsel %vm296, %v207, 0
      %v484 = vsel %vm296, %v208, 0
      %v486 = vsel %vm296, %v210, 0
      %v488 = vsel %vm296, %v211, 0
      %v490 = vsel %vm296, %v213, 0
      %v492 = vsel %vm296, %v214, 0
      %v494 = vsel %vm296, %v216, 0
      %v496 = vsel %vm296, %v217, 0
      %v498 = vsel %vm296, %v219, 0
      %v500 = vsel %vm296, %v220, 0
      %v502 = vsel %vm296, %v222, 0
      %v504 = vsel %vm296, %v223, 0
      %v506 = vsel %vm296, %v225, 0
      %v508 = vsel %vm296, %v226, 0
      %v511 = vsel %vm329, %v228, 0
      %513 = vmatprep.subr.mxu0 0.0
      %514 = vmatpush1.msra.mxu0 %v511
      %515 = vmatprep.subr.mxu0 0.0
      %516 = vmatpush1.msra.mxu0 0.0
      %517 = vmatprep.subr.mxu0 0.0
      %518 = vmatpush1.msra.mxu0 0.0
      %519 = vmatprep.subr.mxu0 0.0
      %520 = vmatpush1.msra.mxu0 0.0
      %521 = vmatprep.subr.mxu0 0.0
      %522 = vmatpush1.msra.mxu0 0.0
      %523 = vmatprep.subr.mxu0 0.0
      %524 = vmatpush1.msra.mxu0 0.0
      %525 = vmatprep.subr.mxu0 0.0
      %526 = vmatpush1.msra.mxu0 0.0
      %527 = vmatprep.subr.mxu0 0.0
      %528 = vmatpush1.msra.mxu0 0.0
      %529 = vmatprep.subr.mxu0 0.0
      %530 = vmatpush1.msra.mxu0 0.0
      %531 = vmatprep.subr.mxu0 0.0
      %532 = vmatpush1.msra.mxu0 0.0
      %533 = vmatprep.subr.mxu0 0.0
      %534 = vmatpush1.msra.mxu0 0.0
      %535 = vmatprep.subr.mxu0 0.0
      %536 = vmatpush1.msra.mxu0 0.0
      %537 = vmatprep.subr.mxu0 0.0
      %538 = vmatpush1.msra.mxu0 0.0
      %539 = vmatprep.subr.mxu0 0.0
      %540 = vmatpush1.msra.mxu0 0.0
      %541 = vmatprep.subr.mxu0 0.0
      %542 = vmatpush1.msra.mxu0 0.0
      %543 = vmatprep.subr.mxu0 0.0
      %544 = vmatpush1.msra.mxu0 0.0
      %545 = vmatprep.subr.mxu0 0.0
      %546 = vmatpush1.msra.mxu0 0.0
      %547 = vmatprep.subr.mxu0 0.0
      %548 = vmatpush1.msra.mxu0 0.0
      %549 = vmatprep.subr.mxu0 0.0
      %550 = vmatpush1.msra.mxu0 0.0
      %551 = vmatprep.subr.mxu0 0.0
      %552 = vmatpush1.msra.mxu0 0.0
      %553 = vmatprep.subr.mxu0 0.0
      %554 = vmatpush1.msra.mxu0 0.0
      %555 = vmatprep.subr.mxu0 0.0
      %556 = vmatpush1.msra.mxu0 0.0
      %557 = vmatprep.subr.mxu0 0.0
      %558 = vmatpush1.msra.mxu0 0.0
      %559 = vmatprep.subr.mxu0 0.0
      %560 = vmatpush1.msra.mxu0 0.0
      %561 = vmatprep.subr.mxu0 0.0
      %562 = vmatpush1.msra.mxu0 0.0
      %563 = vmatprep.subr.mxu0 0.0
      %564 = vmatpush1.msra.mxu0 0.0
      %565 = vmatprep.subr.mxu0 0.0
      %566 = vmatpush1.msra.mxu0 0.0
      %567 = vmatprep.subr.mxu0 0.0
      %568 = vmatpush1.msra.mxu0 0.0
      %569 = vmatprep.subr.mxu0 0.0
      %570 = vmatpush1.msra.mxu0 0.0
      %571 = vmatprep.subr.mxu0 0.0
      %572 = vmatpush1.msra.mxu0 0.0
      %573 = vmatprep.subr.mxu0 0.0
      %574 = vmatpush1.msra.mxu0 0.0
      %575 = vmatprep.subr.mxu0 0.0
      %576 = vmatpush1.msra.mxu0 0.0
      %577 = vmatprep.mubr.f32.mxu0 0.0
      %578 = vmatmul.mubr.f32.gmra.mrb[0].mxu0 %v478
      %v579 = vpop.f32.mrb[0].mxu0
      %v580 = vadd.f32 %v400, %v579
      %v581 = vpop.f32.mrb[0].mxu0
      %582 = vmatprep.mubr.f32.mxu0 0.0
      %583 = vmatmul.mubr.f32.gmra.mrb[0].mxu0 %v480
      %v584 = vpop.f32.mrb[0].mxu0
      %v585 = vadd.f32 %v405, %v584
      %v586 = vpop.f32.mrb[0].mxu0
      %587 = vmatprep.mubr.f32.mxu0 0.0
      %588 = vmatmul.mubr.f32.gmra.mrb[0].mxu0 %v482
      %v589 = vpop.f32.mrb[0].mxu0
      %v590 = vadd.f32 %v410, %v589
      %v591 = vpop.f32.mrb[0].mxu0
      %592 = vmatprep.mubr.f32.mxu0 0.0
      %593 = vmatmul.mubr.f32.gmra.mrb[0].mxu0 %v484
      %v594 = vpop.f32.mrb[0].mxu0
      %v595 = vadd.f32 %v415, %v594
      %v596 = vpop.f32.mrb[0].mxu0
      %597 = vmatprep.mubr.f32.mxu0 0.0
      %598 = vmatmul.mubr.f32.gmra.mrb[0].mxu0 %v486
      %v599 = vpop.f32.mrb[0].mxu0
      %v600 = vadd.f32 %v420, %v599
      %v601 = vpop.f32.mrb[0].mxu0
      %602 = vmatprep.mubr.f32.mxu0 0.0
      %603 = vmatmul.mubr.f32.gmra.mrb[0].mxu0 %v488
      %v604 = vpop.f32.mrb[0].mxu0
      %v605 = vadd.f32 %v425, %v604
      %v606 = vpop.f32.mrb[0].mxu0
      %607 = vmatprep.mubr.f32.mxu0 0.0
      %608 = vmatmul.mubr.f32.gmra.mrb[0].mxu0 %v490
      %v609 = vpop.f32.mrb[0].mxu0
      %v610 = vadd.f32 %v430, %v609
      %v611 = vpop.f32.mrb[0].mxu0
      %612 = vmatprep.mubr.f32.mxu0 0.0
      %613 = vmatmul.mubr.f32.gmra.mrb[0].mxu0 %v492
      %v614 = vpop.f32.mrb[0].mxu0
      %v615 = vadd.f32 %v435, %v614
      %v616 = vpop.f32.mrb[0].mxu0
      %617 = vmatprep.mubr.f32.mxu0 0.0
      %618 = vmatmul.mubr.f32.gmra.mrb[0].mxu0 %v494
      %v619 = vpop.f32.mrb[0].mxu0
      %v620 = vadd.f32 %v440, %v619
      %v621 = vpop.f32.mrb[0].mxu0
      %622 = vmatprep.mubr.f32.mxu0 0.0
      %623 = vmatmul.mubr.f32.gmra.mrb[0].mxu0 %v496
      %v624 = vpop.f32.mrb[0].mxu0
      %v625 = vadd.f32 %v445, %v624
      %v626 = vpop.f32.mrb[0].mxu0
      %627 = vmatprep.mubr.f32.mxu0 0.0
      %628 = vmatmul.mubr.f32.gmra.mrb[0].mxu0 %v498
      %v629 = vpop.f32.mrb[0].mxu0
      %v630 = vadd.f32 %v450, %v629
      %v631 = vpop.f32.mrb[0].mxu0
      %632 = vmatprep.mubr.f32.mxu0 0.0
      %633 = vmatmul.mubr.f32.gmra.mrb[0].mxu0 %v500
      %v634 = vpop.f32.mrb[0].mxu0
      %v635 = vadd.f32 %v455, %v634
      %v636 = vpop.f32.mrb[0].mxu0
      %637 = vmatprep.mubr.f32.mxu0 0.0
      %638 = vmatmul.mubr.f32.gmra.mrb[0].mxu0 %v502
      %v639 = vpop.f32.mrb[0].mxu0
      %v640 = vadd.f32 %v460, %v639
      %v641 = vpop.f32.mrb[0].mxu0
      %642 = vmatprep.mubr.f32.mxu0 0.0
      %643 = vmatmul.mubr.f32.gmra.mrb[0].mxu0 %v504
      %v644 = vpop.f32.mrb[0].mxu0
      %v645 = vadd.f32 %v465, %v644
      %v646 = vpop.f32.mrb[0].mxu0
      %647 = vmatprep.mubr.f32.mxu0 0.0
      %648 = vmatmul.mubr.f32.gmra.mrb[0].mxu0 %v506
      %v649 = vpop.f32.mrb[0].mxu0
      %v650 = vadd.f32 %v470, %v649
      %v651 = vpop.f32.mrb[0].mxu0
      %652 = vmatprep.mubr.f32.mxu0 0.0
      %653 = vmatmul.mubr.f32.gmra.mrb[0].mxu0 %v508
      %v654 = vpop.f32.mrb[0].mxu0
      %v655 = vadd.f32 %v475, %v654
      %v656 = vpop.f32.mrb[0].mxu0
      %657 = vdwg.mxu0
      %vm658 = vcmask 1045504
      %v659 = vrot.slane %v204, 2
      %v660 = vrot.slane %v205, 2
      %v661 = vsel %vm658, %v659, %v660
      %v662 = vrot.slane %v206, 2
      %v663 = vsel %vm658, %v660, %v662
      %v664 = vrot.slane %v207, 2
      %v665 = vrot.slane %v208, 2
      %v666 = vsel %vm658, %v664, %v665
      %v667 = vrot.slane %v209, 2
      %v668 = vsel %vm658, %v665, %v667
      %v669 = vrot.slane %v210, 2
      %v670 = vrot.slane %v211, 2
      %v671 = vsel %vm658, %v669, %v670
      %v672 = vrot.slane %v212, 2
      %v673 = vsel %vm658, %v670, %v672
      %v674 = vrot.slane %v213, 2
      %v675 = vrot.slane %v214, 2
      %v676 = vsel %vm658, %v674, %v675
      %v677 = vrot.slane %v215, 2
      %v678 = vsel %vm658, %v675, %v677
      %v679 = vrot.slane %v216, 2
      %v680 = vrot.slane %v217, 2
      %v681 = vsel %vm658, %v679, %v680
      %v682 = vrot.slane %v218, 2
      %v683 = vsel %vm658, %v680, %v682
      %v684 = vrot.slane %v219, 2
      %v685 = vrot.slane %v220, 2
      %v686 = vsel %vm658, %v684, %v685
      %v687 = vrot.slane %v221, 2
      %v688 = vsel %vm658, %v685, %v687
      %v689 = vrot.slane %v222, 2
      %v690 = vrot.slane %v223, 2
      %v691 = vsel %vm658, %v689, %v690
      %v692 = vrot.slane %v224, 2
      %v693 = vsel %vm658, %v690, %v692
      %v694 = vrot.slane %v225, 2
      %v695 = vrot.slane %v226, 2
      %v696 = vsel %vm658, %v694, %v695
      %v697 = vrot.slane %v227, 2
      %v698 = vsel %vm658, %v695, %v697
      %s699 = scalar_lea.vmem %s1, 8
      %v700 = vld [vmem:[%s699] sm:$0xf]
      %v701 = vsel %vm296, %v661, 0
      %v703 = vsel %vm296, %v663, 0
      %v705 = vsel %vm296, %v666, 0
      %v707 = vsel %vm296, %v668, 0
      %v709 = vsel %vm296, %v671, 0
      %v711 = vsel %vm296, %v673, 0
      %v713 = vsel %vm296, %v676, 0
      %v715 = vsel %vm296, %v678, 0
      %v717 = vsel %vm296, %v681, 0
      %v719 = vsel %vm296, %v683, 0
      %v721 = vsel %vm296, %v686, 0
      %v723 = vsel %vm296, %v688, 0
      %v725 = vsel %vm296, %v691, 0
      %v727 = vsel %vm296, %v693, 0
      %v729 = vsel %vm296, %v696, 0
      %v731 = vsel %vm296, %v698, 0
      %v734 = vsel %vm329, %v700, 0
      %736 = vmatprep.subr.mxu0 0.0
      %737 = vmatpush1.msra.mxu0 %v734
      %738 = vmatprep.subr.mxu0 0.0
      %739 = vmatpush1.msra.mxu0 0.0
      %740 = vmatprep.subr.mxu0 0.0
      %741 = vmatpush1.msra.mxu0 0.0
      %742 = vmatprep.subr.mxu0 0.0
      %743 = vmatpush1.msra.mxu0 0.0
      %744 = vmatprep.subr.mxu0 0.0
      %745 = vmatpush1.msra.mxu0 0.0
      %746 = vmatprep.subr.mxu0 0.0
      %747 = vmatpush1.msra.mxu0 0.0
      %748 = vmatprep.subr.mxu0 0.0
      %749 = vmatpush1.msra.mxu0 0.0
      %750 = vmatprep.subr.mxu0 0.0
      %751 = vmatpush1.msra.mxu0 0.0
      %752 = vmatprep.subr.mxu0 0.0
      %753 = vmatpush1.msra.mxu0 0.0
      %754 = vmatprep.subr.mxu0 0.0
      %755 = vmatpush1.msra.mxu0 0.0
      %756 = vmatprep.subr.mxu0 0.0
      %757 = vmatpush1.msra.mxu0 0.0
      %758 = vmatprep.subr.mxu0 0.0
      %759 = vmatpush1.msra.mxu0 0.0
      %760 = vmatprep.subr.mxu0 0.0
      %761 = vmatpush1.msra.mxu0 0.0
      %762 = vmatprep.subr.mxu0 0.0
      %763 = vmatpush1.msra.mxu0 0.0
      %764 = vmatprep.subr.mxu0 0.0
      %765 = vmatpush1.msra.mxu0 0.0
      %766 = vmatprep.subr.mxu0 0.0
      %767 = vmatpush1.msra.mxu0 0.0
      %768 = vmatprep.subr.mxu0 0.0
      %769 = vmatpush1.msra.mxu0 0.0
      %770 = vmatprep.subr.mxu0 0.0
      %771 = vmatpush1.msra.mxu0 0.0
      %772 = vmatprep.subr.mxu0 0.0
      %773 = vmatpush1.msra.mxu0 0.0
      %774 = vmatprep.subr.mxu0 0.0
      %775 = vmatpush1.msra.mxu0 0.0
      %776 = vmatprep.subr.mxu0 0.0
      %777 = vmatpush1.msra.mxu0 0.0
      %778 = vmatprep.subr.mxu0 0.0
      %779 = vmatpush1.msra.mxu0 0.0
      %780 = vmatprep.subr.mxu0 0.0
      %781 = vmatpush1.msra.mxu0 0.0
      %782 = vmatprep.subr.mxu0 0.0
      %783 = vmatpush1.msra.mxu0 0.0
      %784 = vmatprep.subr.mxu0 0.0
      %785 = vmatpush1.msra.mxu0 0.0
      %786 = vmatprep.subr.mxu0 0.0
      %787 = vmatpush1.msra.mxu0 0.0
      %788 = vmatprep.subr.mxu0 0.0
      %789 = vmatpush1.msra.mxu0 0.0
      %790 = vmatprep.subr.mxu0 0.0
      %791 = vmatpush1.msra.mxu0 0.0
      %792 = vmatprep.subr.mxu0 0.0
      %793 = vmatpush1.msra.mxu0 0.0
      %794 = vmatprep.subr.mxu0 0.0
      %795 = vmatpush1.msra.mxu0 0.0
      %796 = vmatprep.subr.mxu0 0.0
      %797 = vmatpush1.msra.mxu0 0.0
      %798 = vmatprep.subr.mxu0 0.0
      %799 = vmatpush1.msra.mxu0 0.0
      %800 = vmatprep.mubr.f32.mxu0 0.0
      %801 = vmatmul.mubr.f32.gmra.mrb[0].mxu0 %v701
      %v802 = vpop.f32.mrb[0].mxu0
      %v803 = vadd.f32 0.0, %v802
      %v804 = vpop.f32.mrb[0].mxu0
      %805 = vmatprep.mubr.f32.mxu0 0.0
      %806 = vmatmul.mubr.f32.gmra.mrb[0].mxu0 %v703
      %v807 = vpop.f32.mrb[0].mxu0
      %v808 = vadd.f32 0.0, %v807
      %v809 = vpop.f32.mrb[0].mxu0
      %810 = vmatprep.mubr.f32.mxu0 0.0
      %811 = vmatmul.mubr.f32.gmra.mrb[0].mxu0 %v705
      %v812 = vpop.f32.mrb[0].mxu0
      %v813 = vadd.f32 0.0, %v812
      %v814 = vpop.f32.mrb[0].mxu0
      %815 = vmatprep.mubr.f32.mxu0 0.0
      %816 = vmatmul.mubr.f32.gmra.mrb[0].mxu0 %v707
      %v817 = vpop.f32.mrb[0].mxu0
      %v818 = vadd.f32 0.0, %v817
      %v819 = vpop.f32.mrb[0].mxu0
      %820 = vmatprep.mubr.f32.mxu0 0.0
      %821 = vmatmul.mubr.f32.gmra.mrb[0].mxu0 %v709
      %v822 = vpop.f32.mrb[0].mxu0
      %v823 = vadd.f32 0.0, %v822
      %v824 = vpop.f32.mrb[0].mxu0
      %825 = vmatprep.mubr.f32.mxu0 0.0
      %826 = vmatmul.mubr.f32.gmra.mrb[0].mxu0 %v711
      %v827 = vpop.f32.mrb[0].mxu0
      %v828 = vadd.f32 0.0, %v827
      %v829 = vpop.f32.mrb[0].mxu0
      %830 = vmatprep.mubr.f32.mxu0 0.0
      %831 = vmatmul.mubr.f32.gmra.mrb[0].mxu0 %v713
      %v832 = vpop.f32.mrb[0].mxu0
      %v833 = vadd.f32 0.0, %v832
      %v834 = vpop.f32.mrb[0].mxu0
      %835 = vmatprep.mubr.f32.mxu0 0.0
      %836 = vmatmul.mubr.f32.gmra.mrb[0].mxu0 %v715
      %v837 = vpop.f32.mrb[0].mxu0
      %v838 = vadd.f32 0.0, %v837
      %v839 = vpop.f32.mrb[0].mxu0
      %840 = vmatprep.mubr.f32.mxu0 0.0
      %841 = vmatmul.mubr.f32.gmra.mrb[0].mxu0 %v717
      %v842 = vpop.f32.mrb[0].mxu0
      %v843 = vadd.f32 0.0, %v842
      %v844 = vpop.f32.mrb[0].mxu0
      %845 = vmatprep.mubr.f32.mxu0 0.0
      %846 = vmatmul.mubr.f32.gmra.mrb[0].mxu0 %v719
      %v847 = vpop.f32.mrb[0].mxu0
      %v848 = vadd.f32 0.0, %v847
      %v849 = vpop.f32.mrb[0].mxu0
      %850 = vmatprep.mubr.f32.mxu0 0.0
      %851 = vmatmul.mubr.f32.gmra.mrb[0].mxu0 %v721
      %v852 = vpop.f32.mrb[0].mxu0
      %v853 = vadd.f32 0.0, %v852
      %v854 = vpop.f32.mrb[0].mxu0
      %855 = vmatprep.mubr.f32.mxu0 0.0
      %856 = vmatmul.mubr.f32.gmra.mrb[0].mxu0 %v723
      %v857 = vpop.f32.mrb[0].mxu0
      %v858 = vadd.f32 0.0, %v857
      %v859 = vpop.f32.mrb[0].mxu0
      %860 = vmatprep.mubr.f32.mxu0 0.0
      %861 = vmatmul.mubr.f32.gmra.mrb[0].mxu0 %v725
      %v862 = vpop.f32.mrb[0].mxu0
      %v863 = vadd.f32 0.0, %v862
      %v864 = vpop.f32.mrb[0].mxu0
      %865 = vmatprep.mubr.f32.mxu0 0.0
      %866 = vmatmul.mubr.f32.gmra.mrb[0].mxu0 %v727
      %v867 = vpop.f32.mrb[0].mxu0
      %v868 = vadd.f32 0.0, %v867
      %v869 = vpop.f32.mrb[0].mxu0
      %870 = vmatprep.mubr.f32.mxu0 0.0
      %871 = vmatmul.mubr.f32.gmra.mrb[0].mxu0 %v729
      %v872 = vpop.f32.mrb[0].mxu0
      %v873 = vadd.f32 0.0, %v872
      %v874 = vpop.f32.mrb[0].mxu0
      %875 = vmatprep.mubr.f32.mxu0 0.0
      %876 = vmatmul.mubr.f32.gmra.mrb[0].mxu0 %v731
      %v877 = vpop.f32.mrb[0].mxu0
      %v878 = vadd.f32 0.0, %v877
      %v879 = vpop.f32.mrb[0].mxu0
      %880 = vdwg.mxu0
      %v881 = vadd.f32 %v580, %v803
      %v882 = vadd.f32 %v585, %v808
      %v883 = vadd.f32 %v590, %v813
      %v884 = vadd.f32 %v595, %v818
      %v885 = vadd.f32 %v600, %v823
      %v886 = vadd.f32 %v605, %v828
      %v887 = vadd.f32 %v610, %v833
      %v888 = vadd.f32 %v615, %v838
      %v889 = vadd.f32 %v620, %v843
      %v890 = vadd.f32 %v625, %v848
      %v891 = vadd.f32 %v630, %v853
      %v892 = vadd.f32 %v635, %v858
      %v893 = vadd.f32 %v640, %v863
      %v894 = vadd.f32 %v645, %v868
      %v895 = vadd.f32 %v650, %v873
      %v896 = vadd.f32 %v655, %v878
      %vm897 = vcmask 1044480
      %v898 = vrot.slane %v204, 3
      %v899 = vrot.slane %v205, 3
      %v900 = vsel %vm897, %v898, %v899
      %v901 = vrot.slane %v206, 3
      %v902 = vsel %vm897, %v899, %v901
      %v903 = vrot.slane %v207, 3
      %v904 = vrot.slane %v208, 3
      %v905 = vsel %vm897, %v903, %v904
      %v906 = vrot.slane %v209, 3
      %v907 = vsel %vm897, %v904, %v906
      %v908 = vrot.slane %v210, 3
      %v909 = vrot.slane %v211, 3
      %v910 = vsel %vm897, %v908, %v909
      %v911 = vrot.slane %v212, 3
      %v912 = vsel %vm897, %v909, %v911
      %v913 = vrot.slane %v213, 3
      %v914 = vrot.slane %v214, 3
      %v915 = vsel %vm897, %v913, %v914
      %v916 = vrot.slane %v215, 3
      %v917 = vsel %vm897, %v914, %v916
      %v918 = vrot.slane %v216, 3
      %v919 = vrot.slane %v217, 3
      %v920 = vsel %vm897, %v918, %v919
      %v921 = vrot.slane %v218, 3
      %v922 = vsel %vm897, %v919, %v921
      %v923 = vrot.slane %v219, 3
      %v924 = vrot.slane %v220, 3
      %v925 = vsel %vm897, %v923, %v924
      %v926 = vrot.slane %v221, 3
      %v927 = vsel %vm897, %v924, %v926
      %v928 = vrot.slane %v222, 3
      %v929 = vrot.slane %v223, 3
      %v930 = vsel %vm897, %v928, %v929
      %v931 = vrot.slane %v224, 3
      %v932 = vsel %vm897, %v929, %v931
      %v933 = vrot.slane %v225, 3
      %v934 = vrot.slane %v226, 3
      %v935 = vsel %vm897, %v933, %v934
      %v936 = vrot.slane %v227, 3
      %v937 = vsel %vm897, %v934, %v936
      %s938 = scalar_lea.vmem %s1, 12
      %v939 = vld [vmem:[%s938] sm:$0xf]
      %v940 = vsel %vm296, %v900, 0
      %v942 = vsel %vm296, %v902, 0
      %v944 = vsel %vm296, %v905, 0
      %v946 = vsel %vm296, %v907, 0
      %v948 = vsel %vm296, %v910, 0
      %v950 = vsel %vm296, %v912, 0
      %v952 = vsel %vm296, %v915, 0
      %v954 = vsel %vm296, %v917, 0
      %v956 = vsel %vm296, %v920, 0
      %v958 = vsel %vm296, %v922, 0
      %v960 = vsel %vm296, %v925, 0
      %v962 = vsel %vm296, %v927, 0
      %v964 = vsel %vm296, %v930, 0
      %v966 = vsel %vm296, %v932, 0
      %v968 = vsel %vm296, %v935, 0
      %v970 = vsel %vm296, %v937, 0
      %v973 = vsel %vm329, %v939, 0
      %975 = vmatprep.subr.mxu0 0.0
      %976 = vmatpush1.msra.mxu0 %v973
      %977 = vmatprep.subr.mxu0 0.0
      %978 = vmatpush1.msra.mxu0 0.0
      %979 = vmatprep.subr.mxu0 0.0
      %980 = vmatpush1.msra.mxu0 0.0
      %981 = vmatprep.subr.mxu0 0.0
      %982 = vmatpush1.msra.mxu0 0.0
      %983 = vmatprep.subr.mxu0 0.0
      %984 = vmatpush1.msra.mxu0 0.0
      %985 = vmatprep.subr.mxu0 0.0
      %986 = vmatpush1.msra.mxu0 0.0
      %987 = vmatprep.subr.mxu0 0.0
      %988 = vmatpush1.msra.mxu0 0.0
      %989 = vmatprep.subr.mxu0 0.0
      %990 = vmatpush1.msra.mxu0 0.0
      %991 = vmatprep.subr.mxu0 0.0
      %992 = vmatpush1.msra.mxu0 0.0
      %993 = vmatprep.subr.mxu0 0.0
      %994 = vmatpush1.msra.mxu0 0.0
      %995 = vmatprep.subr.mxu0 0.0
      %996 = vmatpush1.msra.mxu0 0.0
      %997 = vmatprep.subr.mxu0 0.0
      %998 = vmatpush1.msra.mxu0 0.0
      %999 = vmatprep.subr.mxu0 0.0
      %1000 = vmatpush1.msra.mxu0 0.0
      %1001 = vmatprep.subr.mxu0 0.0
      %1002 = vmatpush1.msra.mxu0 0.0
      %1003 = vmatprep.subr.mxu0 0.0
      %1004 = vmatpush1.msra.mxu0 0.0
      %1005 = vmatprep.subr.mxu0 0.0
      %1006 = vmatpush1.msra.mxu0 0.0
      %1007 = vmatprep.subr.mxu0 0.0
      %1008 = vmatpush1.msra.mxu0 0.0
      %1009 = vmatprep.subr.mxu0 0.0
      %1010 = vmatpush1.msra.mxu0 0.0
      %1011 = vmatprep.subr.mxu0 0.0
      %1012 = vmatpush1.msra.mxu0 0.0
      %1013 = vmatprep.subr.mxu0 0.0
      %1014 = vmatpush1.msra.mxu0 0.0
      %1015 = vmatprep.subr.mxu0 0.0
      %1016 = vmatpush1.msra.mxu0 0.0
      %1017 = vmatprep.subr.mxu0 0.0
      %1018 = vmatpush1.msra.mxu0 0.0
      %1019 = vmatprep.subr.mxu0 0.0
      %1020 = vmatpush1.msra.mxu0 0.0
      %1021 = vmatprep.subr.mxu0 0.0
      %1022 = vmatpush1.msra.mxu0 0.0
      %1023 = vmatprep.subr.mxu0 0.0
      %1024 = vmatpush1.msra.mxu0 0.0
      %1025 = vmatprep.subr.mxu0 0.0
      %1026 = vmatpush1.msra.mxu0 0.0
      %1027 = vmatprep.subr.mxu0 0.0
      %1028 = vmatpush1.msra.mxu0 0.0
      %1029 = vmatprep.subr.mxu0 0.0
      %1030 = vmatpush1.msra.mxu0 0.0
      %1031 = vmatprep.subr.mxu0 0.0
      %1032 = vmatpush1.msra.mxu0 0.0
      %1033 = vmatprep.subr.mxu0 0.0
      %1034 = vmatpush1.msra.mxu0 0.0
      %1035 = vmatprep.subr.mxu0 0.0
      %1036 = vmatpush1.msra.mxu0 0.0
      %1037 = vmatprep.subr.mxu0 0.0
      %1038 = vmatpush1.msra.mxu0 0.0
      %1039 = vmatprep.mubr.f32.mxu0 0.0
      %1040 = vmatmul.mubr.f32.gmra.mrb[0].mxu0 %v940
      %v1041 = vpop.f32.mrb[0].mxu0
      %v1042 = vadd.f32 0.0, %v1041
      %v1043 = vpop.f32.mrb[0].mxu0
      %1044 = vmatprep.mubr.f32.mxu0 0.0
      %1045 = vmatmul.mubr.f32.gmra.mrb[0].mxu0 %v942
      %v1046 = vpop.f32.mrb[0].mxu0
      %v1047 = vadd.f32 0.0, %v1046
      %v1048 = vpop.f32.mrb[0].mxu0
      %1049 = vmatprep.mubr.f32.mxu0 0.0
      %1050 = vmatmul.mubr.f32.gmra.mrb[0].mxu0 %v944
      %v1051 = vpop.f32.mrb[0].mxu0
      %v1052 = vadd.f32 0.0, %v1051
      %v1053 = vpop.f32.mrb[0].mxu0
      %1054 = vmatprep.mubr.f32.mxu0 0.0
      %1055 = vmatmul.mubr.f32.gmra.mrb[0].mxu0 %v946
      %v1056 = vpop.f32.mrb[0].mxu0
      %v1057 = vadd.f32 0.0, %v1056
      %v1058 = vpop.f32.mrb[0].mxu0
      %1059 = vmatprep.mubr.f32.mxu0 0.0
      %1060 = vmatmul.mubr.f32.gmra.mrb[0].mxu0 %v948
      %v1061 = vpop.f32.mrb[0].mxu0
      %v1062 = vadd.f32 0.0, %v1061
      %v1063 = vpop.f32.mrb[0].mxu0
      %1064 = vmatprep.mubr.f32.mxu0 0.0
      %1065 = vmatmul.mubr.f32.gmra.mrb[0].mxu0 %v950
      %v1066 = vpop.f32.mrb[0].mxu0
      %v1067 = vadd.f32 0.0, %v1066
      %v1068 = vpop.f32.mrb[0].mxu0
      %1069 = vmatprep.mubr.f32.mxu0 0.0
      %1070 = vmatmul.mubr.f32.gmra.mrb[0].mxu0 %v952
      %v1071 = vpop.f32.mrb[0].mxu0
      %v1072 = vadd.f32 0.0, %v1071
      %v1073 = vpop.f32.mrb[0].mxu0
      %1074 = vmatprep.mubr.f32.mxu0 0.0
      %1075 = vmatmul.mubr.f32.gmra.mrb[0].mxu0 %v954
      %v1076 = vpop.f32.mrb[0].mxu0
      %v1077 = vadd.f32 0.0, %v1076
      %v1078 = vpop.f32.mrb[0].mxu0
      %1079 = vmatprep.mubr.f32.mxu0 0.0
      %1080 = vmatmul.mubr.f32.gmra.mrb[0].mxu0 %v956
      %v1081 = vpop.f32.mrb[0].mxu0
      %v1082 = vadd.f32 0.0, %v1081
      %v1083 = vpop.f32.mrb[0].mxu0
      %1084 = vmatprep.mubr.f32.mxu0 0.0
      %1085 = vmatmul.mubr.f32.gmra.mrb[0].mxu0 %v958
      %v1086 = vpop.f32.mrb[0].mxu0
      %v1087 = vadd.f32 0.0, %v1086
      %v1088 = vpop.f32.mrb[0].mxu0
      %1089 = vmatprep.mubr.f32.mxu0 0.0
      %1090 = vmatmul.mubr.f32.gmra.mrb[0].mxu0 %v960
      %v1091 = vpop.f32.mrb[0].mxu0
      %v1092 = vadd.f32 0.0, %v1091
      %v1093 = vpop.f32.mrb[0].mxu0
      %1094 = vmatprep.mubr.f32.mxu0 0.0
      %1095 = vmatmul.mubr.f32.gmra.mrb[0].mxu0 %v962
      %v1096 = vpop.f32.mrb[0].mxu0
      %v1097 = vadd.f32 0.0, %v1096
      %v1098 = vpop.f32.mrb[0].mxu0
      %1099 = vmatprep.mubr.f32.mxu0 0.0
      %1100 = vmatmul.mubr.f32.gmra.mrb[0].mxu0 %v964
      %v1101 = vpop.f32.mrb[0].mxu0
      %v1102 = vadd.f32 0.0, %v1101
      %v1103 = vpop.f32.mrb[0].mxu0
      %1104 = vmatprep.mubr.f32.mxu0 0.0
      %1105 = vmatmul.mubr.f32.gmra.mrb[0].mxu0 %v966
      %v1106 = vpop.f32.mrb[0].mxu0
      %v1107 = vadd.f32 0.0, %v1106
      %v1108 = vpop.f32.mrb[0].mxu0
      %1109 = vmatprep.mubr.f32.mxu0 0.0
      %1110 = vmatmul.mubr.f32.gmra.mrb[0].mxu0 %v968
      %v1111 = vpop.f32.mrb[0].mxu0
      %v1112 = vadd.f32 0.0, %v1111
      %v1113 = vpop.f32.mrb[0].mxu0
      %1114 = vmatprep.mubr.f32.mxu0 0.0
      %1115 = vmatmul.mubr.f32.gmra.mrb[0].mxu0 %v970
      %v1116 = vpop.f32.mrb[0].mxu0
      %v1117 = vadd.f32 0.0, %v1116
      %v1118 = vpop.f32.mrb[0].mxu0
      %1119 = vdwg.mxu0
      %v1120 = vadd.f32 %v881, %v1042
      %v1121 = vadd.f32 %v882, %v1047
      %v1122 = vadd.f32 %v883, %v1052
      %v1123 = vadd.f32 %v884, %v1057
      %v1124 = vadd.f32 %v885, %v1062
      %v1125 = vadd.f32 %v886, %v1067
      %v1126 = vadd.f32 %v887, %v1072
      %v1127 = vadd.f32 %v888, %v1077
      %v1128 = vadd.f32 %v889, %v1082
      %v1129 = vadd.f32 %v890, %v1087
      %v1130 = vadd.f32 %v891, %v1092
      %v1131 = vadd.f32 %v892, %v1097
      %v1132 = vadd.f32 %v893, %v1102
      %v1133 = vadd.f32 %v894, %v1107
      %v1134 = vadd.f32 %v895, %v1112
      %v1135 = vadd.f32 %v896, %v1117
      %v1136 = vrot.slane %v204, 4
      %v1137 = vrot.slane %v205, 4
      %v1138 = vsel %vm329, %v1136, %v1137
      %v1139 = vrot.slane %v206, 4
      %v1140 = vsel %vm329, %v1137, %v1139
      %v1141 = vrot.slane %v207, 4
      %v1142 = vrot.slane %v208, 4
      %v1143 = vsel %vm329, %v1141, %v1142
      %v1144 = vrot.slane %v209, 4
      %v1145 = vsel %vm329, %v1142, %v1144
      %v1146 = vrot.slane %v210, 4
      %v1147 = vrot.slane %v211, 4
      %v1148 = vsel %vm329, %v1146, %v1147
      %v1149 = vrot.slane %v212, 4
      %v1150 = vsel %vm329, %v1147, %v1149
      %v1151 = vrot.slane %v213, 4
      %v1152 = vrot.slane %v214, 4
      %v1153 = vsel %vm329, %v1151, %v1152
      %v1154 = vrot.slane %v215, 4
      %v1155 = vsel %vm329, %v1152, %v1154
      %v1156 = vrot.slane %v216, 4
      %v1157 = vrot.slane %v217, 4
      %v1158 = vsel %vm329, %v1156, %v1157
      %v1159 = vrot.slane %v218, 4
      %v1160 = vsel %vm329, %v1157, %v1159
      %v1161 = vrot.slane %v219, 4
      %v1162 = vrot.slane %v220, 4
      %v1163 = vsel %vm329, %v1161, %v1162
      %v1164 = vrot.slane %v221, 4
      %v1165 = vsel %vm329, %v1162, %v1164
      %v1166 = vrot.slane %v222, 4
      %v1167 = vrot.slane %v223, 4
      %v1168 = vsel %vm329, %v1166, %v1167
      %v1169 = vrot.slane %v224, 4
      %v1170 = vsel %vm329, %v1167, %v1169
      %v1171 = vrot.slane %v225, 4
      %v1172 = vrot.slane %v226, 4
      %v1173 = vsel %vm329, %v1171, %v1172
      %v1174 = vrot.slane %v227, 4
      %v1175 = vsel %vm329, %v1172, %v1174
      %s1176 = scalar_lea.vmem %s1, 16
      %v1177 = vld [vmem:[%s1176] sm:$0xf]
      %v1178 = vsel %vm296, %v1138, 0
      %v1180 = vsel %vm296, %v1140, 0
      %v1182 = vsel %vm296, %v1143, 0
      %v1184 = vsel %vm296, %v1145, 0
      %v1186 = vsel %vm296, %v1148, 0
      %v1188 = vsel %vm296, %v1150, 0
      %v1190 = vsel %vm296, %v1153, 0
      %v1192 = vsel %vm296, %v1155, 0
      %v1194 = vsel %vm296, %v1158, 0
      %v1196 = vsel %vm296, %v1160, 0
      %v1198 = vsel %vm296, %v1163, 0
      %v1200 = vsel %vm296, %v1165, 0
      %v1202 = vsel %vm296, %v1168, 0
      %v1204 = vsel %vm296, %v1170, 0
      %v1206 = vsel %vm296, %v1173, 0
      %v1208 = vsel %vm296, %v1175, 0
      %v1211 = vsel %vm329, %v1177, 0
      %1213 = vmatprep.subr.mxu0 0.0
      %1214 = vmatpush1.msra.mxu0 %v1211
      %1215 = vmatprep.subr.mxu0 0.0
      %1216 = vmatpush1.msra.mxu0 0.0
      %1217 = vmatprep.subr.mxu0 0.0
      %1218 = vmatpush1.msra.mxu0 0.0
      %1219 = vmatprep.subr.mxu0 0.0
      %1220 = vmatpush1.msra.mxu0 0.0
      %1221 = vmatprep.subr.mxu0 0.0
      %1222 = vmatpush1.msra.mxu0 0.0
      %1223 = vmatprep.subr.mxu0 0.0
      %1224 = vmatpush1.msra.mxu0 0.0
      %1225 = vmatprep.subr.mxu0 0.0
      %1226 = vmatpush1.msra.mxu0 0.0
      %1227 = vmatprep.subr.mxu0 0.0
      %1228 = vmatpush1.msra.mxu0 0.0
      %1229 = vmatprep.subr.mxu0 0.0
      %1230 = vmatpush1.msra.mxu0 0.0
      %1231 = vmatprep.subr.mxu0 0.0
      %1232 = vmatpush1.msra.mxu0 0.0
      %1233 = vmatprep.subr.mxu0 0.0
      %1234 = vmatpush1.msra.mxu0 0.0
      %1235 = vmatprep.subr.mxu0 0.0
      %1236 = vmatpush1.msra.mxu0 0.0
      %1237 = vmatprep.subr.mxu0 0.0
      %1238 = vmatpush1.msra.mxu0 0.0
      %1239 = vmatprep.subr.mxu0 0.0
      %1240 = vmatpush1.msra.mxu0 0.0
      %1241 = vmatprep.subr.mxu0 0.0
      %1242 = vmatpush1.msra.mxu0 0.0
      %1243 = vmatprep.subr.mxu0 0.0
      %1244 = vmatpush1.msra.mxu0 0.0
      %1245 = vmatprep.subr.mxu0 0.0
      %1246 = vmatpush1.msra.mxu0 0.0
      %1247 = vmatprep.subr.mxu0 0.0
      %1248 = vmatpush1.msra.mxu0 0.0
      %1249 = vmatprep.subr.mxu0 0.0
      %1250 = vmatpush1.msra.mxu0 0.0
      %1251 = vmatprep.subr.mxu0 0.0
      %1252 = vmatpush1.msra.mxu0 0.0
      %1253 = vmatprep.subr.mxu0 0.0
      %1254 = vmatpush1.msra.mxu0 0.0
      %1255 = vmatprep.subr.mxu0 0.0
      %1256 = vmatpush1.msra.mxu0 0.0
      %1257 = vmatprep.subr.mxu0 0.0
      %1258 = vmatpush1.msra.mxu0 0.0
      %1259 = vmatprep.subr.mxu0 0.0
      %1260 = vmatpush1.msra.mxu0 0.0
      %1261 = vmatprep.subr.mxu0 0.0
      %1262 = vmatpush1.msra.mxu0 0.0
      %1263 = vmatprep.subr.mxu0 0.0
      %1264 = vmatpush1.msra.mxu0 0.0
      %1265 = vmatprep.subr.mxu0 0.0
      %1266 = vmatpush1.msra.mxu0 0.0
      %1267 = vmatprep.subr.mxu0 0.0
      %1268 = vmatpush1.msra.mxu0 0.0
      %1269 = vmatprep.subr.mxu0 0.0
      %1270 = vmatpush1.msra.mxu0 0.0
      %1271 = vmatprep.subr.mxu0 0.0
      %1272 = vmatpush1.msra.mxu0 0.0
      %1273 = vmatprep.subr.mxu0 0.0
      %1274 = vmatpush1.msra.mxu0 0.0
      %1275 = vmatprep.subr.mxu0 0.0
      %1276 = vmatpush1.msra.mxu0 0.0
      %1277 = vmatprep.mubr.f32.mxu0 0.0
      %1278 = vmatmul.mubr.f32.gmra.mrb[0].mxu0 %v1178
      %v1279 = vpop.f32.mrb[0].mxu0
      %v1280 = vadd.f32 0.0, %v1279
      %v1281 = vpop.f32.mrb[0].mxu0
      %1282 = vmatprep.mubr.f32.mxu0 0.0
      %1283 = vmatmul.mubr.f32.gmra.mrb[0].mxu0 %v1180
      %v1284 = vpop.f32.mrb[0].mxu0
      %v1285 = vadd.f32 0.0, %v1284
      %v1286 = vpop.f32.mrb[0].mxu0
      %1287 = vmatprep.mubr.f32.mxu0 0.0
      %1288 = vmatmul.mubr.f32.gmra.mrb[0].mxu0 %v1182
      %v1289 = vpop.f32.mrb[0].mxu0
      %v1290 = vadd.f32 0.0, %v1289
      %v1291 = vpop.f32.mrb[0].mxu0
      %1292 = vmatprep.mubr.f32.mxu0 0.0
      %1293 = vmatmul.mubr.f32.gmra.mrb[0].mxu0 %v1184
      %v1294 = vpop.f32.mrb[0].mxu0
      %v1295 = vadd.f32 0.0, %v1294
      %v1296 = vpop.f32.mrb[0].mxu0
      %1297 = vmatprep.mubr.f32.mxu0 0.0
      %1298 = vmatmul.mubr.f32.gmra.mrb[0].mxu0 %v1186
      %v1299 = vpop.f32.mrb[0].mxu0
      %v1300 = vadd.f32 0.0, %v1299
      %v1301 = vpop.f32.mrb[0].mxu0
      %1302 = vmatprep.mubr.f32.mxu0 0.0
      %1303 = vmatmul.mubr.f32.gmra.mrb[0].mxu0 %v1188
      %v1304 = vpop.f32.mrb[0].mxu0
      %v1305 = vadd.f32 0.0, %v1304
      %v1306 = vpop.f32.mrb[0].mxu0
      %1307 = vmatprep.mubr.f32.mxu0 0.0
      %1308 = vmatmul.mubr.f32.gmra.mrb[0].mxu0 %v1190
      %v1309 = vpop.f32.mrb[0].mxu0
      %v1310 = vadd.f32 0.0, %v1309
      %v1311 = vpop.f32.mrb[0].mxu0
      %1312 = vmatprep.mubr.f32.mxu0 0.0
      %1313 = vmatmul.mubr.f32.gmra.mrb[0].mxu0 %v1192
      %v1314 = vpop.f32.mrb[0].mxu0
      %v1315 = vadd.f32 0.0, %v1314
      %v1316 = vpop.f32.mrb[0].mxu0
      %1317 = vmatprep.mubr.f32.mxu0 0.0
      %1318 = vmatmul.mubr.f32.gmra.mrb[0].mxu0 %v1194
      %v1319 = vpop.f32.mrb[0].mxu0
      %v1320 = vadd.f32 0.0, %v1319
      %v1321 = vpop.f32.mrb[0].mxu0
      %1322 = vmatprep.mubr.f32.mxu0 0.0
      %1323 = vmatmul.mubr.f32.gmra.mrb[0].mxu0 %v1196
      %v1324 = vpop.f32.mrb[0].mxu0
      %v1325 = vadd.f32 0.0, %v1324
      %v1326 = vpop.f32.mrb[0].mxu0
      %1327 = vmatprep.mubr.f32.mxu0 0.0
      %1328 = vmatmul.mubr.f32.gmra.mrb[0].mxu0 %v1198
      %v1329 = vpop.f32.mrb[0].mxu0
      %v1330 = vadd.f32 0.0, %v1329
      %v1331 = vpop.f32.mrb[0].mxu0
      %1332 = vmatprep.mubr.f32.mxu0 0.0
      %1333 = vmatmul.mubr.f32.gmra.mrb[0].mxu0 %v1200
      %v1334 = vpop.f32.mrb[0].mxu0
      %v1335 = vadd.f32 0.0, %v1334
      %v1336 = vpop.f32.mrb[0].mxu0
      %1337 = vmatprep.mubr.f32.mxu0 0.0
      %1338 = vmatmul.mubr.f32.gmra.mrb[0].mxu0 %v1202
      %v1339 = vpop.f32.mrb[0].mxu0
      %v1340 = vadd.f32 0.0, %v1339
      %v1341 = vpop.f32.mrb[0].mxu0
      %1342 = vmatprep.mubr.f32.mxu0 0.0
      %1343 = vmatmul.mubr.f32.gmra.mrb[0].mxu0 %v1204
      %v1344 = vpop.f32.mrb[0].mxu0
      %v1345 = vadd.f32 0.0, %v1344
      %v1346 = vpop.f32.mrb[0].mxu0
      %1347 = vmatprep.mubr.f32.mxu0 0.0
      %1348 = vmatmul.mubr.f32.gmra.mrb[0].mxu0 %v1206
      %v1349 = vpop.f32.mrb[0].mxu0
      %v1350 = vadd.f32 0.0, %v1349
      %v1351 = vpop.f32.mrb[0].mxu0
      %1352 = vmatprep.mubr.f32.mxu0 0.0
      %1353 = vmatmul.mubr.f32.gmra.mrb[0].mxu0 %v1208
      %v1354 = vpop.f32.mrb[0].mxu0
      %v1355 = vadd.f32 0.0, %v1354
      %v1356 = vpop.f32.mrb[0].mxu0
      %1357 = vdwg.mxu0
      %v1358 = vadd.f32 %v1120, %v1280
      %v1359 = vadd.f32 %v1121, %v1285
      %v1360 = vadd.f32 %v1122, %v1290
      %v1361 = vadd.f32 %v1123, %v1295
      %v1362 = vadd.f32 %v1124, %v1300
      %v1363 = vadd.f32 %v1125, %v1305
      %v1364 = vadd.f32 %v1126, %v1310
      %v1365 = vadd.f32 %v1127, %v1315
      %v1366 = vadd.f32 %v1128, %v1320
      %v1367 = vadd.f32 %v1129, %v1325
      %v1368 = vadd.f32 %v1130, %v1330
      %v1369 = vadd.f32 %v1131, %v1335
      %v1370 = vadd.f32 %v1132, %v1340
      %v1371 = vadd.f32 %v1133, %v1345
      %v1372 = vadd.f32 %v1134, %v1350
      %v1373 = vadd.f32 %v1135, %v1355
      %vm1374 = vcmp.gt.f32.partialorder %v1358, 0.0
      %vm1375 = vcmp.gt.f32.partialorder %v1359, 0.0
      %vm1376 = vcmp.gt.f32.partialorder %v1360, 0.0
      %vm1377 = vcmp.gt.f32.partialorder %v1361, 0.0
      %vm1378 = vcmp.gt.f32.partialorder %v1362, 0.0
      %vm1379 = vcmp.gt.f32.partialorder %v1363, 0.0
      %vm1380 = vcmp.gt.f32.partialorder %v1364, 0.0
      %vm1381 = vcmp.gt.f32.partialorder %v1365, 0.0
      %vm1382 = vcmp.gt.f32.partialorder %v1366, 0.0
      %vm1383 = vcmp.gt.f32.partialorder %v1367, 0.0
      %vm1384 = vcmp.gt.f32.partialorder %v1368, 0.0
      %vm1385 = vcmp.gt.f32.partialorder %v1369, 0.0
      %vm1386 = vcmp.gt.f32.partialorder %v1370, 0.0
      %vm1387 = vcmp.gt.f32.partialorder %v1371, 0.0
      %vm1388 = vcmp.gt.f32.partialorder %v1372, 0.0
      %vm1389 = vcmp.gt.f32.partialorder %v1373, 0.0
      %v1390 = vmin.f32 %v1358, 0.0
      %v1391 = vmin.f32 %v1359, 0.0
      %v1392 = vmin.f32 %v1360, 0.0
      %v1393 = vmin.f32 %v1361, 0.0
      %v1394 = vmin.f32 %v1362, 0.0
      %v1395 = vmin.f32 %v1363, 0.0
      %v1396 = vmin.f32 %v1364, 0.0
      %v1397 = vmin.f32 %v1365, 0.0
      %v1398 = vmin.f32 %v1366, 0.0
      %v1399 = vmin.f32 %v1367, 0.0
      %v1400 = vmin.f32 %v1368, 0.0
      %v1401 = vmin.f32 %v1369, 0.0
      %v1402 = vmin.f32 %v1370, 0.0
      %v1403 = vmin.f32 %v1371, 0.0
      %v1404 = vmin.f32 %v1372, 0.0
      %v1405 = vmin.f32 %v1373, 0.0
      %v1406 = vmul.f32 %v1390, 1.442695
      %v1407 = vpow.pop %v1406
      %v1408 = vmul.f32 %v1391, 1.442695
      %v1409 = vpow.pop %v1408
      %v1410 = vmul.f32 %v1392, 1.442695
      %v1411 = vpow.pop %v1410
      %v1412 = vmul.f32 %v1393, 1.442695
      %v1413 = vpow.pop %v1412
      %v1414 = vmul.f32 %v1394, 1.442695
      %v1415 = vpow.pop %v1414
      %v1416 = vmul.f32 %v1395, 1.442695
      %v1417 = vpow.pop %v1416
      %v1418 = vmul.f32 %v1396, 1.442695
      %v1419 = vpow.pop %v1418
      %v1420 = vmul.f32 %v1397, 1.442695
      %v1421 = vpow.pop %v1420
      %v1422 = vmul.f32 %v1398, 1.442695
      %v1423 = vpow.pop %v1422
      %v1424 = vmul.f32 %v1399, 1.442695
      %v1425 = vpow.pop %v1424
      %v1426 = vmul.f32 %v1400, 1.442695
      %v1427 = vpow.pop %v1426
      %v1428 = vmul.f32 %v1401, 1.442695
      %v1429 = vpow.pop %v1428
      %v1430 = vmul.f32 %v1402, 1.442695
      %v1431 = vpow.pop %v1430
      %v1432 = vmul.f32 %v1403, 1.442695
      %v1433 = vpow.pop %v1432
      %v1434 = vmul.f32 %v1404, 1.442695
      %v1435 = vpow.pop %v1434
      %v1436 = vmul.f32 %v1405, 1.442695
      %v1437 = vpow.pop %v1436
      %v1438 = vsub.f32 %v1407, 1.0
      %v1439 = vsub.f32 %v1409, 1.0
      %v1440 = vsub.f32 %v1411, 1.0
      %v1441 = vsub.f32 %v1413, 1.0
      %v1442 = vsub.f32 %v1415, 1.0
      %v1443 = vsub.f32 %v1417, 1.0
      %v1444 = vsub.f32 %v1419, 1.0
      %v1445 = vsub.f32 %v1421, 1.0
      %v1446 = vsub.f32 %v1423, 1.0
      %v1447 = vsub.f32 %v1425, 1.0
      %v1448 = vsub.f32 %v1427, 1.0
      %v1449 = vsub.f32 %v1429, 1.0
      %v1450 = vsub.f32 %v1431, 1.0
      %v1451 = vsub.f32 %v1433, 1.0
      %v1452 = vsub.f32 %v1435, 1.0
      %v1453 = vsub.f32 %v1437, 1.0
      %v1454 = vsel %vm1374, %v1358, %v1438
      %v1455 = vsel %vm1375, %v1359, %v1439
      %v1456 = vsel %vm1376, %v1360, %v1440
      %v1457 = vsel %vm1377, %v1361, %v1441
      %v1458 = vsel %vm1378, %v1362, %v1442
      %v1459 = vsel %vm1379, %v1363, %v1443
      %v1460 = vsel %vm1380, %v1364, %v1444
      %v1461 = vsel %vm1381, %v1365, %v1445
      %v1462 = vsel %vm1382, %v1366, %v1446
      %v1463 = vsel %vm1383, %v1367, %v1447
      %v1464 = vsel %vm1384, %v1368, %v1448
      %v1465 = vsel %vm1385, %v1369, %v1449
      %v1466 = vsel %vm1386, %v1370, %v1450
      %v1467 = vsel %vm1387, %v1371, %v1451
      %v1468 = vsel %vm1388, %v1372, %v1452
      %v1469 = vsel %vm1389, %v1373, %v1453
      %v1470 = vld [vmem:[%s2] sm:$0x1]
      %v1472 = vlaneseq
      %v1473 = vshrl.u32 %v1472, 7
      %v1474 = vsub.s32 0, %v1473
      %v1475 = vrot.slane %v1470, %v1474
      %v1477 = vmul.f32 %v1454, %v1475
      %v1478 = vmul.f32 %v1455, %v1475
      %v1479 = vmul.f32 %v1456, %v1475
      %v1480 = vmul.f32 %v1457, %v1475
      %v1481 = vmul.f32 %v1458, %v1475
      %v1482 = vmul.f32 %v1459, %v1475
      %v1483 = vmul.f32 %v1460, %v1475
      %v1484 = vmul.f32 %v1461, %v1475
      %v1485 = vmul.f32 %v1462, %v1475
      %v1486 = vmul.f32 %v1463, %v1475
      %v1487 = vmul.f32 %v1464, %v1475
      %v1488 = vmul.f32 %v1465, %v1475
      %v1489 = vmul.f32 %v1466, %v1475
      %v1490 = vmul.f32 %v1467, %v1475
      %v1491 = vmul.f32 %v1468, %v1475
      %v1492 = vmul.f32 %v1469, %v1475
      %v1493 = vld [vmem:[%s3] sm:$0x1]
      %v1495 = vlaneseq
      %v1496 = vshrl.u32 %v1495, 7
      %v1497 = vsub.s32 0, %v1496
      %v1498 = vrot.slane %v1493, %v1497
      %v1500 = vadd.f32 %v1477, %v1498
      %v1501 = vadd.f32 %v1478, %v1498
      %v1502 = vadd.f32 %v1479, %v1498
      %v1503 = vadd.f32 %v1480, %v1498
      %v1504 = vadd.f32 %v1481, %v1498
      %v1505 = vadd.f32 %v1482, %v1498
      %v1506 = vadd.f32 %v1483, %v1498
      %v1507 = vadd.f32 %v1484, %v1498
      %v1508 = vadd.f32 %v1485, %v1498
      %v1509 = vadd.f32 %v1486, %v1498
      %v1510 = vadd.f32 %v1487, %v1498
      %v1511 = vadd.f32 %v1488, %v1498
      %v1512 = vadd.f32 %v1489, %v1498
      %v1513 = vadd.f32 %v1490, %v1498
      %v1514 = vadd.f32 %v1491, %v1498
      %v1515 = vadd.f32 %v1492, %v1498
      %1516 = vst [vmem:[%s202] sm:$0xff] %v1500
      %1517 = vst [vmem:[%s202 + $0x8] sm:$0xff] %v1501
      %1518 = vst [vmem:[%s202 + $0x10] sm:$0xff] %v1502
      %1519 = vst [vmem:[%s202 + $0x18] sm:$0xff] %v1503
      %1520 = vst [vmem:[%s202 + $0x20] sm:$0xff] %v1504
      %1521 = vst [vmem:[%s202 + $0x28] sm:$0xff] %v1505
      %1522 = vst [vmem:[%s202 + $0x30] sm:$0xff] %v1506
      %1523 = vst [vmem:[%s202 + $0x38] sm:$0xff] %v1507
      %1524 = vst [vmem:[%s202 + $0x40] sm:$0xff] %v1508
      %1525 = vst [vmem:[%s202 + $0x48] sm:$0xff] %v1509
      %1526 = vst [vmem:[%s202 + $0x50] sm:$0xff] %v1510
      %1527 = vst [vmem:[%s202 + $0x58] sm:$0xff] %v1511
      %1528 = vst [vmem:[%s202 + $0x60] sm:$0xff] %v1512
      %1529 = vst [vmem:[%s202 + $0x68] sm:$0xff] %v1513
      %1530 = vst [vmem:[%s202 + $0x70] sm:$0xff] %v1514
      %1531 = vst [vmem:[%s202 + $0x78] sm:$0xff] %v1515
      %s1532 = smul.u32 16, %s15
      %p1533 = scmp.lt.s32.totalorder %s1532, 63
      %s1534 = scalar_select %p1533, %s1532, 63
      %s1535 = smul.addr %s1534, 8
      %s1536 = scalar_lea.vmem %s4, %s1535
      // Predicated region
      $region37: #{basic_block_forward.3} parent=35 // pred_check
        %p1537 = pneg %p122
      $region38: #{basic_block_forward.3} parent=35 // pred_check_branch
        %1539 = sbr.rel (%p1537) target = $region40
      $region39: #{basic_block_forward.3} parent=35 // pred_region
        %s1540 = smul.u32 16, %s15
      $region40: #{basic_block_forward.3} parent=35 // pred_fallthru
        _
    $region36: #{basic_block_forward.3} parent=5 // pred_fallthru
      _
    %p1541 = scmp.le.s32.totalorder 2, %s10
    // Predicated region
    $region41: #{basic_block_forward.3} parent=5 // pred_check
      %p1542 = pneg %p1541
    $region42: #{basic_block_forward.3} parent=5 // pred_check_branch
      %1544 = sbr.rel (%p1542) target = $region44
    $region43: #{basic_block_forward.3} parent=5 // pred_region
      %s1545 = ssub.s32 %s10, 2
      // Predicated region
      $region45: #{basic_block_forward.3} parent=43 // pred_check
        %p1546 = pneg %p128
      $region46: #{basic_block_forward.3} parent=43 // pred_check_branch
        %1548 = sbr.rel (%p1546) target = $region48
      $region47: #{basic_block_forward.3} parent=43 // pred_region
        %s1549 = smul.u32 16, %s16
        %p1550 = scmp.lt.s32.totalorder %s1549, 63
        %s1551 = scalar_select %p1550, %s1549, 63
        %s1552 = smul.addr %s1551, 8
        %s1553 = scalar_lea.vmem %s4, %s1552
      $region48: #{basic_block_forward.3} parent=43 // pred_fallthru
        _
    $region44: #{basic_block_forward.3} parent=5 // pred_fallthru
      _
  $region6: #{basic_block_forward.3} parent=0 // loop_footer
    %s14 = sadd.s32 1, %s10
  $region7: #{basic_block_forward.3} parent=0 // loop_footer_branch
    %9 = sbr.rel target = $region3
  $region8: #{basic_block_forward.3} parent=0 // loop_exit
    _

// kernel: basic_block_forward.2
$region0: #{basic_block_forward.2}
  #allocation0 [shape = 'u32[]', space=smem, size = 0x4, offset = 0x4, fixed_abs, tag = 'smem constant byte address 0x4 - core index']
  #allocation1 [shape = 'u32[144,128]{1,0:T(1,128)}', space=vmem, size = 0x12000, scoped, tag = 'internal scratch']
  %s0 = inlined_call_operand.vmem [shape: f32[32,20,4], index: 0, kind: input, shape index: {}]
  %s1 = inlined_call_operand.vmem [shape: f32[5,4,128], index: 1, kind: input, shape index: {}]
  %s2 = inlined_call_operand.vmem [shape: f32[1,128], index: 2, kind: output, shape index: {0}]
  %s3 = inlined_call_operand.vmem [shape: f32[1,128], index: 3, kind: output, shape index: {1}]
  %4 = xla_tuple %s2, %s3
  %s5 = sld [smem:[#allocation0]]
  $region53: #{basic_block_forward.2} parent=0
    _
  %s7 = ssub.s32 1, %s5
  %s8 = scalar_select 0, %s7, %s5
  loop: start=0, step=1, limit=6
  $region2: #{basic_block_forward.2} parent=0 // loop_pre_header
    _
  $region3: #{basic_block_forward.2} parent=0 // loop_header
    %s10 = sphi 0, %s14
    %p11 = scmp.ge.s32.totalorder %s10, 6
    %s20 = sphi 0, %s22
    %s23 = sphi 0, %s20
    %s24 = sphi 0, %s23
    %s40 = sphi 0, %s24
    %s44 = sphi 0, %s44
    %s46 = sphi 0, %s44
    %s47 = sphi 0, %s46
    %s61 = sphi 0, %s47
    %s65 = sphi 0, %s65
    %s67 = sphi 0, %s65
    %s68 = sphi 0, %s67
    %s82 = sphi 0, %s68
    %s86 = sphi 0, %s86
    %s88 = sphi 0, %s86
    %s89 = sphi 0, %s88
    %s103 = sphi 0, %s89
  $region4: #{basic_block_forward.2} parent=0 // loop_header_branch
    %13 = sbr.rel (%p11) target = $region8
  $region5: #{basic_block_forward.2} parent=0 // loop_body
    %s15 = ssub.s32 %s10, 1
    %s16 = ssub.s32 %s10, 2
    %s17 = sadd.s32 %s10, 1
    %s18 = ssub.s32 %s10, %s17
    %p19 = scmp.eq.s32.totalorder %s18, 0
    %s21 = sadd.s32 %s20, 1
    %s22 = scalar_select %p19, %s20, %s21
    %p25 = pneg %p19
    %p26 = scmp.eq.s32.totalorder %s10, 3
    %p27 = por %p25, %p26
    %p28 = scmp.ne.s32.totalorder %s20, %s23
    %p29 = scmp.eq.s32.totalorder %s10, 0
    %p30 = por %p28, %p29
    %p31 = scmp.ne.s32.totalorder %s20, %s23
    %p32 = scmp.eq.s32.totalorder %s15, 3
    %p33 = por %p31, %p32
    %p34 = scmp.ne.s32.totalorder %s23, %s24
    %p35 = scmp.eq.s32.totalorder %s15, 0
    %p36 = por %p34, %p35
    %p37 = scmp.ne.s32.totalorder %s23, %s24
    %p38 = scmp.eq.s32.totalorder %s16, 3
    %p39 = por %p37, %p38
    %p41 = scmp.ne.s32.totalorder %s24, %s40
    %p42 = scmp.eq.s32.totalorder %s16, 0
    %p43 = por %p41, %p42
    %s45 = sadd.s32 %s44, 1
    %p48 = scmp.eq.s32.totalorder %s10, 3
    %p49 = scmp.ne.s32.totalorder %s44, %s46
    %p50 = scmp.eq.s32.totalorder %s10, 0
    %p51 = por %p49, %p50
    %p52 = scmp.ne.s32.totalorder %s44, %s46
    %p53 = scmp.eq.s32.totalorder %s15, 3
    %p54 = por %p52, %p53
    %p55 = scmp.ne.s32.totalorder %s46, %s47
    %p56 = scmp.eq.s32.totalorder %s15, 0
    %p57 = por %p55, %p56
    %p58 = scmp.ne.s32.totalorder %s46, %s47
    %p59 = scmp.eq.s32.totalorder %s16, 3
    %p60 = por %p58, %p59
    %p62 = scmp.ne.s32.totalorder %s47, %s61
    %p63 = scmp.eq.s32.totalorder %s16, 0
    %p64 = por %p62, %p63
    %s66 = sadd.s32 %s65, 1
    %p69 = scmp.eq.s32.totalorder %s10, 3
    %p70 = scmp.ne.s32.totalorder %s65, %s67
    %p71 = scmp.eq.s32.totalorder %s10, 0
    %p72 = por %p70, %p71
    %p73 = scmp.ne.s32.totalorder %s65, %s67
    %p74 = scmp.eq.s32.totalorder %s15, 3
    %p75 = por %p73, %p74
    %p76 = scmp.ne.s32.totalorder %s67, %s68
    %p77 = scmp.eq.s32.totalorder %s15, 0
    %p78 = por %p76, %p77
    %p79 = scmp.ne.s32.totalorder %s67, %s68
    %p80 = scmp.eq.s32.totalorder %s16, 3
    %p81 = por %p79, %p80
    %p83 = scmp.ne.s32.totalorder %s68, %s82
    %p84 = scmp.eq.s32.totalorder %s16, 0
    %p85 = por %p83, %p84
    %s87 = sadd.s32 %s86, 1
    %p90 = scmp.eq.s32.totalorder %s10, 3
    %p91 = scmp.ne.s32.totalorder %s86, %s88
    %p92 = scmp.eq.s32.totalorder %s10, 0
    %p93 = por %p91, %p92
    %p94 = scmp.ne.s32.totalorder %s86, %s88
    %p95 = scmp.eq.s32.totalorder %s15, 3
    %p96 = por %p94, %p95
    %p97 = scmp.ne.s32.totalorder %s88, %s89
    %p98 = scmp.eq.s32.totalorder %s15, 0
    %p99 = por %p97, %p98
    %p100 = scmp.ne.s32.totalorder %s88, %s89
    %p101 = scmp.eq.s32.totalorder %s16, 3
    %p102 = por %p100, %p101
    %p104 = scmp.ne.s32.totalorder %s89, %s103
    %p105 = scmp.eq.s32.totalorder %s16, 0
    %p106 = por %p104, %p105
    %p107 = scmp.le.s32.totalorder 1, %s10
    %p108 = scmp.lt.s32.totalorder %s10, 5
    %p109 = pnand %p107, %p108
    %p110 = pneg %p109
    // Predicated region
    $region9: #{basic_block_forward.2} parent=5 // pred_check
      _
    $region10: #{basic_block_forward.2} parent=5 // pred_check_branch
      %112 = sbr.rel (%p109) target = $region12
    $region11: #{basic_block_forward.2} parent=5 // pred_region
      %s113 = ssub.s32 %s10, 1
      // Predicated region
      $region13: #{basic_block_forward.2} parent=11 // pred_check
        %p114 = pneg %p57
      $region14: #{basic_block_forward.2} parent=11 // pred_check_branch
        %116 = sbr.rel (%p114) target = $region16
      $region15: #{basic_block_forward.2} parent=11 // pred_region
        _
      $region16: #{basic_block_forward.2} parent=11 // pred_fallthru
        _
    $region12: #{basic_block_forward.2} parent=5 // pred_fallthru
      _
    %p117 = scmp.lt.s32.totalorder %s10, 4
    // Predicated region
    $region17: #{basic_block_forward.2} parent=5 // pred_check
      %p118 = pneg %p117
    $region18: #{basic_block_forward.2} parent=5 // pred_check_branch
      %120 = sbr.rel (%p118) target = $region20
    $region19: #{basic_block_forward.2} parent=5 // pred_region
      // Predicated region
      $region21: #{basic_block_forward.2} parent=19 // pred_check
        %p121 = pneg %p30
      $region22: #{basic_block_forward.2} parent=19 // pred_check_branch
        %123 = sbr.rel (%p121) target = $region24
      $region23: #{basic_block_forward.2} parent=19 // pred_region
        %s124 = smul.u32 8, %s10
        %p125 = scmp.lt.s32.totalorder %s124, 31
        %s126 = scalar_select %p125, %s124, 31
        %s127 = smul.addr %s126, 3
        %s128 = smul.addr %s127, 8
        %s129 = scalar_lea.vmem %s0, %s128
        %s130 = smul.u32 8, %s10
      $region24: #{basic_block_forward.2} parent=19 // pred_fallthru
        _
    $region20: #{basic_block_forward.2} parent=5 // pred_fallthru
      _
    %p131 = scmp.le.s32.totalorder 1, %s10
    %p132 = scmp.lt.s32.totalorder %s10, 5
    %p133 = pnand %p131, %p132
    %p134 = pneg %p133
    // Predicated region
    $region25: #{basic_block_forward.2} parent=5 // pred_check
      _
    $region26: #{basic_block_forward.2} parent=5 // pred_check_branch
      %136 = sbr.rel (%p133) target = $region28
    $region27: #{basic_block_forward.2} parent=5 // pred_region
      %s137 = ssub.s32 %s10, 1
      %s138 = smul.u32 8, %s15
      %p139 = scmp.lt.s32.totalorder %s138, 31
      %s140 = scalar_select %p139, %s138, 31
      %s141 = smul.addr %s140, 3
      %s142 = smul.addr %s141, 8
      %s143 = scalar_lea.vmem %s0, %s142
      %p144 = pneg %p36
      %p145 = pneg %p33
      %p146 = pneg %p57
      %p147 = pneg %p54
      %p148 = pneg %p78
      %p149 = pneg %p75
      %p150 = pneg %p99
      %p151 = pneg %p96
      %s152 = smul.u32 8, %s15
      %p153 = scmp.lt.s32.totalorder %s152, 31
      %s154 = scalar_select %p153, %s152, 31
      %s155 = smul.addr %s154, 3
      %s156 = smul.addr %s155, 8
      %s157 = scalar_lea.vmem %s0, %s156
      %s158 = smul.u32 8, %s15
      %p159 = scmp.eq.s32.totalorder %s15, 0
      // Predicated region
      $region29: #{basic_block_forward.2} parent=27 // pred_check
        %p160 = pneg %p159
      $region30: #{basic_block_forward.2} parent=27 // pred_check_branch
        %162 = sbr.rel (%p160) target = $region32
      $region31: #{basic_block_forward.2} parent=27 // pred_region
        %163 = vst [vmem:[%s2] sm:$0x1] 0.0
        %164 = vst [vmem:[%s3] sm:$0x1] 0.0
      $region32: #{basic_block_forward.2} parent=27 // pred_fallthru
        _
      %v165 = vld [vmem:[%s157] sm:$0xff]
      %v166 = vld [vmem:[%s157 + $0x8] sm:$0xff]
      %v167 = vld [vmem:[%s157 + $0x10] sm:$0xf]
      %v168 = vld [vmem:[%s157 + $0x18] sm:$0xff]
      %v169 = vld [vmem:[%s157 + $0x20] sm:$0xff]
      %v170 = vld [vmem:[%s157 + $0x28] sm:$0xf]
      %v171 = vld [vmem:[%s157 + $0x30] sm:$0xff]
      %v172 = vld [vmem:[%s157 + $0x38] sm:$0xff]
      %v173 = vld [vmem:[%s157 + $0x40] sm:$0xf]
      %v174 = vld [vmem:[%s157 + $0x48] sm:$0xff]
      %v175 = vld [vmem:[%s157 + $0x50] sm:$0xff]
      %v176 = vld [vmem:[%s157 + $0x58] sm:$0xf]
      %v177 = vld [vmem:[%s157 + $0x60] sm:$0xff]
      %v178 = vld [vmem:[%s157 + $0x68] sm:$0xff]
      %v179 = vld [vmem:[%s157 + $0x70] sm:$0xf]
      %v180 = vld [vmem:[%s157 + $0x78] sm:$0xff]
      %v181 = vld [vmem:[%s157 + $0x80] sm:$0xff]
      %v182 = vld [vmem:[%s157 + $0x88] sm:$0xf]
      %v183 = vld [vmem:[%s157 + $0x90] sm:$0xff]
      %v184 = vld [vmem:[%s157 + $0x98] sm:$0xff]
      %v185 = vld [vmem:[%s157 + $0xa0] sm:$0xf]
      %v186 = vld [vmem:[%s157 + $0xa8] sm:$0xff]
      %v187 = vld [vmem:[%s157 + $0xb0] sm:$0xff]
      %v188 = vld [vmem:[%s157 + $0xb8] sm:$0xf]
      %v189 = vld [vmem:[%s1] sm:$0xf]
      %vm214 = vcmask 1046528
      %v215 = vrot.slane %v165, 1
      %v216 = vrot.slane %v166, 1
      %v217 = vsel %vm214, %v215, %v216
      %v218 = vrot.slane %v167, 1
      %v219 = vsel %vm214, %v216, %v218
      %v220 = vrot.slane %v168, 1
      %v221 = vrot.slane %v169, 1
      %v222 = vsel %vm214, %v220, %v221
      %v223 = vrot.slane %v170, 1
      %v224 = vsel %vm214, %v221, %v223
      %v225 = vrot.slane %v171, 1
      %v226 = vrot.slane %v172, 1
      %v227 = vsel %vm214, %v225, %v226
      %v228 = vrot.slane %v173, 1
      %v229 = vsel %vm214, %v226, %v228
      %v230 = vrot.slane %v174, 1
      %v231 = vrot.slane %v175, 1
      %v232 = vsel %vm214, %v230, %v231
      %v233 = vrot.slane %v176, 1
      %v234 = vsel %vm214, %v231, %v233
      %v235 = vrot.slane %v177, 1
      %v236 = vrot.slane %v178, 1
      %v237 = vsel %vm214, %v235, %v236
      %v238 = vrot.slane %v179, 1
      %v239 = vsel %vm214, %v236, %v238
      %v240 = vrot.slane %v180, 1
      %v241 = vrot.slane %v181, 1
      %v242 = vsel %vm214, %v240, %v241
      %v243 = vrot.slane %v182, 1
      %v244 = vsel %vm214, %v241, %v243
      %v245 = vrot.slane %v183, 1
      %v246 = vrot.slane %v184, 1
      %v247 = vsel %vm214, %v245, %v246
      %v248 = vrot.slane %v185, 1
      %v249 = vsel %vm214, %v246, %v248
      %v250 = vrot.slane %v186, 1
      %v251 = vrot.slane %v187, 1
      %v252 = vsel %vm214, %v250, %v251
      %v253 = vrot.slane %v188, 1
      %v254 = vsel %vm214, %v251, %v253
      %s255 = scalar_lea.vmem %s1, 4
      %v256 = vld [vmem:[%s255] sm:$0xf]
      %vm257 = vcmask 31744
      %v258 = vsel %vm257, %v217, 0
      %v260 = vsel %vm257, %v219, 0
      %v262 = vsel %vm257, %v222, 0
      %v264 = vsel %vm257, %v224, 0
      %v266 = vsel %vm257, %v227, 0
      %v268 = vsel %vm257, %v229, 0
      %v270 = vsel %vm257, %v232, 0
      %v272 = vsel %vm257, %v234, 0
      %v274 = vsel %vm257, %v237, 0
      %v276 = vsel %vm257, %v239, 0
      %v278 = vsel %vm257, %v242, 0
      %v280 = vsel %vm257, %v244, 0
      %v282 = vsel %vm257, %v247, 0
      %v284 = vsel %vm257, %v249, 0
      %v286 = vsel %vm257, %v252, 0
      %v288 = vsel %vm257, %v254, 0
      %vm290 = vcmask 1043456
      %v292 = vsel %vm290, %v256, 0
      %294 = vmatprep.subr.mxu0 0.0
      %295 = vmatpush1.msra.mxu0 %v292
      %296 = vmatprep.subr.mxu0 0.0
      %297 = vmatpush1.msra.mxu0 0.0
      %298 = vmatprep.subr.mxu0 0.0
      %299 = vmatpush1.msra.mxu0 0.0
      %300 = vmatprep.subr.mxu0 0.0
      %301 = vmatpush1.msra.mxu0 0.0
      %302 = vmatprep.subr.mxu0 0.0
      %303 = vmatpush1.msra.mxu0 0.0
      %304 = vmatprep.subr.mxu0 0.0
      %305 = vmatpush1.msra.mxu0 0.0
      %306 = vmatprep.subr.mxu0 0.0
      %307 = vmatpush1.msra.mxu0 0.0
      %308 = vmatprep.subr.mxu0 0.0
      %309 = vmatpush1.msra.mxu0 0.0
      %310 = vmatprep.subr.mxu0 0.0
      %311 = vmatpush1.msra.mxu0 0.0
      %312 = vmatprep.subr.mxu0 0.0
      %313 = vmatpush1.msra.mxu0 0.0
      %314 = vmatprep.subr.mxu0 0.0
      %315 = vmatpush1.msra.mxu0 0.0
      %316 = vmatprep.subr.mxu0 0.0
      %317 = vmatpush1.msra.mxu0 0.0
      %318 = vmatprep.subr.mxu0 0.0
      %319 = vmatpush1.msra.mxu0 0.0
      %320 = vmatprep.subr.mxu0 0.0
      %321 = vmatpush1.msra.mxu0 0.0
      %322 = vmatprep.subr.mxu0 0.0
      %323 = vmatpush1.msra.mxu0 0.0
      %324 = vmatprep.subr.mxu0 0.0
      %325 = vmatpush1.msra.mxu0 0.0
      %326 = vmatprep.subr.mxu0 0.0
      %327 = vmatpush1.msra.mxu0 0.0
      %328 = vmatprep.subr.mxu0 0.0
      %329 = vmatpush1.msra.mxu0 0.0
      %330 = vmatprep.subr.mxu0 0.0
      %331 = vmatpush1.msra.mxu0 0.0
      %332 = vmatprep.subr.mxu0 0.0
      %333 = vmatpush1.msra.mxu0 0.0
      %334 = vmatprep.subr.mxu0 0.0
      %335 = vmatpush1.msra.mxu0 0.0
      %336 = vmatprep.subr.mxu0 0.0
      %337 = vmatpush1.msra.mxu0 0.0
      %338 = vmatprep.subr.mxu0 0.0
      %339 = vmatpush1.msra.mxu0 0.0
      %340 = vmatprep.subr.mxu0 0.0
      %341 = vmatpush1.msra.mxu0 0.0
      %342 = vmatprep.subr.mxu0 0.0
      %343 = vmatpush1.msra.mxu0 0.0
      %344 = vmatprep.subr.mxu0 0.0
      %345 = vmatpush1.msra.mxu0 0.0
      %346 = vmatprep.subr.mxu0 0.0
      %347 = vmatpush1.msra.mxu0 0.0
      %348 = vmatprep.subr.mxu0 0.0
      %349 = vmatpush1.msra.mxu0 0.0
      %350 = vmatprep.subr.mxu0 0.0
      %351 = vmatpush1.msra.mxu0 0.0
      %352 = vmatprep.subr.mxu0 0.0
      %353 = vmatpush1.msra.mxu0 0.0
      %354 = vmatprep.subr.mxu0 0.0
      %355 = vmatpush1.msra.mxu0 0.0
      %356 = vmatprep.subr.mxu0 0.0
      %357 = vmatpush1.msra.mxu0 0.0
      %358 = vmatprep.mubr.f32.mxu0 0.0
      %359 = vmatmul.mubr.f32.gmra.mrb[0].mxu0 %v258
      %v360 = vpop.f32.mrb[0].mxu0
      %v361 = vadd.f32 0.0, %v360
      %v362 = vpop.f32.mrb[0].mxu0
      %363 = vmatprep.mubr.f32.mxu0 0.0
      %364 = vmatmul.mubr.f32.gmra.mrb[0].mxu0 %v260
      %v365 = vpop.f32.mrb[0].mxu0
      %v366 = vadd.f32 0.0, %v365
      %v367 = vpop.f32.mrb[0].mxu0
      %368 = vmatprep.mubr.f32.mxu0 0.0
      %369 = vmatmul.mubr.f32.gmra.mrb[0].mxu0 %v262
      %v370 = vpop.f32.mrb[0].mxu0
      %v371 = vadd.f32 0.0, %v370
      %v372 = vpop.f32.mrb[0].mxu0
      %373 = vmatprep.mubr.f32.mxu0 0.0
      %374 = vmatmul.mubr.f32.gmra.mrb[0].mxu0 %v264
      %v375 = vpop.f32.mrb[0].mxu0
      %v376 = vadd.f32 0.0, %v375
      %v377 = vpop.f32.mrb[0].mxu0
      %378 = vmatprep.mubr.f32.mxu0 0.0
      %379 = vmatmul.mubr.f32.gmra.mrb[0].mxu0 %v266
      %v380 = vpop.f32.mrb[0].mxu0
      %v381 = vadd.f32 0.0, %v380
      %v382 = vpop.f32.mrb[0].mxu0
      %383 = vmatprep.mubr.f32.mxu0 0.0
      %384 = vmatmul.mubr.f32.gmra.mrb[0].mxu0 %v268
      %v385 = vpop.f32.mrb[0].mxu0
      %v386 = vadd.f32 0.0, %v385
      %v387 = vpop.f32.mrb[0].mxu0
      %388 = vmatprep.mubr.f32.mxu0 0.0
      %389 = vmatmul.mubr.f32.gmra.mrb[0].mxu0 %v270
      %v390 = vpop.f32.mrb[0].mxu0
      %v391 = vadd.f32 0.0, %v390
      %v392 = vpop.f32.mrb[0].mxu0
      %393 = vmatprep.mubr.f32.mxu0 0.0
      %394 = vmatmul.mubr.f32.gmra.mrb[0].mxu0 %v272
      %v395 = vpop.f32.mrb[0].mxu0
      %v396 = vadd.f32 0.0, %v395
      %v397 = vpop.f32.mrb[0].mxu0
      %398 = vmatprep.mubr.f32.mxu0 0.0
      %399 = vmatmul.mubr.f32.gmra.mrb[0].mxu0 %v274
      %v400 = vpop.f32.mrb[0].mxu0
      %v401 = vadd.f32 0.0, %v400
      %v402 = vpop.f32.mrb[0].mxu0
      %403 = vmatprep.mubr.f32.mxu0 0.0
      %404 = vmatmul.mubr.f32.gmra.mrb[0].mxu0 %v276
      %v405 = vpop.f32.mrb[0].mxu0
      %v406 = vadd.f32 0.0, %v405
      %v407 = vpop.f32.mrb[0].mxu0
      %408 = vmatprep.mubr.f32.mxu0 0.0
      %409 = vmatmul.mubr.f32.gmra.mrb[0].mxu0 %v278
      %v410 = vpop.f32.mrb[0].mxu0
      %v411 = vadd.f32 0.0, %v410
      %v412 = vpop.f32.mrb[0].mxu0
      %413 = vmatprep.mubr.f32.mxu0 0.0
      %414 = vmatmul.mubr.f32.gmra.mrb[0].mxu0 %v280
      %v415 = vpop.f32.mrb[0].mxu0
      %v416 = vadd.f32 0.0, %v415
      %v417 = vpop.f32.mrb[0].mxu0
      %418 = vmatprep.mubr.f32.mxu0 0.0
      %419 = vmatmul.mubr.f32.gmra.mrb[0].mxu0 %v282
      %v420 = vpop.f32.mrb[0].mxu0
      %v421 = vadd.f32 0.0, %v420
      %v422 = vpop.f32.mrb[0].mxu0
      %423 = vmatprep.mubr.f32.mxu0 0.0
      %424 = vmatmul.mubr.f32.gmra.mrb[0].mxu0 %v284
      %v425 = vpop.f32.mrb[0].mxu0
      %v426 = vadd.f32 0.0, %v425
      %v427 = vpop.f32.mrb[0].mxu0
      %428 = vmatprep.mubr.f32.mxu0 0.0
      %429 = vmatmul.mubr.f32.gmra.mrb[0].mxu0 %v286
      %v430 = vpop.f32.mrb[0].mxu0
      %v431 = vadd.f32 0.0, %v430
      %v432 = vpop.f32.mrb[0].mxu0
      %433 = vmatprep.mubr.f32.mxu0 0.0
      %434 = vmatmul.mubr.f32.gmra.mrb[0].mxu0 %v288
      %v435 = vpop.f32.mrb[0].mxu0
      %v436 = vadd.f32 0.0, %v435
      %v437 = vpop.f32.mrb[0].mxu0
      %438 = vdwg.mxu0
      %v439 = vsel %vm257, %v165, 0
      %v441 = vsel %vm257, %v166, 0
      %v443 = vsel %vm257, %v168, 0
      %v445 = vsel %vm257, %v169, 0
      %v447 = vsel %vm257, %v171, 0
      %v449 = vsel %vm257, %v172, 0
      %v451 = vsel %vm257, %v174, 0
      %v453 = vsel %vm257, %v175, 0
      %v455 = vsel %vm257, %v177, 0
      %v457 = vsel %vm257, %v178, 0
      %v459 = vsel %vm257, %v180, 0
      %v461 = vsel %vm257, %v181, 0
      %v463 = vsel %vm257, %v183, 0
      %v465 = vsel %vm257, %v184, 0
      %v467 = vsel %vm257, %v186, 0
      %v469 = vsel %vm257, %v187, 0
      %v472 = vsel %vm290, %v189, 0
      %474 = vmatprep.subr.mxu0 0.0
      %475 = vmatpush1.msra.mxu0 %v472
      %476 = vmatprep.subr.mxu0 0.0
      %477 = vmatpush1.msra.mxu0 0.0
      %478 = vmatprep.subr.mxu0 0.0
      %479 = vmatpush1.msra.mxu0 0.0
      %480 = vmatprep.subr.mxu0 0.0
      %481 = vmatpush1.msra.mxu0 0.0
      %482 = vmatprep.subr.mxu0 0.0
      %483 = vmatpush1.msra.mxu0 0.0
      %484 = vmatprep.subr.mxu0 0.0
      %485 = vmatpush1.msra.mxu0 0.0
      %486 = vmatprep.subr.mxu0 0.0
      %487 = vmatpush1.msra.mxu0 0.0
      %488 = vmatprep.subr.mxu0 0.0
      %489 = vmatpush1.msra.mxu0 0.0
      %490 = vmatprep.subr.mxu0 0.0
      %491 = vmatpush1.msra.mxu0 0.0
      %492 = vmatprep.subr.mxu0 0.0
      %493 = vmatpush1.msra.mxu0 0.0
      %494 = vmatprep.subr.mxu0 0.0
      %495 = vmatpush1.msra.mxu0 0.0
      %496 = vmatprep.subr.mxu0 0.0
      %497 = vmatpush1.msra.mxu0 0.0
      %498 = vmatprep.subr.mxu0 0.0
      %499 = vmatpush1.msra.mxu0 0.0
      %500 = vmatprep.subr.mxu0 0.0
      %501 = vmatpush1.msra.mxu0 0.0
      %502 = vmatprep.subr.mxu0 0.0
      %503 = vmatpush1.msra.mxu0 0.0
      %504 = vmatprep.subr.mxu0 0.0
      %505 = vmatpush1.msra.mxu0 0.0
      %506 = vmatprep.subr.mxu0 0.0
      %507 = vmatpush1.msra.mxu0 0.0
      %508 = vmatprep.subr.mxu0 0.0
      %509 = vmatpush1.msra.mxu0 0.0
      %510 = vmatprep.subr.mxu0 0.0
      %511 = vmatpush1.msra.mxu0 0.0
      %512 = vmatprep.subr.mxu0 0.0
      %513 = vmatpush1.msra.mxu0 0.0
      %514 = vmatprep.subr.mxu0 0.0
      %515 = vmatpush1.msra.mxu0 0.0
      %516 = vmatprep.subr.mxu0 0.0
      %517 = vmatpush1.msra.mxu0 0.0
      %518 = vmatprep.subr.mxu0 0.0
      %519 = vmatpush1.msra.mxu0 0.0
      %520 = vmatprep.subr.mxu0 0.0
      %521 = vmatpush1.msra.mxu0 0.0
      %522 = vmatprep.subr.mxu0 0.0
      %523 = vmatpush1.msra.mxu0 0.0
      %524 = vmatprep.subr.mxu0 0.0
      %525 = vmatpush1.msra.mxu0 0.0
      %526 = vmatprep.subr.mxu0 0.0
      %527 = vmatpush1.msra.mxu0 0.0
      %528 = vmatprep.subr.mxu0 0.0
      %529 = vmatpush1.msra.mxu0 0.0
      %530 = vmatprep.subr.mxu0 0.0
      %531 = vmatpush1.msra.mxu0 0.0
      %532 = vmatprep.subr.mxu0 0.0
      %533 = vmatpush1.msra.mxu0 0.0
      %534 = vmatprep.subr.mxu0 0.0
      %535 = vmatpush1.msra.mxu0 0.0
      %536 = vmatprep.subr.mxu0 0.0
      %537 = vmatpush1.msra.mxu0 0.0
      %538 = vmatprep.mubr.f32.mxu0 0.0
      %539 = vmatmul.mubr.f32.gmra.mrb[0].mxu0 %v439
      %v540 = vpop.f32.mrb[0].mxu0
      %v541 = vadd.f32 %v361, %v540
      %v542 = vpop.f32.mrb[0].mxu0
      %543 = vmatprep.mubr.f32.mxu0 0.0
      %544 = vmatmul.mubr.f32.gmra.mrb[0].mxu0 %v441
      %v545 = vpop.f32.mrb[0].mxu0
      %v546 = vadd.f32 %v366, %v545
      %v547 = vpop.f32.mrb[0].mxu0
      %548 = vmatprep.mubr.f32.mxu0 0.0
      %549 = vmatmul.mubr.f32.gmra.mrb[0].mxu0 %v443
      %v550 = vpop.f32.mrb[0].mxu0
      %v551 = vadd.f32 %v371, %v550
      %v552 = vpop.f32.mrb[0].mxu0
      %553 = vmatprep.mubr.f32.mxu0 0.0
      %554 = vmatmul.mubr.f32.gmra.mrb[0].mxu0 %v445
      %v555 = vpop.f32.mrb[0].mxu0
      %v556 = vadd.f32 %v376, %v555
      %v557 = vpop.f32.mrb[0].mxu0
      %558 = vmatprep.mubr.f32.mxu0 0.0
      %559 = vmatmul.mubr.f32.gmra.mrb[0].mxu0 %v447
      %v560 = vpop.f32.mrb[0].mxu0
      %v561 = vadd.f32 %v381, %v560
      %v562 = vpop.f32.mrb[0].mxu0
      %563 = vmatprep.mubr.f32.mxu0 0.0
      %564 = vmatmul.mubr.f32.gmra.mrb[0].mxu0 %v449
      %v565 = vpop.f32.mrb[0].mxu0
      %v566 = vadd.f32 %v386, %v565
      %v567 = vpop.f32.mrb[0].mxu0
      %568 = vmatprep.mubr.f32.mxu0 0.0
      %569 = vmatmul.mubr.f32.gmra.mrb[0].mxu0 %v451
      %v570 = vpop.f32.mrb[0].mxu0
      %v571 = vadd.f32 %v391, %v570
      %v572 = vpop.f32.mrb[0].mxu0
      %573 = vmatprep.mubr.f32.mxu0 0.0
      %574 = vmatmul.mubr.f32.gmra.mrb[0].mxu0 %v453
      %v575 = vpop.f32.mrb[0].mxu0
      %v576 = vadd.f32 %v396, %v575
      %v577 = vpop.f32.mrb[0].mxu0
      %578 = vmatprep.mubr.f32.mxu0 0.0
      %579 = vmatmul.mubr.f32.gmra.mrb[0].mxu0 %v455
      %v580 = vpop.f32.mrb[0].mxu0
      %v581 = vadd.f32 %v401, %v580
      %v582 = vpop.f32.mrb[0].mxu0
      %583 = vmatprep.mubr.f32.mxu0 0.0
      %584 = vmatmul.mubr.f32.gmra.mrb[0].mxu0 %v457
      %v585 = vpop.f32.mrb[0].mxu0
      %v586 = vadd.f32 %v406, %v585
      %v587 = vpop.f32.mrb[0].mxu0
      %588 = vmatprep.mubr.f32.mxu0 0.0
      %589 = vmatmul.mubr.f32.gmra.mrb[0].mxu0 %v459
      %v590 = vpop.f32.mrb[0].mxu0
      %v591 = vadd.f32 %v411, %v590
      %v592 = vpop.f32.mrb[0].mxu0
      %593 = vmatprep.mubr.f32.mxu0 0.0
      %594 = vmatmul.mubr.f32.gmra.mrb[0].mxu0 %v461
      %v595 = vpop.f32.mrb[0].mxu0
      %v596 = vadd.f32 %v416, %v595
      %v597 = vpop.f32.mrb[0].mxu0
      %598 = vmatprep.mubr.f32.mxu0 0.0
      %599 = vmatmul.mubr.f32.gmra.mrb[0].mxu0 %v463
      %v600 = vpop.f32.mrb[0].mxu0
      %v601 = vadd.f32 %v421, %v600
      %v602 = vpop.f32.mrb[0].mxu0
      %603 = vmatprep.mubr.f32.mxu0 0.0
      %604 = vmatmul.mubr.f32.gmra.mrb[0].mxu0 %v465
      %v605 = vpop.f32.mrb[0].mxu0
      %v606 = vadd.f32 %v426, %v605
      %v607 = vpop.f32.mrb[0].mxu0
      %608 = vmatprep.mubr.f32.mxu0 0.0
      %609 = vmatmul.mubr.f32.gmra.mrb[0].mxu0 %v467
      %v610 = vpop.f32.mrb[0].mxu0
      %v611 = vadd.f32 %v431, %v610
      %v612 = vpop.f32.mrb[0].mxu0
      %613 = vmatprep.mubr.f32.mxu0 0.0
      %614 = vmatmul.mubr.f32.gmra.mrb[0].mxu0 %v469
      %v615 = vpop.f32.mrb[0].mxu0
      %v616 = vadd.f32 %v436, %v615
      %v617 = vpop.f32.mrb[0].mxu0
      %618 = vdwg.mxu0
      %vm619 = vcmask 1045504
      %v620 = vrot.slane %v165, 2
      %v621 = vrot.slane %v166, 2
      %v622 = vsel %vm619, %v620, %v621
      %v623 = vrot.slane %v167, 2
      %v624 = vsel %vm619, %v621, %v623
      %v625 = vrot.slane %v168, 2
      %v626 = vrot.slane %v169, 2
      %v627 = vsel %vm619, %v625, %v626
      %v628 = vrot.slane %v170, 2
      %v629 = vsel %vm619, %v626, %v628
      %v630 = vrot.slane %v171, 2
      %v631 = vrot.slane %v172, 2
      %v632 = vsel %vm619, %v630, %v631
      %v633 = vrot.slane %v173, 2
      %v634 = vsel %vm619, %v631, %v633
      %v635 = vrot.slane %v174, 2
      %v636 = vrot.slane %v175, 2
      %v637 = vsel %vm619, %v635, %v636
      %v638 = vrot.slane %v176, 2
      %v639 = vsel %vm619, %v636, %v638
      %v640 = vrot.slane %v177, 2
      %v641 = vrot.slane %v178, 2
      %v642 = vsel %vm619, %v640, %v641
      %v643 = vrot.slane %v179, 2
      %v644 = vsel %vm619, %v641, %v643
      %v645 = vrot.slane %v180, 2
      %v646 = vrot.slane %v181, 2
      %v647 = vsel %vm619, %v645, %v646
      %v648 = vrot.slane %v182, 2
      %v649 = vsel %vm619, %v646, %v648
      %v650 = vrot.slane %v183, 2
      %v651 = vrot.slane %v184, 2
      %v652 = vsel %vm619, %v650, %v651
      %v653 = vrot.slane %v185, 2
      %v654 = vsel %vm619, %v651, %v653
      %v655 = vrot.slane %v186, 2
      %v656 = vrot.slane %v187, 2
      %v657 = vsel %vm619, %v655, %v656
      %v658 = vrot.slane %v188, 2
      %v659 = vsel %vm619, %v656, %v658
      %s660 = scalar_lea.vmem %s1, 8
      %v661 = vld [vmem:[%s660] sm:$0xf]
      %v662 = vsel %vm257, %v622, 0
      %v664 = vsel %vm257, %v624, 0
      %v666 = vsel %vm257, %v627, 0
      %v668 = vsel %vm257, %v629, 0
      %v670 = vsel %vm257, %v632, 0
      %v672 = vsel %vm257, %v634, 0
      %v674 = vsel %vm257, %v637, 0
      %v676 = vsel %vm257, %v639, 0
      %v678 = vsel %vm257, %v642, 0
      %v680 = vsel %vm257, %v644, 0
      %v682 = vsel %vm257, %v647, 0
      %v684 = vsel %vm257, %v649, 0
      %v686 = vsel %vm257, %v652, 0
      %v688 = vsel %vm257, %v654, 0
      %v690 = vsel %vm257, %v657, 0
      %v692 = vsel %vm257, %v659, 0
      %v695 = vsel %vm290, %v661, 0
      %697 = vmatprep.subr.mxu0 0.0
      %698 = vmatpush1.msra.mxu0 %v695
      %699 = vmatprep.subr.mxu0 0.0
      %700 = vmatpush1.msra.mxu0 0.0
      %701 = vmatprep.subr.mxu0 0.0
      %702 = vmatpush1.msra.mxu0 0.0
      %703 = vmatprep.subr.mxu0 0.0
      %704 = vmatpush1.msra.mxu0 0.0
      %705 = vmatprep.subr.mxu0 0.0
      %706 = vmatpush1.msra.mxu0 0.0
      %707 = vmatprep.subr.mxu0 0.0
      %708 = vmatpush1.msra.mxu0 0.0
      %709 = vmatprep.subr.mxu0 0.0
      %710 = vmatpush1.msra.mxu0 0.0
      %711 = vmatprep.subr.mxu0 0.0
      %712 = vmatpush1.msra.mxu0 0.0
      %713 = vmatprep.subr.mxu0 0.0
      %714 = vmatpush1.msra.mxu0 0.0
      %715 = vmatprep.subr.mxu0 0.0
      %716 = vmatpush1.msra.mxu0 0.0
      %717 = vmatprep.subr.mxu0 0.0
      %718 = vmatpush1.msra.mxu0 0.0
      %719 = vmatprep.subr.mxu0 0.0
      %720 = vmatpush1.msra.mxu0 0.0
      %721 = vmatprep.subr.mxu0 0.0
      %722 = vmatpush1.msra.mxu0 0.0
      %723 = vmatprep.subr.mxu0 0.0
      %724 = vmatpush1.msra.mxu0 0.0
      %725 = vmatprep.subr.mxu0 0.0
      %726 = vmatpush1.msra.mxu0 0.0
      %727 = vmatprep.subr.mxu0 0.0
      %728 = vmatpush1.msra.mxu0 0.0
      %729 = vmatprep.subr.mxu0 0.0
      %730 = vmatpush1.msra.mxu0 0.0
      %731 = vmatprep.subr.mxu0 0.0
      %732 = vmatpush1.msra.mxu0 0.0
      %733 = vmatprep.subr.mxu0 0.0
      %734 = vmatpush1.msra.mxu0 0.0
      %735 = vmatprep.subr.mxu0 0.0
      %736 = vmatpush1.msra.mxu0 0.0
      %737 = vmatprep.subr.mxu0 0.0
      %738 = vmatpush1.msra.mxu0 0.0
      %739 = vmatprep.subr.mxu0 0.0
      %740 = vmatpush1.msra.mxu0 0.0
      %741 = vmatprep.subr.mxu0 0.0
      %742 = vmatpush1.msra.mxu0 0.0
      %743 = vmatprep.subr.mxu0 0.0
      %744 = vmatpush1.msra.mxu0 0.0
      %745 = vmatprep.subr.mxu0 0.0
      %746 = vmatpush1.msra.mxu0 0.0
      %747 = vmatprep.subr.mxu0 0.0
      %748 = vmatpush1.msra.mxu0 0.0
      %749 = vmatprep.subr.mxu0 0.0
      %750 = vmatpush1.msra.mxu0 0.0
      %751 = vmatprep.subr.mxu0 0.0
      %752 = vmatpush1.msra.mxu0 0.0
      %753 = vmatprep.subr.mxu0 0.0
      %754 = vmatpush1.msra.mxu0 0.0
      %755 = vmatprep.subr.mxu0 0.0
      %756 = vmatpush1.msra.mxu0 0.0
      %757 = vmatprep.subr.mxu0 0.0
      %758 = vmatpush1.msra.mxu0 0.0
      %759 = vmatprep.subr.mxu0 0.0
      %760 = vmatpush1.msra.mxu0 0.0
      %761 = vmatprep.mubr.f32.mxu0 0.0
      %762 = vmatmul.mubr.f32.gmra.mrb[0].mxu0 %v662
      %v763 = vpop.f32.mrb[0].mxu0
      %v764 = vadd.f32 0.0, %v763
      %v765 = vpop.f32.mrb[0].mxu0
      %766 = vmatprep.mubr.f32.mxu0 0.0
      %767 = vmatmul.mubr.f32.gmra.mrb[0].mxu0 %v664
      %v768 = vpop.f32.mrb[0].mxu0
      %v769 = vadd.f32 0.0, %v768
      %v770 = vpop.f32.mrb[0].mxu0
      %771 = vmatprep.mubr.f32.mxu0 0.0
      %772 = vmatmul.mubr.f32.gmra.mrb[0].mxu0 %v666
      %v773 = vpop.f32.mrb[0].mxu0
      %v774 = vadd.f32 0.0, %v773
      %v775 = vpop.f32.mrb[0].mxu0
      %776 = vmatprep.mubr.f32.mxu0 0.0
      %777 = vmatmul.mubr.f32.gmra.mrb[0].mxu0 %v668
      %v778 = vpop.f32.mrb[0].mxu0
      %v779 = vadd.f32 0.0, %v778
      %v780 = vpop.f32.mrb[0].mxu0
      %781 = vmatprep.mubr.f32.mxu0 0.0
      %782 = vmatmul.mubr.f32.gmra.mrb[0].mxu0 %v670
      %v783 = vpop.f32.mrb[0].mxu0
      %v784 = vadd.f32 0.0, %v783
      %v785 = vpop.f32.mrb[0].mxu0
      %786 = vmatprep.mubr.f32.mxu0 0.0
      %787 = vmatmul.mubr.f32.gmra.mrb[0].mxu0 %v672
      %v788 = vpop.f32.mrb[0].mxu0
      %v789 = vadd.f32 0.0, %v788
      %v790 = vpop.f32.mrb[0].mxu0
      %791 = vmatprep.mubr.f32.mxu0 0.0
      %792 = vmatmul.mubr.f32.gmra.mrb[0].mxu0 %v674
      %v793 = vpop.f32.mrb[0].mxu0
      %v794 = vadd.f32 0.0, %v793
      %v795 = vpop.f32.mrb[0].mxu0
      %796 = vmatprep.mubr.f32.mxu0 0.0
      %797 = vmatmul.mubr.f32.gmra.mrb[0].mxu0 %v676
      %v798 = vpop.f32.mrb[0].mxu0
      %v799 = vadd.f32 0.0, %v798
      %v800 = vpop.f32.mrb[0].mxu0
      %801 = vmatprep.mubr.f32.mxu0 0.0
      %802 = vmatmul.mubr.f32.gmra.mrb[0].mxu0 %v678
      %v803 = vpop.f32.mrb[0].mxu0
      %v804 = vadd.f32 0.0, %v803
      %v805 = vpop.f32.mrb[0].mxu0
      %806 = vmatprep.mubr.f32.mxu0 0.0
      %807 = vmatmul.mubr.f32.gmra.mrb[0].mxu0 %v680
      %v808 = vpop.f32.mrb[0].mxu0
      %v809 = vadd.f32 0.0, %v808
      %v810 = vpop.f32.mrb[0].mxu0
      %811 = vmatprep.mubr.f32.mxu0 0.0
      %812 = vmatmul.mubr.f32.gmra.mrb[0].mxu0 %v682
      %v813 = vpop.f32.mrb[0].mxu0
      %v814 = vadd.f32 0.0, %v813
      %v815 = vpop.f32.mrb[0].mxu0
      %816 = vmatprep.mubr.f32.mxu0 0.0
      %817 = vmatmul.mubr.f32.gmra.mrb[0].mxu0 %v684
      %v818 = vpop.f32.mrb[0].mxu0
      %v819 = vadd.f32 0.0, %v818
      %v820 = vpop.f32.mrb[0].mxu0
      %821 = vmatprep.mubr.f32.mxu0 0.0
      %822 = vmatmul.mubr.f32.gmra.mrb[0].mxu0 %v686
      %v823 = vpop.f32.mrb[0].mxu0
      %v824 = vadd.f32 0.0, %v823
      %v825 = vpop.f32.mrb[0].mxu0
      %826 = vmatprep.mubr.f32.mxu0 0.0
      %827 = vmatmul.mubr.f32.gmra.mrb[0].mxu0 %v688
      %v828 = vpop.f32.mrb[0].mxu0
      %v829 = vadd.f32 0.0, %v828
      %v830 = vpop.f32.mrb[0].mxu0
      %831 = vmatprep.mubr.f32.mxu0 0.0
      %832 = vmatmul.mubr.f32.gmra.mrb[0].mxu0 %v690
      %v833 = vpop.f32.mrb[0].mxu0
      %v834 = vadd.f32 0.0, %v833
      %v835 = vpop.f32.mrb[0].mxu0
      %836 = vmatprep.mubr.f32.mxu0 0.0
      %837 = vmatmul.mubr.f32.gmra.mrb[0].mxu0 %v692
      %v838 = vpop.f32.mrb[0].mxu0
      %v839 = vadd.f32 0.0, %v838
      %v840 = vpop.f32.mrb[0].mxu0
      %841 = vdwg.mxu0
      %v842 = vadd.f32 %v541, %v764
      %v843 = vadd.f32 %v546, %v769
      %v844 = vadd.f32 %v551, %v774
      %v845 = vadd.f32 %v556, %v779
      %v846 = vadd.f32 %v561, %v784
      %v847 = vadd.f32 %v566, %v789
      %v848 = vadd.f32 %v571, %v794
      %v849 = vadd.f32 %v576, %v799
      %v850 = vadd.f32 %v581, %v804
      %v851 = vadd.f32 %v586, %v809
      %v852 = vadd.f32 %v591, %v814
      %v853 = vadd.f32 %v596, %v819
      %v854 = vadd.f32 %v601, %v824
      %v855 = vadd.f32 %v606, %v829
      %v856 = vadd.f32 %v611, %v834
      %v857 = vadd.f32 %v616, %v839
      %vm858 = vcmask 1044480
      %v859 = vrot.slane %v165, 3
      %v860 = vrot.slane %v166, 3
      %v861 = vsel %vm858, %v859, %v860
      %v862 = vrot.slane %v167, 3
      %v863 = vsel %vm858, %v860, %v862
      %v864 = vrot.slane %v168, 3
      %v865 = vrot.slane %v169, 3
      %v866 = vsel %vm858, %v864, %v865
      %v867 = vrot.slane %v170, 3
      %v868 = vsel %vm858, %v865, %v867
      %v869 = vrot.slane %v171, 3
      %v870 = vrot.slane %v172, 3
      %v871 = vsel %vm858, %v869, %v870
      %v872 = vrot.slane %v173, 3
      %v873 = vsel %vm858, %v870, %v872
      %v874 = vrot.slane %v174, 3
      %v875 = vrot.slane %v175, 3
      %v876 = vsel %vm858, %v874, %v875
      %v877 = vrot.slane %v176, 3
      %v878 = vsel %vm858, %v875, %v877
      %v879 = vrot.slane %v177, 3
      %v880 = vrot.slane %v178, 3
      %v881 = vsel %vm858, %v879, %v880
      %v882 = vrot.slane %v179, 3
      %v883 = vsel %vm858, %v880, %v882
      %v884 = vrot.slane %v180, 3
      %v885 = vrot.slane %v181, 3
      %v886 = vsel %vm858, %v884, %v885
      %v887 = vrot.slane %v182, 3
      %v888 = vsel %vm858, %v885, %v887
      %v889 = vrot.slane %v183, 3
      %v890 = vrot.slane %v184, 3
      %v891 = vsel %vm858, %v889, %v890
      %v892 = vrot.slane %v185, 3
      %v893 = vsel %vm858, %v890, %v892
      %v894 = vrot.slane %v186, 3
      %v895 = vrot.slane %v187, 3
      %v896 = vsel %vm858, %v894, %v895
      %v897 = vrot.slane %v188, 3
      %v898 = vsel %vm858, %v895, %v897
      %s899 = scalar_lea.vmem %s1, 12
      %v900 = vld [vmem:[%s899] sm:$0xf]
      %v901 = vsel %vm257, %v861, 0
      %v903 = vsel %vm257, %v863, 0
      %v905 = vsel %vm257, %v866, 0
      %v907 = vsel %vm257, %v868, 0
      %v909 = vsel %vm257, %v871, 0
      %v911 = vsel %vm257, %v873, 0
      %v913 = vsel %vm257, %v876, 0
      %v915 = vsel %vm257, %v878, 0
      %v917 = vsel %vm257, %v881, 0
      %v919 = vsel %vm257, %v883, 0
      %v921 = vsel %vm257, %v886, 0
      %v923 = vsel %vm257, %v888, 0
      %v925 = vsel %vm257, %v891, 0
      %v927 = vsel %vm257, %v893, 0
      %v929 = vsel %vm257, %v896, 0
      %v931 = vsel %vm257, %v898, 0
      %v934 = vsel %vm290, %v900, 0
      %936 = vmatprep.subr.mxu0 0.0
      %937 = vmatpush1.msra.mxu0 %v934
      %938 = vmatprep.subr.mxu0 0.0
      %939 = vmatpush1.msra.mxu0 0.0
      %940 = vmatprep.subr.mxu0 0.0
      %941 = vmatpush1.msra.mxu0 0.0
      %942 = vmatprep.subr.mxu0 0.0
      %943 = vmatpush1.msra.mxu0 0.0
      %944 = vmatprep.subr.mxu0 0.0
      %945 = vmatpush1.msra.mxu0 0.0
      %946 = vmatprep.subr.mxu0 0.0
      %947 = vmatpush1.msra.mxu0 0.0
      %948 = vmatprep.subr.mxu0 0.0
      %949 = vmatpush1.msra.mxu0 0.0
      %950 = vmatprep.subr.mxu0 0.0
      %951 = vmatpush1.msra.mxu0 0.0
      %952 = vmatprep.subr.mxu0 0.0
      %953 = vmatpush1.msra.mxu0 0.0
      %954 = vmatprep.subr.mxu0 0.0
      %955 = vmatpush1.msra.mxu0 0.0
      %956 = vmatprep.subr.mxu0 0.0
      %957 = vmatpush1.msra.mxu0 0.0
      %958 = vmatprep.subr.mxu0 0.0
      %959 = vmatpush1.msra.mxu0 0.0
      %960 = vmatprep.subr.mxu0 0.0
      %961 = vmatpush1.msra.mxu0 0.0
      %962 = vmatprep.subr.mxu0 0.0
      %963 = vmatpush1.msra.mxu0 0.0
      %964 = vmatprep.subr.mxu0 0.0
      %965 = vmatpush1.msra.mxu0 0.0
      %966 = vmatprep.subr.mxu0 0.0
      %967 = vmatpush1.msra.mxu0 0.0
      %968 = vmatprep.subr.mxu0 0.0
      %969 = vmatpush1.msra.mxu0 0.0
      %970 = vmatprep.subr.mxu0 0.0
      %971 = vmatpush1.msra.mxu0 0.0
      %972 = vmatprep.subr.mxu0 0.0
      %973 = vmatpush1.msra.mxu0 0.0
      %974 = vmatprep.subr.mxu0 0.0
      %975 = vmatpush1.msra.mxu0 0.0
      %976 = vmatprep.subr.mxu0 0.0
      %977 = vmatpush1.msra.mxu0 0.0
      %978 = vmatprep.subr.mxu0 0.0
      %979 = vmatpush1.msra.mxu0 0.0
      %980 = vmatprep.subr.mxu0 0.0
      %981 = vmatpush1.msra.mxu0 0.0
      %982 = vmatprep.subr.mxu0 0.0
      %983 = vmatpush1.msra.mxu0 0.0
      %984 = vmatprep.subr.mxu0 0.0
      %985 = vmatpush1.msra.mxu0 0.0
      %986 = vmatprep.subr.mxu0 0.0
      %987 = vmatpush1.msra.mxu0 0.0
      %988 = vmatprep.subr.mxu0 0.0
      %989 = vmatpush1.msra.mxu0 0.0
      %990 = vmatprep.subr.mxu0 0.0
      %991 = vmatpush1.msra.mxu0 0.0
      %992 = vmatprep.subr.mxu0 0.0
      %993 = vmatpush1.msra.mxu0 0.0
      %994 = vmatprep.subr.mxu0 0.0
      %995 = vmatpush1.msra.mxu0 0.0
      %996 = vmatprep.subr.mxu0 0.0
      %997 = vmatpush1.msra.mxu0 0.0
      %998 = vmatprep.subr.mxu0 0.0
      %999 = vmatpush1.msra.mxu0 0.0
      %1000 = vmatprep.mubr.f32.mxu0 0.0
      %1001 = vmatmul.mubr.f32.gmra.mrb[0].mxu0 %v901
      %v1002 = vpop.f32.mrb[0].mxu0
      %v1003 = vadd.f32 0.0, %v1002
      %v1004 = vpop.f32.mrb[0].mxu0
      %1005 = vmatprep.mubr.f32.mxu0 0.0
      %1006 = vmatmul.mubr.f32.gmra.mrb[0].mxu0 %v903
      %v1007 = vpop.f32.mrb[0].mxu0
      %v1008 = vadd.f32 0.0, %v1007
      %v1009 = vpop.f32.mrb[0].mxu0
      %1010 = vmatprep.mubr.f32.mxu0 0.0
      %1011 = vmatmul.mubr.f32.gmra.mrb[0].mxu0 %v905
      %v1012 = vpop.f32.mrb[0].mxu0
      %v1013 = vadd.f32 0.0, %v1012
      %v1014 = vpop.f32.mrb[0].mxu0
      %1015 = vmatprep.mubr.f32.mxu0 0.0
      %1016 = vmatmul.mubr.f32.gmra.mrb[0].mxu0 %v907
      %v1017 = vpop.f32.mrb[0].mxu0
      %v1018 = vadd.f32 0.0, %v1017
      %v1019 = vpop.f32.mrb[0].mxu0
      %1020 = vmatprep.mubr.f32.mxu0 0.0
      %1021 = vmatmul.mubr.f32.gmra.mrb[0].mxu0 %v909
      %v1022 = vpop.f32.mrb[0].mxu0
      %v1023 = vadd.f32 0.0, %v1022
      %v1024 = vpop.f32.mrb[0].mxu0
      %1025 = vmatprep.mubr.f32.mxu0 0.0
      %1026 = vmatmul.mubr.f32.gmra.mrb[0].mxu0 %v911
      %v1027 = vpop.f32.mrb[0].mxu0
      %v1028 = vadd.f32 0.0, %v1027
      %v1029 = vpop.f32.mrb[0].mxu0
      %1030 = vmatprep.mubr.f32.mxu0 0.0
      %1031 = vmatmul.mubr.f32.gmra.mrb[0].mxu0 %v913
      %v1032 = vpop.f32.mrb[0].mxu0
      %v1033 = vadd.f32 0.0, %v1032
      %v1034 = vpop.f32.mrb[0].mxu0
      %1035 = vmatprep.mubr.f32.mxu0 0.0
      %1036 = vmatmul.mubr.f32.gmra.mrb[0].mxu0 %v915
      %v1037 = vpop.f32.mrb[0].mxu0
      %v1038 = vadd.f32 0.0, %v1037
      %v1039 = vpop.f32.mrb[0].mxu0
      %1040 = vmatprep.mubr.f32.mxu0 0.0
      %1041 = vmatmul.mubr.f32.gmra.mrb[0].mxu0 %v917
      %v1042 = vpop.f32.mrb[0].mxu0
      %v1043 = vadd.f32 0.0, %v1042
      %v1044 = vpop.f32.mrb[0].mxu0
      %1045 = vmatprep.mubr.f32.mxu0 0.0
      %1046 = vmatmul.mubr.f32.gmra.mrb[0].mxu0 %v919
      %v1047 = vpop.f32.mrb[0].mxu0
      %v1048 = vadd.f32 0.0, %v1047
      %v1049 = vpop.f32.mrb[0].mxu0
      %1050 = vmatprep.mubr.f32.mxu0 0.0
      %1051 = vmatmul.mubr.f32.gmra.mrb[0].mxu0 %v921
      %v1052 = vpop.f32.mrb[0].mxu0
      %v1053 = vadd.f32 0.0, %v1052
      %v1054 = vpop.f32.mrb[0].mxu0
      %1055 = vmatprep.mubr.f32.mxu0 0.0
      %1056 = vmatmul.mubr.f32.gmra.mrb[0].mxu0 %v923
      %v1057 = vpop.f32.mrb[0].mxu0
      %v1058 = vadd.f32 0.0, %v1057
      %v1059 = vpop.f32.mrb[0].mxu0
      %1060 = vmatprep.mubr.f32.mxu0 0.0
      %1061 = vmatmul.mubr.f32.gmra.mrb[0].mxu0 %v925
      %v1062 = vpop.f32.mrb[0].mxu0
      %v1063 = vadd.f32 0.0, %v1062
      %v1064 = vpop.f32.mrb[0].mxu0
      %1065 = vmatprep.mubr.f32.mxu0 0.0
      %1066 = vmatmul.mubr.f32.gmra.mrb[0].mxu0 %v927
      %v1067 = vpop.f32.mrb[0].mxu0
      %v1068 = vadd.f32 0.0, %v1067
      %v1069 = vpop.f32.mrb[0].mxu0
      %1070 = vmatprep.mubr.f32.mxu0 0.0
      %1071 = vmatmul.mubr.f32.gmra.mrb[0].mxu0 %v929
      %v1072 = vpop.f32.mrb[0].mxu0
      %v1073 = vadd.f32 0.0, %v1072
      %v1074 = vpop.f32.mrb[0].mxu0
      %1075 = vmatprep.mubr.f32.mxu0 0.0
      %1076 = vmatmul.mubr.f32.gmra.mrb[0].mxu0 %v931
      %v1077 = vpop.f32.mrb[0].mxu0
      %v1078 = vadd.f32 0.0, %v1077
      %v1079 = vpop.f32.mrb[0].mxu0
      %1080 = vdwg.mxu0
      %v1081 = vadd.f32 %v842, %v1003
      %v1082 = vadd.f32 %v843, %v1008
      %v1083 = vadd.f32 %v844, %v1013
      %v1084 = vadd.f32 %v845, %v1018
      %v1085 = vadd.f32 %v846, %v1023
      %v1086 = vadd.f32 %v847, %v1028
      %v1087 = vadd.f32 %v848, %v1033
      %v1088 = vadd.f32 %v849, %v1038
      %v1089 = vadd.f32 %v850, %v1043
      %v1090 = vadd.f32 %v851, %v1048
      %v1091 = vadd.f32 %v852, %v1053
      %v1092 = vadd.f32 %v853, %v1058
      %v1093 = vadd.f32 %v854, %v1063
      %v1094 = vadd.f32 %v855, %v1068
      %v1095 = vadd.f32 %v856, %v1073
      %v1096 = vadd.f32 %v857, %v1078
      %v1097 = vrot.slane %v165, 4
      %v1098 = vrot.slane %v166, 4
      %v1099 = vsel %vm290, %v1097, %v1098
      %v1100 = vrot.slane %v167, 4
      %v1101 = vsel %vm290, %v1098, %v1100
      %v1102 = vrot.slane %v168, 4
      %v1103 = vrot.slane %v169, 4
      %v1104 = vsel %vm290, %v1102, %v1103
      %v1105 = vrot.slane %v170, 4
      %v1106 = vsel %vm290, %v1103, %v1105
      %v1107 = vrot.slane %v171, 4
      %v1108 = vrot.slane %v172, 4
      %v1109 = vsel %vm290, %v1107, %v1108
      %v1110 = vrot.slane %v173, 4
      %v1111 = vsel %vm290, %v1108, %v1110
      %v1112 = vrot.slane %v174, 4
      %v1113 = vrot.slane %v175, 4
      %v1114 = vsel %vm290, %v1112, %v1113
      %v1115 = vrot.slane %v176, 4
      %v1116 = vsel %vm290, %v1113, %v1115
      %v1117 = vrot.slane %v177, 4
      %v1118 = vrot.slane %v178, 4
      %v1119 = vsel %vm290, %v1117, %v1118
      %v1120 = vrot.slane %v179, 4
      %v1121 = vsel %vm290, %v1118, %v1120
      %v1122 = vrot.slane %v180, 4
      %v1123 = vrot.slane %v181, 4
      %v1124 = vsel %vm290, %v1122, %v1123
      %v1125 = vrot.slane %v182, 4
      %v1126 = vsel %vm290, %v1123, %v1125
      %v1127 = vrot.slane %v183, 4
      %v1128 = vrot.slane %v184, 4
      %v1129 = vsel %vm290, %v1127, %v1128
      %v1130 = vrot.slane %v185, 4
      %v1131 = vsel %vm290, %v1128, %v1130
      %v1132 = vrot.slane %v186, 4
      %v1133 = vrot.slane %v187, 4
      %v1134 = vsel %vm290, %v1132, %v1133
      %v1135 = vrot.slane %v188, 4
      %v1136 = vsel %vm290, %v1133, %v1135
      %s1137 = scalar_lea.vmem %s1, 16
      %v1138 = vld [vmem:[%s1137] sm:$0xf]
      %v1139 = vsel %vm257, %v1099, 0
      %v1141 = vsel %vm257, %v1101, 0
      %v1143 = vsel %vm257, %v1104, 0
      %v1145 = vsel %vm257, %v1106, 0
      %v1147 = vsel %vm257, %v1109, 0
      %v1149 = vsel %vm257, %v1111, 0
      %v1151 = vsel %vm257, %v1114, 0
      %v1153 = vsel %vm257, %v1116, 0
      %v1155 = vsel %vm257, %v1119, 0
      %v1157 = vsel %vm257, %v1121, 0
      %v1159 = vsel %vm257, %v1124, 0
      %v1161 = vsel %vm257, %v1126, 0
      %v1163 = vsel %vm257, %v1129, 0
      %v1165 = vsel %vm257, %v1131, 0
      %v1167 = vsel %vm257, %v1134, 0
      %v1169 = vsel %vm257, %v1136, 0
      %v1172 = vsel %vm290, %v1138, 0
      %1174 = vmatprep.subr.mxu0 0.0
      %1175 = vmatpush1.msra.mxu0 %v1172
      %1176 = vmatprep.subr.mxu0 0.0
      %1177 = vmatpush1.msra.mxu0 0.0
      %1178 = vmatprep.subr.mxu0 0.0
      %1179 = vmatpush1.msra.mxu0 0.0
      %1180 = vmatprep.subr.mxu0 0.0
      %1181 = vmatpush1.msra.mxu0 0.0
      %1182 = vmatprep.subr.mxu0 0.0
      %1183 = vmatpush1.msra.mxu0 0.0
      %1184 = vmatprep.subr.mxu0 0.0
      %1185 = vmatpush1.msra.mxu0 0.0
      %1186 = vmatprep.subr.mxu0 0.0
      %1187 = vmatpush1.msra.mxu0 0.0
      %1188 = vmatprep.subr.mxu0 0.0
      %1189 = vmatpush1.msra.mxu0 0.0
      %1190 = vmatprep.subr.mxu0 0.0
      %1191 = vmatpush1.msra.mxu0 0.0
      %1192 = vmatprep.subr.mxu0 0.0
      %1193 = vmatpush1.msra.mxu0 0.0
      %1194 = vmatprep.subr.mxu0 0.0
      %1195 = vmatpush1.msra.mxu0 0.0
      %1196 = vmatprep.subr.mxu0 0.0
      %1197 = vmatpush1.msra.mxu0 0.0
      %1198 = vmatprep.subr.mxu0 0.0
      %1199 = vmatpush1.msra.mxu0 0.0
      %1200 = vmatprep.subr.mxu0 0.0
      %1201 = vmatpush1.msra.mxu0 0.0
      %1202 = vmatprep.subr.mxu0 0.0
      %1203 = vmatpush1.msra.mxu0 0.0
      %1204 = vmatprep.subr.mxu0 0.0
      %1205 = vmatpush1.msra.mxu0 0.0
      %1206 = vmatprep.subr.mxu0 0.0
      %1207 = vmatpush1.msra.mxu0 0.0
      %1208 = vmatprep.subr.mxu0 0.0
      %1209 = vmatpush1.msra.mxu0 0.0
      %1210 = vmatprep.subr.mxu0 0.0
      %1211 = vmatpush1.msra.mxu0 0.0
      %1212 = vmatprep.subr.mxu0 0.0
      %1213 = vmatpush1.msra.mxu0 0.0
      %1214 = vmatprep.subr.mxu0 0.0
      %1215 = vmatpush1.msra.mxu0 0.0
      %1216 = vmatprep.subr.mxu0 0.0
      %1217 = vmatpush1.msra.mxu0 0.0
      %1218 = vmatprep.subr.mxu0 0.0
      %1219 = vmatpush1.msra.mxu0 0.0
      %1220 = vmatprep.subr.mxu0 0.0
      %1221 = vmatpush1.msra.mxu0 0.0
      %1222 = vmatprep.subr.mxu0 0.0
      %1223 = vmatpush1.msra.mxu0 0.0
      %1224 = vmatprep.subr.mxu0 0.0
      %1225 = vmatpush1.msra.mxu0 0.0
      %1226 = vmatprep.subr.mxu0 0.0
      %1227 = vmatpush1.msra.mxu0 0.0
      %1228 = vmatprep.subr.mxu0 0.0
      %1229 = vmatpush1.msra.mxu0 0.0
      %1230 = vmatprep.subr.mxu0 0.0
      %1231 = vmatpush1.msra.mxu0 0.0
      %1232 = vmatprep.subr.mxu0 0.0
      %1233 = vmatpush1.msra.mxu0 0.0
      %1234 = vmatprep.subr.mxu0 0.0
      %1235 = vmatpush1.msra.mxu0 0.0
      %1236 = vmatprep.subr.mxu0 0.0
      %1237 = vmatpush1.msra.mxu0 0.0
      %1238 = vmatprep.mubr.f32.mxu0 0.0
      %1239 = vmatmul.mubr.f32.gmra.mrb[0].mxu0 %v1139
      %v1240 = vpop.f32.mrb[0].mxu0
      %v1241 = vadd.f32 0.0, %v1240
      %v1242 = vpop.f32.mrb[0].mxu0
      %1243 = vmatprep.mubr.f32.mxu0 0.0
      %1244 = vmatmul.mubr.f32.gmra.mrb[0].mxu0 %v1141
      %v1245 = vpop.f32.mrb[0].mxu0
      %v1246 = vadd.f32 0.0, %v1245
      %v1247 = vpop.f32.mrb[0].mxu0
      %1248 = vmatprep.mubr.f32.mxu0 0.0
      %1249 = vmatmul.mubr.f32.gmra.mrb[0].mxu0 %v1143
      %v1250 = vpop.f32.mrb[0].mxu0
      %v1251 = vadd.f32 0.0, %v1250
      %v1252 = vpop.f32.mrb[0].mxu0
      %1253 = vmatprep.mubr.f32.mxu0 0.0
      %1254 = vmatmul.mubr.f32.gmra.mrb[0].mxu0 %v1145
      %v1255 = vpop.f32.mrb[0].mxu0
      %v1256 = vadd.f32 0.0, %v1255
      %v1257 = vpop.f32.mrb[0].mxu0
      %1258 = vmatprep.mubr.f32.mxu0 0.0
      %1259 = vmatmul.mubr.f32.gmra.mrb[0].mxu0 %v1147
      %v1260 = vpop.f32.mrb[0].mxu0
      %v1261 = vadd.f32 0.0, %v1260
      %v1262 = vpop.f32.mrb[0].mxu0
      %1263 = vmatprep.mubr.f32.mxu0 0.0
      %1264 = vmatmul.mubr.f32.gmra.mrb[0].mxu0 %v1149
      %v1265 = vpop.f32.mrb[0].mxu0
      %v1266 = vadd.f32 0.0, %v1265
      %v1267 = vpop.f32.mrb[0].mxu0
      %1268 = vmatprep.mubr.f32.mxu0 0.0
      %1269 = vmatmul.mubr.f32.gmra.mrb[0].mxu0 %v1151
      %v1270 = vpop.f32.mrb[0].mxu0
      %v1271 = vadd.f32 0.0, %v1270
      %v1272 = vpop.f32.mrb[0].mxu0
      %1273 = vmatprep.mubr.f32.mxu0 0.0
      %1274 = vmatmul.mubr.f32.gmra.mrb[0].mxu0 %v1153
      %v1275 = vpop.f32.mrb[0].mxu0
      %v1276 = vadd.f32 0.0, %v1275
      %v1277 = vpop.f32.mrb[0].mxu0
      %1278 = vmatprep.mubr.f32.mxu0 0.0
      %1279 = vmatmul.mubr.f32.gmra.mrb[0].mxu0 %v1155
      %v1280 = vpop.f32.mrb[0].mxu0
      %v1281 = vadd.f32 0.0, %v1280
      %v1282 = vpop.f32.mrb[0].mxu0
      %1283 = vmatprep.mubr.f32.mxu0 0.0
      %1284 = vmatmul.mubr.f32.gmra.mrb[0].mxu0 %v1157
      %v1285 = vpop.f32.mrb[0].mxu0
      %v1286 = vadd.f32 0.0, %v1285
      %v1287 = vpop.f32.mrb[0].mxu0
      %1288 = vmatprep.mubr.f32.mxu0 0.0
      %1289 = vmatmul.mubr.f32.gmra.mrb[0].mxu0 %v1159
      %v1290 = vpop.f32.mrb[0].mxu0
      %v1291 = vadd.f32 0.0, %v1290
      %v1292 = vpop.f32.mrb[0].mxu0
      %1293 = vmatprep.mubr.f32.mxu0 0.0
      %1294 = vmatmul.mubr.f32.gmra.mrb[0].mxu0 %v1161
      %v1295 = vpop.f32.mrb[0].mxu0
      %v1296 = vadd.f32 0.0, %v1295
      %v1297 = vpop.f32.mrb[0].mxu0
      %1298 = vmatprep.mubr.f32.mxu0 0.0
      %1299 = vmatmul.mubr.f32.gmra.mrb[0].mxu0 %v1163
      %v1300 = vpop.f32.mrb[0].mxu0
      %v1301 = vadd.f32 0.0, %v1300
      %v1302 = vpop.f32.mrb[0].mxu0
      %1303 = vmatprep.mubr.f32.mxu0 0.0
      %1304 = vmatmul.mubr.f32.gmra.mrb[0].mxu0 %v1165
      %v1305 = vpop.f32.mrb[0].mxu0
      %v1306 = vadd.f32 0.0, %v1305
      %v1307 = vpop.f32.mrb[0].mxu0
      %1308 = vmatprep.mubr.f32.mxu0 0.0
      %1309 = vmatmul.mubr.f32.gmra.mrb[0].mxu0 %v1167
      %v1310 = vpop.f32.mrb[0].mxu0
      %v1311 = vadd.f32 0.0, %v1310
      %v1312 = vpop.f32.mrb[0].mxu0
      %1313 = vmatprep.mubr.f32.mxu0 0.0
      %1314 = vmatmul.mubr.f32.gmra.mrb[0].mxu0 %v1169
      %v1315 = vpop.f32.mrb[0].mxu0
      %v1316 = vadd.f32 0.0, %v1315
      %v1317 = vpop.f32.mrb[0].mxu0
      %1318 = vdwg.mxu0
      %v1319 = vadd.f32 %v1081, %v1241
      %v1320 = vadd.f32 %v1082, %v1246
      %v1321 = vadd.f32 %v1083, %v1251
      %v1322 = vadd.f32 %v1084, %v1256
      %v1323 = vadd.f32 %v1085, %v1261
      %v1324 = vadd.f32 %v1086, %v1266
      %v1325 = vadd.f32 %v1087, %v1271
      %v1326 = vadd.f32 %v1088, %v1276
      %v1327 = vadd.f32 %v1089, %v1281
      %v1328 = vadd.f32 %v1090, %v1286
      %v1329 = vadd.f32 %v1091, %v1291
      %v1330 = vadd.f32 %v1092, %v1296
      %v1331 = vadd.f32 %v1093, %v1301
      %v1332 = vadd.f32 %v1094, %v1306
      %v1333 = vadd.f32 %v1095, %v1311
      %v1334 = vadd.f32 %v1096, %v1316
      %vm1335 = vcmp.gt.f32.partialorder %v1319, 0.0
      %vm1336 = vcmp.gt.f32.partialorder %v1320, 0.0
      %vm1337 = vcmp.gt.f32.partialorder %v1321, 0.0
      %vm1338 = vcmp.gt.f32.partialorder %v1322, 0.0
      %vm1339 = vcmp.gt.f32.partialorder %v1323, 0.0
      %vm1340 = vcmp.gt.f32.partialorder %v1324, 0.0
      %vm1341 = vcmp.gt.f32.partialorder %v1325, 0.0
      %vm1342 = vcmp.gt.f32.partialorder %v1326, 0.0
      %vm1343 = vcmp.gt.f32.partialorder %v1327, 0.0
      %vm1344 = vcmp.gt.f32.partialorder %v1328, 0.0
      %vm1345 = vcmp.gt.f32.partialorder %v1329, 0.0
      %vm1346 = vcmp.gt.f32.partialorder %v1330, 0.0
      %vm1347 = vcmp.gt.f32.partialorder %v1331, 0.0
      %vm1348 = vcmp.gt.f32.partialorder %v1332, 0.0
      %vm1349 = vcmp.gt.f32.partialorder %v1333, 0.0
      %vm1350 = vcmp.gt.f32.partialorder %v1334, 0.0
      %v1351 = vmin.f32 %v1319, 0.0
      %v1352 = vmin.f32 %v1320, 0.0
      %v1353 = vmin.f32 %v1321, 0.0
      %v1354 = vmin.f32 %v1322, 0.0
      %v1355 = vmin.f32 %v1323, 0.0
      %v1356 = vmin.f32 %v1324, 0.0
      %v1357 = vmin.f32 %v1325, 0.0
      %v1358 = vmin.f32 %v1326, 0.0
      %v1359 = vmin.f32 %v1327, 0.0
      %v1360 = vmin.f32 %v1328, 0.0
      %v1361 = vmin.f32 %v1329, 0.0
      %v1362 = vmin.f32 %v1330, 0.0
      %v1363 = vmin.f32 %v1331, 0.0
      %v1364 = vmin.f32 %v1332, 0.0
      %v1365 = vmin.f32 %v1333, 0.0
      %v1366 = vmin.f32 %v1334, 0.0
      %v1367 = vmul.f32 %v1351, 1.442695
      %v1368 = vpow.pop %v1367
      %v1369 = vmul.f32 %v1352, 1.442695
      %v1370 = vpow.pop %v1369
      %v1371 = vmul.f32 %v1353, 1.442695
      %v1372 = vpow.pop %v1371
      %v1373 = vmul.f32 %v1354, 1.442695
      %v1374 = vpow.pop %v1373
      %v1375 = vmul.f32 %v1355, 1.442695
      %v1376 = vpow.pop %v1375
      %v1377 = vmul.f32 %v1356, 1.442695
      %v1378 = vpow.pop %v1377
      %v1379 = vmul.f32 %v1357, 1.442695
      %v1380 = vpow.pop %v1379
      %v1381 = vmul.f32 %v1358, 1.442695
      %v1382 = vpow.pop %v1381
      %v1383 = vmul.f32 %v1359, 1.442695
      %v1384 = vpow.pop %v1383
      %v1385 = vmul.f32 %v1360, 1.442695
      %v1386 = vpow.pop %v1385
      %v1387 = vmul.f32 %v1361, 1.442695
      %v1388 = vpow.pop %v1387
      %v1389 = vmul.f32 %v1362, 1.442695
      %v1390 = vpow.pop %v1389
      %v1391 = vmul.f32 %v1363, 1.442695
      %v1392 = vpow.pop %v1391
      %v1393 = vmul.f32 %v1364, 1.442695
      %v1394 = vpow.pop %v1393
      %v1395 = vmul.f32 %v1365, 1.442695
      %v1396 = vpow.pop %v1395
      %v1397 = vmul.f32 %v1366, 1.442695
      %v1398 = vpow.pop %v1397
      %v1399 = vsub.f32 %v1368, 1.0
      %v1400 = vsub.f32 %v1370, 1.0
      %v1401 = vsub.f32 %v1372, 1.0
      %v1402 = vsub.f32 %v1374, 1.0
      %v1403 = vsub.f32 %v1376, 1.0
      %v1404 = vsub.f32 %v1378, 1.0
      %v1405 = vsub.f32 %v1380, 1.0
      %v1406 = vsub.f32 %v1382, 1.0
      %v1407 = vsub.f32 %v1384, 1.0
      %v1408 = vsub.f32 %v1386, 1.0
      %v1409 = vsub.f32 %v1388, 1.0
      %v1410 = vsub.f32 %v1390, 1.0
      %v1411 = vsub.f32 %v1392, 1.0
      %v1412 = vsub.f32 %v1394, 1.0
      %v1413 = vsub.f32 %v1396, 1.0
      %v1414 = vsub.f32 %v1398, 1.0
      %v1415 = vsel %vm1335, %v1319, %v1399
      %v1416 = vsel %vm1336, %v1320, %v1400
      %v1417 = vsel %vm1337, %v1321, %v1401
      %v1418 = vsel %vm1338, %v1322, %v1402
      %v1419 = vsel %vm1339, %v1323, %v1403
      %v1420 = vsel %vm1340, %v1324, %v1404
      %v1421 = vsel %vm1341, %v1325, %v1405
      %v1422 = vsel %vm1342, %v1326, %v1406
      %v1423 = vsel %vm1343, %v1327, %v1407
      %v1424 = vsel %vm1344, %v1328, %v1408
      %v1425 = vsel %vm1345, %v1329, %v1409
      %v1426 = vsel %vm1346, %v1330, %v1410
      %v1427 = vsel %vm1347, %v1331, %v1411
      %v1428 = vsel %vm1348, %v1332, %v1412
      %v1429 = vsel %vm1349, %v1333, %v1413
      %v1430 = vsel %vm1350, %v1334, %v1414
      %v1431 = vld [vmem:[%s2] sm:$0x1]
      %v1432 = vadd.f32 %v1415, %v1416
      %v1433 = vadd.f32 %v1432, %v1417
      %v1434 = vadd.f32 %v1433, %v1418
      %v1435 = vadd.f32 %v1434, %v1419
      %v1436 = vadd.f32 %v1435, %v1420
      %v1437 = vadd.f32 %v1436, %v1421
      %v1438 = vadd.f32 %v1437, %v1422
      %v1439 = vadd.f32 %v1438, %v1423
      %v1440 = vadd.f32 %v1439, %v1424
      %v1441 = vadd.f32 %v1440, %v1425
      %v1442 = vadd.f32 %v1441, %v1426
      %v1443 = vadd.f32 %v1442, %v1427
      %v1444 = vadd.f32 %v1443, %v1428
      %v1445 = vadd.f32 %v1444, %v1429
      %v1446 = vadd.f32 %v1445, %v1430
      %v1447 = vrot.slane %v1446, 4
      %v1448 = vadd.f32 %v1446, %v1447
      %v1449 = vrot.slane %v1448, 2
      %v1450 = vadd.f32 %v1448, %v1449
      %v1451 = vrot.slane %v1450, 1
      %v1452 = vadd.f32 %v1450, %v1451
      %v1453 = vadd.f32 %v1431, %v1452
      %1454 = vst [vmem:[%s2] sm:$0x1] %v1453
      %v1455 = vld [vmem:[%s3] sm:$0x1]
      %v1456 = vmul.f32 %v1415, %v1415
      %v1457 = vmul.f32 %v1416, %v1416
      %v1458 = vmul.f32 %v1417, %v1417
      %v1459 = vmul.f32 %v1418, %v1418
      %v1460 = vmul.f32 %v1419, %v1419
      %v1461 = vmul.f32 %v1420, %v1420
      %v1462 = vmul.f32 %v1421, %v1421
      %v1463 = vmul.f32 %v1422, %v1422
      %v1464 = vmul.f32 %v1423, %v1423
      %v1465 = vmul.f32 %v1424, %v1424
      %v1466 = vmul.f32 %v1425, %v1425
      %v1467 = vmul.f32 %v1426, %v1426
      %v1468 = vmul.f32 %v1427, %v1427
      %v1469 = vmul.f32 %v1428, %v1428
      %v1470 = vmul.f32 %v1429, %v1429
      %v1471 = vmul.f32 %v1430, %v1430
      %v1472 = vadd.f32 %v1456, %v1457
      %v1473 = vadd.f32 %v1472, %v1458
      %v1474 = vadd.f32 %v1473, %v1459
      %v1475 = vadd.f32 %v1474, %v1460
      %v1476 = vadd.f32 %v1475, %v1461
      %v1477 = vadd.f32 %v1476, %v1462
      %v1478 = vadd.f32 %v1477, %v1463
      %v1479 = vadd.f32 %v1478, %v1464
      %v1480 = vadd.f32 %v1479, %v1465
      %v1481 = vadd.f32 %v1480, %v1466
      %v1482 = vadd.f32 %v1481, %v1467
      %v1483 = vadd.f32 %v1482, %v1468
      %v1484 = vadd.f32 %v1483, %v1469
      %v1485 = vadd.f32 %v1484, %v1470
      %v1486 = vadd.f32 %v1485, %v1471
      %v1487 = vrot.slane %v1486, 4
      %v1488 = vadd.f32 %v1486, %v1487
      %v1489 = vrot.slane %v1488, 2
      %v1490 = vadd.f32 %v1488, %v1489
      %v1491 = vrot.slane %v1490, 1
      %v1492 = vadd.f32 %v1490, %v1491
      %v1493 = vadd.f32 %v1455, %v1492
      %1494 = vst [vmem:[%s3] sm:$0x1] %v1493
      // Predicated region
      $region33: #{basic_block_forward.2} parent=27 // pred_check
        %p1495 = pneg %p75
      $region34: #{basic_block_forward.2} parent=27 // pred_check_branch
        %1497 = sbr.rel (%p1495) target = $region36
      $region35: #{basic_block_forward.2} parent=27 // pred_region
        _
      $region36: #{basic_block_forward.2} parent=27 // pred_fallthru
        _
      // Predicated region
      $region37: #{basic_block_forward.2} parent=27 // pred_check
        %p1498 = pneg %p96
      $region38: #{basic_block_forward.2} parent=27 // pred_check_branch
        %1500 = sbr.rel (%p1498) target = $region40
      $region39: #{basic_block_forward.2} parent=27 // pred_region
        _
      $region40: #{basic_block_forward.2} parent=27 // pred_fallthru
        _
      // Predicated region
      $region41: #{basic_block_forward.2} parent=27 // pred_check
        %p1501 = pneg %p75
      $region42: #{basic_block_forward.2} parent=27 // pred_check_branch
        %1503 = sbr.rel (%p1501) target = $region44
      $region43: #{basic_block_forward.2} parent=27 // pred_region
        _
      $region44: #{basic_block_forward.2} parent=27 // pred_fallthru
        _
      // Predicated region
      $region45: #{basic_block_forward.2} parent=27 // pred_check
        %p1504 = pneg %p96
      $region46: #{basic_block_forward.2} parent=27 // pred_check_branch
        %1506 = sbr.rel (%p1504) target = $region48
      $region47: #{basic_block_forward.2} parent=27 // pred_region
        _
      $region48: #{basic_block_forward.2} parent=27 // pred_fallthru
        _
    $region28: #{basic_block_forward.2} parent=5 // pred_fallthru
      _
    %p1507 = scmp.le.s32.totalorder 2, %s10
    // Predicated region
    $region49: #{basic_block_forward.2} parent=5 // pred_check
      %p1508 = pneg %p1507
    $region50: #{basic_block_forward.2} parent=5 // pred_check_branch
      %1510 = sbr.rel (%p1508) target = $region52
    $region51: #{basic_block_forward.2} parent=5 // pred_region
      %s1511 = ssub.s32 %s10, 2
    $region52: #{basic_block_forward.2} parent=5 // pred_fallthru
      _
  $region6: #{basic_block_forward.2} parent=0 // loop_footer
    %s14 = sadd.s32 1, %s10
  $region7: #{basic_block_forward.2} parent=0 // loop_footer_branch
    %9 = sbr.rel target = $region3
  $region8: #{basic_block_forward.2} parent=0 // loop_exit
    _

</llo_original>
